<compile_context>
chip_gen: v7x
topology: tpu7x:2x2x1
jax: 0.10.0
libtpu: 0.0.40
codegen_flags: <defaults>
</compile_context>

<pallas_src>
import numpy as np

import jax
import jax.numpy as jnp
from jax.experimental import pallas as pl
from jax.experimental.pallas import tpu as pltpu

LANE = 128
COMPUTE_DTYPE = jnp.bfloat16     # bf16 operands, f32 accumulation (per review)


# ----------------------------------------------------------------------------
# Pallas kernels
# ----------------------------------------------------------------------------
def conv_stage_kernel(x_ref, m1_ref, b1_ref, m2_ref, b2_ref, o_ref, p1_ref):
    """Fused conv1+bias+ReLU+pool -> conv2+bias+ReLU+pool for ONE image.

    x_ref : (1, 4, 8, 96)   image rows split by (row mod 4); cols = w*3 + cin
    m1_ref: (5, 96, 256)    banded conv1 matrices per dh; cols = b*128 + j*6 + o
    b1_ref: (1, 128) f32    conv1 bias replicated per pooled-width position
    m2_ref: (5, 128, 256)   banded conv2 matrices per dh; cols = b*128 + j*16 + o
    b2_ref: (1, 128) f32
    o_ref : (1, 5, 128)     pooled conv2 output; rows = pooled h, cols = w*16+c
    p1_ref: (2, 7, 128)     VMEM scratch: pooled conv1 output, split by row parity
    """
    # ---- stage 1: conv1 (5x5, 3->6) + bias + ReLU + 2x2 max-pool ----------
    # pooled row i = 2k+q; conv row oh = 2i+a; input row = oh+dh = 4k + s.
    for q in range(2):                       # parity of the pooled output row
        best = None
        for a in range(2):                   # row offset inside the pool window
            acc = jnp.zeros((7, 256), jnp.float32)
            for dh in range(5):
                s = 2 * q + a + dh           # 0..7
                rows = x_ref[0, s % 4, pl.ds(s // 4, 7), :]          # (7, 96)
                acc = acc + jnp.dot(rows, m1_ref[dh],
                                    preferred_element_type=jnp.float32)
            # the two width-pool phases live in the two 128-lane halves
            phase = jnp.maximum(acc[:, :128], acc[:, 128:])
            best = phase if best is None else jnp.maximum(best, phase)
        # relu(max(.) + bias) == maxpool(relu(conv + bias)): bias is per-lane
        # constant across the pool window and ReLU is monotone.
        p1_ref[q] = jnp.maximum(best + b1_ref[...], 0.0).astype(p1_ref.dtype)

    # ---- stage 2: conv2 (5x5, 6->16) + bias + ReLU + 2x2 max-pool ---------
    # pooled row i2; conv row oh2 = 2*i2 + a2; pooled-1 row = oh2 + dh.
    best2 = None
    for a2 in range(2):
        acc2 = jnp.zeros((5, 256), jnp.float32)
        for dh in range(5):
            s = a2 + dh                      # 0..5
            rows = p1_ref[s % 2, pl.ds(s // 2, 5), :]               # (5, 128)
            acc2 = acc2 + jnp.dot(rows, m2_ref[dh],
                                  preferred_element_type=jnp.float32)
        phase = jnp.maximum(acc2[:, :128], acc2[:, 128:])
        best2 = phase if best2 is None else jnp.maximum(best2, phase)
    o_ref[0] = jnp.maximum(best2 + b2_ref[...], 0.0).astype(o_ref.dtype)


def fused_mlp_kernel(x_ref, w1_ref, b1_ref, w2_ref, b2_ref, w3_ref, b3_ref,
                     o_ref):
    """fc1(+ReLU) -> fc2(+ReLU) -> fc3 fused in one kernel.

    x_ref : (TILE_B, 640)  conv-stage output, rows = images
    w1_ref: (640, 128)     fc1 weight, pre-permuted to the conv output layout
    w2_ref/w3_ref: (128, 128) zero-padded;  b*_ref: (1, 128) f32
    """
    h = jnp.dot(x_ref[...], w1_ref[...], preferred_element_type=jnp.float32)
    h = jnp.maximum(h + b1_ref[...], 0.0).astype(w2_ref.dtype)
    h = jnp.dot(h, w2_ref[...], preferred_element_type=jnp.float32)
    h = jnp.maximum(h + b2_ref[...], 0.0).astype(w3_ref.dtype)
    y = jnp.dot(h, w3_ref[...], preferred_element_type=jnp.float32)
    o_ref[...] = (y + b3_ref[...]).astype(o_ref.dtype)


# ----------------------------------------------------------------------------
# Wrappers
# ----------------------------------------------------------------------------
def _round_up(x, m):
    return ((x + m - 1) // m) * m


def conv_stage(x_nchw, prepped):
    """Both conv/pool stages fused; returns (N, 5, 128) pooled conv2 output."""
    N = x_nchw.shape[0]
    dt = prepped["m1"].dtype

    # NCHW -> NHWC -> (N, 32, 96) with cols = w*3 + cin, then split rows by
    # (row mod 4):  (N, 4, 8, 96)  so the kernel only needs contiguous slices.
    x = jnp.transpose(x_nchw, (0, 2, 3, 1)).reshape(N, 32, 96)
    x = x.reshape(N, 8, 4, 96).transpose(0, 2, 1, 3)      # [n, p, k] : row = 4k+p
    x = x.astype(dt)

    flops = int(2 * N * (20 * 7 * 96 * 256 + 10 * 5 * 128 * 256))
    bytes_acc = int(x.size * jnp.dtype(dt).itemsize
                    + (5 * 96 * 256 + 5 * 128 * 256) * jnp.dtype(dt).itemsize
                    + 2 * 128 * 4
                    + N * 5 * 128 * jnp.dtype(dt).itemsize)

    out = pl.pallas_call(
        conv_stage_kernel,
        out_shape=jax.ShapeDtypeStruct((N, 5, 128), dt),
        grid=(N,),
        in_specs=[
            pl.BlockSpec((1, 4, 8, 96), lambda n: (n, 0, 0, 0)),
            pl.BlockSpec((5, 96, 256), lambda n: (0, 0, 0)),
            pl.BlockSpec((1, 128), lambda n: (0, 0)),
            pl.BlockSpec((5, 128, 256), lambda n: (0, 0, 0)),
            pl.BlockSpec((1, 128), lambda n: (0, 0)),
        ],
        out_specs=pl.BlockSpec((1, 5, 128), lambda n: (n, 0, 0)),
        scratch_shapes=[pltpu.VMEM((2, 7, 128), dt)],
        compiler_params=pltpu.CompilerParams(
            dimension_semantics=("parallel",),
            vmem_limit_bytes=32 * 1024 * 1024),
        cost_estimate=pl.CostEstimate(flops=flops, transcendentals=0,
                                      bytes_accessed=bytes_acc),
    )(x, prepped["m1"], prepped["b1"], prepped["m2"], prepped["b2"])
    return out                                  # (N, 5, 128)


def fused_mlp(x, prepped):
    """x(N,640) -> relu(fc1) -> relu(fc2) -> fc3, single pallas_call."""
    N, K = x.shape
    tile_b = min(256, _round_up(N, 8))
    n_pad = _round_up(N, tile_b)
    if n_pad != N:                              # safe padding, no huge blocks
        x = jnp.pad(x, ((0, n_pad - N), (0, 0)))
    grid = (n_pad // tile_b,)

    flops = int(2 * n_pad * (K * 128 + 128 * 128 + 128 * 128))
    bytes_acc = int(n_pad * K * x.dtype.itemsize
                    + (K * 128 + 2 * 128 * 128) * jnp.dtype(x.dtype).itemsize
                    + 3 * 128 * 4 + n_pad * 128 * 4)

    out = pl.pallas_call(
        fused_mlp_kernel,
        out_shape=jax.ShapeDtypeStruct((n_pad, LANE), jnp.float32),
        grid=grid,
        in_specs=[
            pl.BlockSpec((tile_b, K), lambda i: (i, 0)),
            pl.BlockSpec((K, LANE), lambda i: (0, 0)),
            pl.BlockSpec((1, LANE), lambda i: (0, 0)),
            pl.BlockSpec((LANE, LANE), lambda i: (0, 0)),
            pl.BlockSpec((1, LANE), lambda i: (0, 0)),
            pl.BlockSpec((LANE, LANE), lambda i: (0, 0)),
            pl.BlockSpec((1, LANE), lambda i: (0, 0)),
        ],
        out_specs=pl.BlockSpec((tile_b, LANE), lambda i: (i, 0)),
        compiler_params=pltpu.CompilerParams(
            dimension_semantics=("parallel",),
            vmem_limit_bytes=32 * 1024 * 1024),
        cost_estimate=pl.CostEstimate(flops=flops, transcendentals=0,
                                      bytes_accessed=bytes_acc),
    )(x, prepped["g1"], prepped["fb1"], prepped["g2"], prepped["fb2"],
      prepped["g3"], prepped["fb3"])
    return out[:N, :10]


# ----------------------------------------------------------------------------
# Parameter preparation (done ONCE, on host, outside the forward pass)
# ----------------------------------------------------------------------------
def prepare_params(params, compute_dtype=COMPUTE_DTYPE):
    """Build banded conv matrices + permuted/padded fc weights once."""
    W1 = np.asarray(params["conv1_w"], np.float32)     # (6, 3, 5, 5)
    B1 = np.asarray(params["conv1_b"], np.float32)
    W2 = np.asarray(params["conv2_w"], np.float32)     # (16, 6, 5, 5)
    B2 = np.asarray(params["conv2_b"], np.float32)
    F1 = np.asarray(params["fc1_w"], np.float32)       # (120, 400)
    F2 = np.asarray(params["fc2_w"], np.float32)       # (84, 120)
    F3 = np.asarray(params["fc3_w"], np.float32)       # (10, 84)

    # conv1: m1[dh, w*3+c, b*128 + j*6 + o] = W1[o, c, dh, w-(2j+b)]
    m1 = np.zeros((5, 96, 256), np.float32)
    for dh in range(5):
        for dw in range(5):
            for j in range(14):
                for b in range(2):
                    w = 2 * j + b + dw                   # input width, <= 31
                    m1[dh, w * 3:(w + 1) * 3,
                       b * 128 + j * 6: b * 128 + j * 6 + 6] = W1[:, :, dh, dw].T
    b1c = np.zeros((1, 128), np.float32)
    for j in range(14):
        b1c[0, j * 6:(j + 1) * 6] = B1

    # conv2: m2[dh, w*6+c, b*128 + j*16 + o] = W2[o, c, dh, w-(2j+b)]
    m2 = np.zeros((5, 128, 256), np.float32)
    for dh in range(5):
        for dw in range(5):
            for j in range(5):
                for b in range(2):
                    w = 2 * j + b + dw                   # pooled-1 width, <= 13
                    m2[dh, w * 6:(w + 1) * 6,
                       b * 128 + j * 16: b * 128 + j * 16 + 16] = W2[:, :, dh, dw].T
    b2c = np.zeros((1, 128), np.float32)
    for j in range(5):
        b2c[0, j * 16:(j + 1) * 16] = B2

    # fc1: fold torch channel-major flatten (c*25 + h*5 + w) into the weight;
    # conv-stage output flat index is h*128 + w*16 + c.
    g1 = np.zeros((640, 128), np.float32)
    for h in range(5):
        for w in range(5):
            for c in range(16):
                g1[h * 128 + w * 16 + c, :120] = F1[:, c * 25 + h * 5 + w]
    g2 = np.zeros((128, 128), np.float32); g2[:120, :84] = F2.T
    g3 = np.zeros((128, 128), np.float32); g3[:84, :10] = F3.T
    fb1 = np.zeros((1, 128), np.float32); fb1[0, :120] = np.asarray(params["fc1_b"])
    fb2 = np.zeros((1, 128), np.float32); fb2[0, :84] = np.asarray(params["fc2_b"])
    fb3 = np.zeros((1, 128), np.float32); fb3[0, :10] = np.asarray(params["fc3_b"])

    cd = compute_dtype
    return {
        "m1": jnp.asarray(m1, cd), "b1": jnp.asarray(b1c, jnp.float32),
        "m2": jnp.asarray(m2, cd), "b2": jnp.asarray(b2c, jnp.float32),
        "g1": jnp.asarray(g1, cd), "fb1": jnp.asarray(fb1, jnp.float32),
        "g2": jnp.asarray(g2, cd), "fb2": jnp.asarray(fb2, jnp.float32),
        "g3": jnp.asarray(g3, cd), "fb3": jnp.asarray(fb3, jnp.float32),
    }


# ----------------------------------------------------------------------------
# Full Net forward
# ----------------------------------------------------------------------------
def net_forward(x_nchw, prepped):
    p2 = conv_stage(x_nchw, prepped)                 # (N, 5, 128), in VMEM-layout
    x = p2.reshape(p2.shape[0], 640)                 # contiguous, free reshape
    return fused_mlp(x, prepped)                     # (N, 10) f32


def init_params(key):
    """Deterministic init, mimicking torch defaults: U(-1/sqrt(fan_in), +...)."""
    ks = jax.random.split(key, 10)

    def u(k, shape, fan_in):
        bound = 1.0 / jnp.sqrt(jnp.float32(fan_in))
        return jax.random.uniform(k, shape, jnp.float32, -bound, bound)

    return {
        "conv1_w": u(ks[0], (6, 3, 5, 5), 3 * 5 * 5),
        "conv1_b": u(ks[1], (6,), 3 * 5 * 5),
        "conv2_w": u(ks[2], (16, 6, 5, 5), 6 * 5 * 5),
        "conv2_b": u(ks[3], (16,), 6 * 5 * 5),
        "fc1_w": u(ks[4], (120, 400), 400),
        "fc1_b": u(ks[5], (120,), 400),
        "fc2_w": u(ks[6], (84, 120), 120),
        "fc2_b": u(ks[7], (84,), 120),
        "fc3_w": u(ks[8], (10, 84), 84),
        "fc3_b": u(ks[9], (10,), 84),
    }


if __name__ == "__main__":
    key = jax.random.PRNGKey(0)
    k_param, k_x = jax.random.split(key)
    params = init_params(k_param)
    prepped = prepare_params(params)          # build banded/padded weights once

    # The flatten to 16*5*5 requires 3x32x32 input (CIFAR-10); batch = 2.
    x = jax.random.normal(k_x, (2, 3, 32, 32), jnp.float32)

    out = jax.jit(net_forward)(x, prepped)
    out = jax.block_until_ready(out)

    assert out.shape == (2, 10), out.shape
    assert out.dtype == jnp.float32
    assert bool(jnp.all(jnp.isfinite(out)))
    print("KERNEL_OK")
</pallas_src>

<mosaic_0001>
module attributes {stable_mosaic.version = 11 : i64} {
  func.func @conv_stage_kernel(%arg0: i32, %arg1: memref<1x4x8x96xbf16, #tpu.memory_space<vmem>>, %arg2: memref<5x96x256xbf16, #tpu.memory_space<vmem>>, %arg3: memref<1x128xf32, #tpu.memory_space<vmem>>, %arg4: memref<5x128x256xbf16, #tpu.memory_space<vmem>>, %arg5: memref<1x128xf32, #tpu.memory_space<vmem>>, %arg6: memref<1x5x128xbf16, #tpu.memory_space<vmem>>, %arg7: memref<2x7x128xbf16, #tpu.memory_space<vmem>>) attributes {dimension_semantics = [#tpu.dimension_semantics<parallel>], iteration_bounds = array<i64: 2>, scalar_prefetch = 0 : i64, scratch_operands = 1 : i64, tpu.core_type = #tpu.core_type<tc>, window_params = [{transform_indices = @transform_0, window_bounds = array<i64: 1, 4, 8, 96>}, {pipeline_mode = #tpu.pipeline_mode<synchronous>, transform_indices = @transform_1, window_bounds = array<i64: 5, 96, 256>}, {pipeline_mode = #tpu.pipeline_mode<synchronous>, transform_indices = @transform_2, window_bounds = array<i64: 1, 128>}, {pipeline_mode = #tpu.pipeline_mode<synchronous>, transform_indices = @transform_3, window_bounds = array<i64: 5, 128, 256>}, {pipeline_mode = #tpu.pipeline_mode<synchronous>, transform_indices = @transform_4, window_bounds = array<i64: 1, 128>}, {transform_indices = @transform_5, window_bounds = array<i64: 1, 5, 128>}]} {
    %cst = arith.constant 0.000000e+00 : f32
    %0 = vector.broadcast %cst : f32 to vector<7x256xf32>
    %c0 = arith.constant 0 : index
    %c0_0 = arith.constant 0 : index
    %c0_1 = arith.constant 0 : index
    %c0_2 = arith.constant 0 : index
    %1 = vector.load %arg1[%c0, %c0_0, %c0_1, %c0_2] : memref<1x4x8x96xbf16, #tpu.memory_space<vmem>>, vector<1x1x7x96xbf16>
    %2 = vector.shape_cast %1 : vector<1x1x7x96xbf16> to vector<7x96xbf16>
    %c0_3 = arith.constant 0 : index
    %c0_4 = arith.constant 0 : index
    %c0_5 = arith.constant 0 : index
    %3 = vector.load %arg2[%c0_3, %c0_4, %c0_5] : memref<5x96x256xbf16, #tpu.memory_space<vmem>>, vector<1x96x256xbf16>
    %4 = vector.shape_cast %3 : vector<1x96x256xbf16> to vector<96x256xbf16>
    %cst_6 = arith.constant dense<0.000000e+00> : vector<7x256xf32>
    %5 = tpu.matmul %2, %4, %cst_6 {dimension_numbers = #tpu.dot_dimension_numbers<[1], [0], [0], [1], [0, 0, 1, 1], [], []>} : vector<7x96xbf16>, vector<96x256xbf16>, vector<7x256xf32> -> vector<7x256xf32>
    %6 = arith.addf %0, %5 : vector<7x256xf32>
    %c0_7 = arith.constant 0 : index
    %c1 = arith.constant 1 : index
    %c0_8 = arith.constant 0 : index
    %c0_9 = arith.constant 0 : index
    %7 = vector.load %arg1[%c0_7, %c1, %c0_8, %c0_9] : memref<1x4x8x96xbf16, #tpu.memory_space<vmem>>, vector<1x1x7x96xbf16>
    %8 = vector.shape_cast %7 : vector<1x1x7x96xbf16> to vector<7x96xbf16>
    %c1_10 = arith.constant 1 : index
    %c0_11 = arith.constant 0 : index
    %c0_12 = arith.constant 0 : index
    %9 = vector.load %arg2[%c1_10, %c0_11, %c0_12] : memref<5x96x256xbf16, #tpu.memory_space<vmem>>, vector<1x96x256xbf16>
    %10 = vector.shape_cast %9 : vector<1x96x256xbf16> to vector<96x256xbf16>
    %cst_13 = arith.constant dense<0.000000e+00> : vector<7x256xf32>
    %11 = tpu.matmul %8, %10, %cst_13 {dimension_numbers = #tpu.dot_dimension_numbers<[1], [0], [0], [1], [0, 0, 1, 1], [], []>} : vector<7x96xbf16>, vector<96x256xbf16>, vector<7x256xf32> -> vector<7x256xf32>
    %12 = arith.addf %6, %11 : vector<7x256xf32>
    %c0_14 = arith.constant 0 : index
    %c2 = arith.constant 2 : index
    %c0_15 = arith.constant 0 : index
    %c0_16 = arith.constant 0 : index
    %13 = vector.load %arg1[%c0_14, %c2, %c0_15, %c0_16] : memref<1x4x8x96xbf16, #tpu.memory_space<vmem>>, vector<1x1x7x96xbf16>
    %14 = vector.shape_cast %13 : vector<1x1x7x96xbf16> to vector<7x96xbf16>
    %c2_17 = arith.constant 2 : index
    %c0_18 = arith.constant 0 : index
    %c0_19 = arith.constant 0 : index
    %15 = vector.load %arg2[%c2_17, %c0_18, %c0_19] : memref<5x96x256xbf16, #tpu.memory_space<vmem>>, vector<1x96x256xbf16>
    %16 = vector.shape_cast %15 : vector<1x96x256xbf16> to vector<96x256xbf16>
    %cst_20 = arith.constant dense<0.000000e+00> : vector<7x256xf32>
    %17 = tpu.matmul %14, %16, %cst_20 {dimension_numbers = #tpu.dot_dimension_numbers<[1], [0], [0], [1], [0, 0, 1, 1], [], []>} : vector<7x96xbf16>, vector<96x256xbf16>, vector<7x256xf32> -> vector<7x256xf32>
    %18 = arith.addf %12, %17 : vector<7x256xf32>
    %c0_21 = arith.constant 0 : index
    %c3 = arith.constant 3 : index
    %c0_22 = arith.constant 0 : index
    %c0_23 = arith.constant 0 : index
    %19 = vector.load %arg1[%c0_21, %c3, %c0_22, %c0_23] : memref<1x4x8x96xbf16, #tpu.memory_space<vmem>>, vector<1x1x7x96xbf16>
    %20 = vector.shape_cast %19 : vector<1x1x7x96xbf16> to vector<7x96xbf16>
    %c3_24 = arith.constant 3 : index
    %c0_25 = arith.constant 0 : index
    %c0_26 = arith.constant 0 : index
    %21 = vector.load %arg2[%c3_24, %c0_25, %c0_26] : memref<5x96x256xbf16, #tpu.memory_space<vmem>>, vector<1x96x256xbf16>
    %22 = vector.shape_cast %21 : vector<1x96x256xbf16> to vector<96x256xbf16>
    %cst_27 = arith.constant dense<0.000000e+00> : vector<7x256xf32>
    %23 = tpu.matmul %20, %22, %cst_27 {dimension_numbers = #tpu.dot_dimension_numbers<[1], [0], [0], [1], [0, 0, 1, 1], [], []>} : vector<7x96xbf16>, vector<96x256xbf16>, vector<7x256xf32> -> vector<7x256xf32>
    %24 = arith.addf %18, %23 : vector<7x256xf32>
    %c0_28 = arith.constant 0 : index
    %c0_29 = arith.constant 0 : index
    %c1_30 = arith.constant 1 : index
    %c0_31 = arith.constant 0 : index
    %25 = vector.load %arg1[%c0_28, %c0_29, %c1_30, %c0_31] : memref<1x4x8x96xbf16, #tpu.memory_space<vmem>>, vector<1x1x7x96xbf16>
    %26 = vector.shape_cast %25 : vector<1x1x7x96xbf16> to vector<7x96xbf16>
    %c4 = arith.constant 4 : index
    %c0_32 = arith.constant 0 : index
    %c0_33 = arith.constant 0 : index
    %27 = vector.load %arg2[%c4, %c0_32, %c0_33] : memref<5x96x256xbf16, #tpu.memory_space<vmem>>, vector<1x96x256xbf16>
    %28 = vector.shape_cast %27 : vector<1x96x256xbf16> to vector<96x256xbf16>
    %cst_34 = arith.constant dense<0.000000e+00> : vector<7x256xf32>
    %29 = tpu.matmul %26, %28, %cst_34 {dimension_numbers = #tpu.dot_dimension_numbers<[1], [0], [0], [1], [0, 0, 1, 1], [], []>} : vector<7x96xbf16>, vector<96x256xbf16>, vector<7x256xf32> -> vector<7x256xf32>
    %30 = arith.addf %24, %29 : vector<7x256xf32>
    %31 = vector.extract_strided_slice %30 {offsets = [0, 0], sizes = [7, 128], strides = [1, 1]} : vector<7x256xf32> to vector<7x128xf32>
    %32 = vector.extract_strided_slice %30 {offsets = [0, 128], sizes = [7, 128], strides = [1, 1]} : vector<7x256xf32> to vector<7x128xf32>
    %33 = arith.maximumf %31, %32 : vector<7x128xf32>
    %cst_35 = arith.constant 0.000000e+00 : f32
    %34 = vector.broadcast %cst_35 : f32 to vector<7x256xf32>
    %c0_36 = arith.constant 0 : index
    %c1_37 = arith.constant 1 : index
    %c0_38 = arith.constant 0 : index
    %c0_39 = arith.constant 0 : index
    %35 = vector.load %arg1[%c0_36, %c1_37, %c0_38, %c0_39] : memref<1x4x8x96xbf16, #tpu.memory_space<vmem>>, vector<1x1x7x96xbf16>
    %36 = vector.shape_cast %35 : vector<1x1x7x96xbf16> to vector<7x96xbf16>
    %c0_40 = arith.constant 0 : index
    %c0_41 = arith.constant 0 : index
    %c0_42 = arith.constant 0 : index
    %37 = vector.load %arg2[%c0_40, %c0_41, %c0_42] : memref<5x96x256xbf16, #tpu.memory_space<vmem>>, vector<1x96x256xbf16>
    %38 = vector.shape_cast %37 : vector<1x96x256xbf16> to vector<96x256xbf16>
    %cst_43 = arith.constant dense<0.000000e+00> : vector<7x256xf32>
    %39 = tpu.matmul %36, %38, %cst_43 {dimension_numbers = #tpu.dot_dimension_numbers<[1], [0], [0], [1], [0, 0, 1, 1], [], []>} : vector<7x96xbf16>, vector<96x256xbf16>, vector<7x256xf32> -> vector<7x256xf32>
    %40 = arith.addf %34, %39 : vector<7x256xf32>
    %c0_44 = arith.constant 0 : index
    %c2_45 = arith.constant 2 : index
    %c0_46 = arith.constant 0 : index
    %c0_47 = arith.constant 0 : index
    %41 = vector.load %arg1[%c0_44, %c2_45, %c0_46, %c0_47] : memref<1x4x8x96xbf16, #tpu.memory_space<vmem>>, vector<1x1x7x96xbf16>
    %42 = vector.shape_cast %41 : vector<1x1x7x96xbf16> to vector<7x96xbf16>
    %c1_48 = arith.constant 1 : index
    %c0_49 = arith.constant 0 : index
    %c0_50 = arith.constant 0 : index
    %43 = vector.load %arg2[%c1_48, %c0_49, %c0_50] : memref<5x96x256xbf16, #tpu.memory_space<vmem>>, vector<1x96x256xbf16>
    %44 = vector.shape_cast %43 : vector<1x96x256xbf16> to vector<96x256xbf16>
    %cst_51 = arith.constant dense<0.000000e+00> : vector<7x256xf32>
    %45 = tpu.matmul %42, %44, %cst_51 {dimension_numbers = #tpu.dot_dimension_numbers<[1], [0], [0], [1], [0, 0, 1, 1], [], []>} : vector<7x96xbf16>, vector<96x256xbf16>, vector<7x256xf32> -> vector<7x256xf32>
    %46 = arith.addf %40, %45 : vector<7x256xf32>
    %c0_52 = arith.constant 0 : index
    %c3_53 = arith.constant 3 : index
    %c0_54 = arith.constant 0 : index
    %c0_55 = arith.constant 0 : index
    %47 = vector.load %arg1[%c0_52, %c3_53, %c0_54, %c0_55] : memref<1x4x8x96xbf16, #tpu.memory_space<vmem>>, vector<1x1x7x96xbf16>
    %48 = vector.shape_cast %47 : vector<1x1x7x96xbf16> to vector<7x96xbf16>
    %c2_56 = arith.constant 2 : index
    %c0_57 = arith.constant 0 : index
    %c0_58 = arith.constant 0 : index
    %49 = vector.load %arg2[%c2_56, %c0_57, %c0_58] : memref<5x96x256xbf16, #tpu.memory_space<vmem>>, vector<1x96x256xbf16>
    %50 = vector.shape_cast %49 : vector<1x96x256xbf16> to vector<96x256xbf16>
    %cst_59 = arith.constant dense<0.000000e+00> : vector<7x256xf32>
    %51 = tpu.matmul %48, %50, %cst_59 {dimension_numbers = #tpu.dot_dimension_numbers<[1], [0], [0], [1], [0, 0, 1, 1], [], []>} : vector<7x96xbf16>, vector<96x256xbf16>, vector<7x256xf32> -> vector<7x256xf32>
    %52 = arith.addf %46, %51 : vector<7x256xf32>
    %c0_60 = arith.constant 0 : index
    %c0_61 = arith.constant 0 : index
    %c1_62 = arith.constant 1 : index
    %c0_63 = arith.constant 0 : index
    %53 = vector.load %arg1[%c0_60, %c0_61, %c1_62, %c0_63] : memref<1x4x8x96xbf16, #tpu.memory_space<vmem>>, vector<1x1x7x96xbf16>
    %54 = vector.shape_cast %53 : vector<1x1x7x96xbf16> to vector<7x96xbf16>
    %c3_64 = arith.constant 3 : index
    %c0_65 = arith.constant 0 : index
    %c0_66 = arith.constant 0 : index
    %55 = vector.load %arg2[%c3_64, %c0_65, %c0_66] : memref<5x96x256xbf16, #tpu.memory_space<vmem>>, vector<1x96x256xbf16>
    %56 = vector.shape_cast %55 : vector<1x96x256xbf16> to vector<96x256xbf16>
    %cst_67 = arith.constant dense<0.000000e+00> : vector<7x256xf32>
    %57 = tpu.matmul %54, %56, %cst_67 {dimension_numbers = #tpu.dot_dimension_numbers<[1], [0], [0], [1], [0, 0, 1, 1], [], []>} : vector<7x96xbf16>, vector<96x256xbf16>, vector<7x256xf32> -> vector<7x256xf32>
    %58 = arith.addf %52, %57 : vector<7x256xf32>
    %c0_68 = arith.constant 0 : index
    %c1_69 = arith.constant 1 : index
    %c1_70 = arith.constant 1 : index
    %c0_71 = arith.constant 0 : index
    %59 = vector.load %arg1[%c0_68, %c1_69, %c1_70, %c0_71] : memref<1x4x8x96xbf16, #tpu.memory_space<vmem>>, vector<1x1x7x96xbf16>
    %60 = vector.shape_cast %59 : vector<1x1x7x96xbf16> to vector<7x96xbf16>
    %c4_72 = arith.constant 4 : index
    %c0_73 = arith.constant 0 : index
    %c0_74 = arith.constant 0 : index
    %61 = vector.load %arg2[%c4_72, %c0_73, %c0_74] : memref<5x96x256xbf16, #tpu.memory_space<vmem>>, vector<1x96x256xbf16>
    %62 = vector.shape_cast %61 : vector<1x96x256xbf16> to vector<96x256xbf16>
    %cst_75 = arith.constant dense<0.000000e+00> : vector<7x256xf32>
    %63 = tpu.matmul %60, %62, %cst_75 {dimension_numbers = #tpu.dot_dimension_numbers<[1], [0], [0], [1], [0, 0, 1, 1], [], []>} : vector<7x96xbf16>, vector<96x256xbf16>, vector<7x256xf32> -> vector<7x256xf32>
    %64 = arith.addf %58, %63 : vector<7x256xf32>
    %65 = vector.extract_strided_slice %64 {offsets = [0, 0], sizes = [7, 128], strides = [1, 1]} : vector<7x256xf32> to vector<7x128xf32>
    %66 = vector.extract_strided_slice %64 {offsets = [0, 128], sizes = [7, 128], strides = [1, 1]} : vector<7x256xf32> to vector<7x128xf32>
    %67 = arith.maximumf %65, %66 : vector<7x128xf32>
    %68 = arith.maximumf %33, %67 : vector<7x128xf32>
    %c0_76 = arith.constant 0 : index
    %c0_77 = arith.constant 0 : index
    %69 = vector.load %arg3[%c0_76, %c0_77] : memref<1x128xf32, #tpu.memory_space<vmem>>, vector<1x128xf32>
    %70 = vector.broadcast %69 : vector<1x128xf32> to vector<7x128xf32>
    %71 = arith.addf %68, %70 : vector<7x128xf32>
    %cst_78 = arith.constant 0.000000e+00 : f32
    %72 = vector.broadcast %cst_78 : f32 to vector<7x128xf32>
    %73 = arith.maximumf %71, %72 : vector<7x128xf32>
    %74 = arith.truncf %73 : vector<7x128xf32> to vector<7x128xbf16>
    %c0_79 = arith.constant 0 : index
    %c0_80 = arith.constant 0 : index
    %c0_81 = arith.constant 0 : index
    %75 = vector.load %arg7[%c0_79, %c0_80, %c0_81] : memref<2x7x128xbf16, #tpu.memory_space<vmem>>, vector<1x7x128xbf16>
    %76 = vector.shape_cast %75 : vector<1x7x128xbf16> to vector<7x128xbf16>
    %77 = vector.shape_cast %74 : vector<7x128xbf16> to vector<1x7x128xbf16>
    tpu.vector_store %arg7[%c0_79, %c0_80, %c0_81], %77 {strides = array<i32>} : memref<2x7x128xbf16, #tpu.memory_space<vmem>>, vector<1x7x128xbf16>,
    %cst_82 = arith.constant 0.000000e+00 : f32
    %78 = vector.broadcast %cst_82 : f32 to vector<7x256xf32>
    %c0_83 = arith.constant 0 : index
    %c2_84 = arith.constant 2 : index
    %c0_85 = arith.constant 0 : index
    %c0_86 = arith.constant 0 : index
    %79 = vector.load %arg1[%c0_83, %c2_84, %c0_85, %c0_86] : memref<1x4x8x96xbf16, #tpu.memory_space<vmem>>, vector<1x1x7x96xbf16>
    %80 = vector.shape_cast %79 : vector<1x1x7x96xbf16> to vector<7x96xbf16>
    %c0_87 = arith.constant 0 : index
    %c0_88 = arith.constant 0 : index
    %c0_89 = arith.constant 0 : index
    %81 = vector.load %arg2[%c0_87, %c0_88, %c0_89] : memref<5x96x256xbf16, #tpu.memory_space<vmem>>, vector<1x96x256xbf16>
    %82 = vector.shape_cast %81 : vector<1x96x256xbf16> to vector<96x256xbf16>
    %cst_90 = arith.constant dense<0.000000e+00> : vector<7x256xf32>
    %83 = tpu.matmul %80, %82, %cst_90 {dimension_numbers = #tpu.dot_dimension_numbers<[1], [0], [0], [1], [0, 0, 1, 1], [], []>} : vector<7x96xbf16>, vector<96x256xbf16>, vector<7x256xf32> -> vector<7x256xf32>
    %84 = arith.addf %78, %83 : vector<7x256xf32>
    %c0_91 = arith.constant 0 : index
    %c3_92 = arith.constant 3 : index
    %c0_93 = arith.constant 0 : index
    %c0_94 = arith.constant 0 : index
    %85 = vector.load %arg1[%c0_91, %c3_92, %c0_93, %c0_94] : memref<1x4x8x96xbf16, #tpu.memory_space<vmem>>, vector<1x1x7x96xbf16>
    %86 = vector.shape_cast %85 : vector<1x1x7x96xbf16> to vector<7x96xbf16>
    %c1_95 = arith.constant 1 : index
    %c0_96 = arith.constant 0 : index
    %c0_97 = arith.constant 0 : index
    %87 = vector.load %arg2[%c1_95, %c0_96, %c0_97] : memref<5x96x256xbf16, #tpu.memory_space<vmem>>, vector<1x96x256xbf16>
    %88 = vector.shape_cast %87 : vector<1x96x256xbf16> to vector<96x256xbf16>
    %cst_98 = arith.constant dense<0.000000e+00> : vector<7x256xf32>
    %89 = tpu.matmul %86, %88, %cst_98 {dimension_numbers = #tpu.dot_dimension_numbers<[1], [0], [0], [1], [0, 0, 1, 1], [], []>} : vector<7x96xbf16>, vector<96x256xbf16>, vector<7x256xf32> -> vector<7x256xf32>
    %90 = arith.addf %84, %89 : vector<7x256xf32>
    %c0_99 = arith.constant 0 : index
    %c0_100 = arith.constant 0 : index
    %c1_101 = arith.constant 1 : index
    %c0_102 = arith.constant 0 : index
    %91 = vector.load %arg1[%c0_99, %c0_100, %c1_101, %c0_102] : memref<1x4x8x96xbf16, #tpu.memory_space<vmem>>, vector<1x1x7x96xbf16>
    %92 = vector.shape_cast %91 : vector<1x1x7x96xbf16> to vector<7x96xbf16>
    %c2_103 = arith.constant 2 : index
    %c0_104 = arith.constant 0 : index
    %c0_105 = arith.constant 0 : index
    %93 = vector.load %arg2[%c2_103, %c0_104, %c0_105] : memref<5x96x256xbf16, #tpu.memory_space<vmem>>, vector<1x96x256xbf16>
    %94 = vector.shape_cast %93 : vector<1x96x256xbf16> to vector<96x256xbf16>
    %cst_106 = arith.constant dense<0.000000e+00> : vector<7x256xf32>
    %95 = tpu.matmul %92, %94, %cst_106 {dimension_numbers = #tpu.dot_dimension_numbers<[1], [0], [0], [1], [0, 0, 1, 1], [], []>} : vector<7x96xbf16>, vector<96x256xbf16>, vector<7x256xf32> -> vector<7x256xf32>
    %96 = arith.addf %90, %95 : vector<7x256xf32>
    %c0_107 = arith.constant 0 : index
    %c1_108 = arith.constant 1 : index
    %c1_109 = arith.constant 1 : index
    %c0_110 = arith.constant 0 : index
    %97 = vector.load %arg1[%c0_107, %c1_108, %c1_109, %c0_110] : memref<1x4x8x96xbf16, #tpu.memory_space<vmem>>, vector<1x1x7x96xbf16>
    %98 = vector.shape_cast %97 : vector<1x1x7x96xbf16> to vector<7x96xbf16>
    %c3_111 = arith.constant 3 : index
    %c0_112 = arith.constant 0 : index
    %c0_113 = arith.constant 0 : index
    %99 = vector.load %arg2[%c3_111, %c0_112, %c0_113] : memref<5x96x256xbf16, #tpu.memory_space<vmem>>, vector<1x96x256xbf16>
    %100 = vector.shape_cast %99 : vector<1x96x256xbf16> to vector<96x256xbf16>
    %cst_114 = arith.constant dense<0.000000e+00> : vector<7x256xf32>
    %101 = tpu.matmul %98, %100, %cst_114 {dimension_numbers = #tpu.dot_dimension_numbers<[1], [0], [0], [1], [0, 0, 1, 1], [], []>} : vector<7x96xbf16>, vector<96x256xbf16>, vector<7x256xf32> -> vector<7x256xf32>
    %102 = arith.addf %96, %101 : vector<7x256xf32>
    %c0_115 = arith.constant 0 : index
    %c2_116 = arith.constant 2 : index
    %c1_117 = arith.constant 1 : index
    %c0_118 = arith.constant 0 : index
    %103 = vector.load %arg1[%c0_115, %c2_116, %c1_117, %c0_118] : memref<1x4x8x96xbf16, #tpu.memory_space<vmem>>, vector<1x1x7x96xbf16>
    %104 = vector.shape_cast %103 : vector<1x1x7x96xbf16> to vector<7x96xbf16>
    %c4_119 = arith.constant 4 : index
    %c0_120 = arith.constant 0 : index
    %c0_121 = arith.constant 0 : index
    %105 = vector.load %arg2[%c4_119, %c0_120, %c0_121] : memref<5x96x256xbf16, #tpu.memory_space<vmem>>, vector<1x96x256xbf16>
    %106 = vector.shape_cast %105 : vector<1x96x256xbf16> to vector<96x256xbf16>
    %cst_122 = arith.constant dense<0.000000e+00> : vector<7x256xf32>
    %107 = tpu.matmul %104, %106, %cst_122 {dimension_numbers = #tpu.dot_dimension_numbers<[1], [0], [0], [1], [0, 0, 1, 1], [], []>} : vector<7x96xbf16>, vector<96x256xbf16>, vector<7x256xf32> -> vector<7x256xf32>
    %108 = arith.addf %102, %107 : vector<7x256xf32>
    %109 = vector.extract_strided_slice %108 {offsets = [0, 0], sizes = [7, 128], strides = [1, 1]} : vector<7x256xf32> to vector<7x128xf32>
    %110 = vector.extract_strided_slice %108 {offsets = [0, 128], sizes = [7, 128], strides = [1, 1]} : vector<7x256xf32> to vector<7x128xf32>
    %111 = arith.maximumf %109, %110 : vector<7x128xf32>
    %cst_123 = arith.constant 0.000000e+00 : f32
    %112 = vector.broadcast %cst_123 : f32 to vector<7x256xf32>
    %c0_124 = arith.constant 0 : index
    %c3_125 = arith.constant 3 : index
    %c0_126 = arith.constant 0 : index
    %c0_127 = arith.constant 0 : index
    %113 = vector.load %arg1[%c0_124, %c3_125, %c0_126, %c0_127] : memref<1x4x8x96xbf16, #tpu.memory_space<vmem>>, vector<1x1x7x96xbf16>
    %114 = vector.shape_cast %113 : vector<1x1x7x96xbf16> to vector<7x96xbf16>
    %c0_128 = arith.constant 0 : index
    %c0_129 = arith.constant 0 : index
    %c0_130 = arith.constant 0 : index
    %115 = vector.load %arg2[%c0_128, %c0_129, %c0_130] : memref<5x96x256xbf16, #tpu.memory_space<vmem>>, vector<1x96x256xbf16>
    %116 = vector.shape_cast %115 : vector<1x96x256xbf16> to vector<96x256xbf16>
    %cst_131 = arith.constant dense<0.000000e+00> : vector<7x256xf32>
    %117 = tpu.matmul %114, %116, %cst_131 {dimension_numbers = #tpu.dot_dimension_numbers<[1], [0], [0], [1], [0, 0, 1, 1], [], []>} : vector<7x96xbf16>, vector<96x256xbf16>, vector<7x256xf32> -> vector<7x256xf32>
    %118 = arith.addf %112, %117 : vector<7x256xf32>
    %c0_132 = arith.constant 0 : index
    %c0_133 = arith.constant 0 : index
    %c1_134 = arith.constant 1 : index
    %c0_135 = arith.constant 0 : index
    %119 = vector.load %arg1[%c0_132, %c0_133, %c1_134, %c0_135] : memref<1x4x8x96xbf16, #tpu.memory_space<vmem>>, vector<1x1x7x96xbf16>
    %120 = vector.shape_cast %119 : vector<1x1x7x96xbf16> to vector<7x96xbf16>
    %c1_136 = arith.constant 1 : index
    %c0_137 = arith.constant 0 : index
    %c0_138 = arith.constant 0 : index
    %121 = vector.load %arg2[%c1_136, %c0_137, %c0_138] : memref<5x96x256xbf16, #tpu.memory_space<vmem>>, vector<1x96x256xbf16>
    %122 = vector.shape_cast %121 : vector<1x96x256xbf16> to vector<96x256xbf16>
    %cst_139 = arith.constant dense<0.000000e+00> : vector<7x256xf32>
    %123 = tpu.matmul %120, %122, %cst_139 {dimension_numbers = #tpu.dot_dimension_numbers<[1], [0], [0], [1], [0, 0, 1, 1], [], []>} : vector<7x96xbf16>, vector<96x256xbf16>, vector<7x256xf32> -> vector<7x256xf32>
    %124 = arith.addf %118, %123 : vector<7x256xf32>
    %c0_140 = arith.constant 0 : index
    %c1_141 = arith.constant 1 : index
    %c1_142 = arith.constant 1 : index
    %c0_143 = arith.constant 0 : index
    %125 = vector.load %arg1[%c0_140, %c1_141, %c1_142, %c0_143] : memref<1x4x8x96xbf16, #tpu.memory_space<vmem>>, vector<1x1x7x96xbf16>
    %126 = vector.shape_cast %125 : vector<1x1x7x96xbf16> to vector<7x96xbf16>
    %c2_144 = arith.constant 2 : index
    %c0_145 = arith.constant 0 : index
    %c0_146 = arith.constant 0 : index
    %127 = vector.load %arg2[%c2_144, %c0_145, %c0_146] : memref<5x96x256xbf16, #tpu.memory_space<vmem>>, vector<1x96x256xbf16>
    %128 = vector.shape_cast %127 : vector<1x96x256xbf16> to vector<96x256xbf16>
    %cst_147 = arith.constant dense<0.000000e+00> : vector<7x256xf32>
    %129 = tpu.matmul %126, %128, %cst_147 {dimension_numbers = #tpu.dot_dimension_numbers<[1], [0], [0], [1], [0, 0, 1, 1], [], []>} : vector<7x96xbf16>, vector<96x256xbf16>, vector<7x256xf32> -> vector<7x256xf32>
    %130 = arith.addf %124, %129 : vector<7x256xf32>
    %c0_148 = arith.constant 0 : index
    %c2_149 = arith.constant 2 : index
    %c1_150 = arith.constant 1 : index
    %c0_151 = arith.constant 0 : index
    %131 = vector.load %arg1[%c0_148, %c2_149, %c1_150, %c0_151] : memref<1x4x8x96xbf16, #tpu.memory_space<vmem>>, vector<1x1x7x96xbf16>
    %132 = vector.shape_cast %131 : vector<1x1x7x96xbf16> to vector<7x96xbf16>
    %c3_152 = arith.constant 3 : index
    %c0_153 = arith.constant 0 : index
    %c0_154 = arith.constant 0 : index
    %133 = vector.load %arg2[%c3_152, %c0_153, %c0_154] : memref<5x96x256xbf16, #tpu.memory_space<vmem>>, vector<1x96x256xbf16>
    %134 = vector.shape_cast %133 : vector<1x96x256xbf16> to vector<96x256xbf16>
    %cst_155 = arith.constant dense<0.000000e+00> : vector<7x256xf32>
    %135 = tpu.matmul %132, %134, %cst_155 {dimension_numbers = #tpu.dot_dimension_numbers<[1], [0], [0], [1], [0, 0, 1, 1], [], []>} : vector<7x96xbf16>, vector<96x256xbf16>, vector<7x256xf32> -> vector<7x256xf32>
    %136 = arith.addf %130, %135 : vector<7x256xf32>
    %c0_156 = arith.constant 0 : index
    %c3_157 = arith.constant 3 : index
    %c1_158 = arith.constant 1 : index
    %c0_159 = arith.constant 0 : index
    %137 = vector.load %arg1[%c0_156, %c3_157, %c1_158, %c0_159] : memref<1x4x8x96xbf16, #tpu.memory_space<vmem>>, vector<1x1x7x96xbf16>
    %138 = vector.shape_cast %137 : vector<1x1x7x96xbf16> to vector<7x96xbf16>
    %c4_160 = arith.constant 4 : index
    %c0_161 = arith.constant 0 : index
    %c0_162 = arith.constant 0 : index
    %139 = vector.load %arg2[%c4_160, %c0_161, %c0_162] : memref<5x96x256xbf16, #tpu.memory_space<vmem>>, vector<1x96x256xbf16>
    %140 = vector.shape_cast %139 : vector<1x96x256xbf16> to vector<96x256xbf16>
    %cst_163 = arith.constant dense<0.000000e+00> : vector<7x256xf32>
    %141 = tpu.matmul %138, %140, %cst_163 {dimension_numbers = #tpu.dot_dimension_numbers<[1], [0], [0], [1], [0, 0, 1, 1], [], []>} : vector<7x96xbf16>, vector<96x256xbf16>, vector<7x256xf32> -> vector<7x256xf32>
    %142 = arith.addf %136, %141 : vector<7x256xf32>
    %143 = vector.extract_strided_slice %142 {offsets = [0, 0], sizes = [7, 128], strides = [1, 1]} : vector<7x256xf32> to vector<7x128xf32>
    %144 = vector.extract_strided_slice %142 {offsets = [0, 128], sizes = [7, 128], strides = [1, 1]} : vector<7x256xf32> to vector<7x128xf32>
    %145 = arith.maximumf %143, %144 : vector<7x128xf32>
    %146 = arith.maximumf %111, %145 : vector<7x128xf32>
    %c0_164 = arith.constant 0 : index
    %c0_165 = arith.constant 0 : index
    %147 = vector.load %arg3[%c0_164, %c0_165] : memref<1x128xf32, #tpu.memory_space<vmem>>, vector<1x128xf32>
    %148 = vector.broadcast %147 : vector<1x128xf32> to vector<7x128xf32>
    %149 = arith.addf %146, %148 : vector<7x128xf32>
    %cst_166 = arith.constant 0.000000e+00 : f32
    %150 = vector.broadcast %cst_166 : f32 to vector<7x128xf32>
    %151 = arith.maximumf %149, %150 : vector<7x128xf32>
    %152 = arith.truncf %151 : vector<7x128xf32> to vector<7x128xbf16>
    %c1_167 = arith.constant 1 : index
    %c0_168 = arith.constant 0 : index
    %c0_169 = arith.constant 0 : index
    %153 = vector.load %arg7[%c1_167, %c0_168, %c0_169] : memref<2x7x128xbf16, #tpu.memory_space<vmem>>, vector<1x7x128xbf16>
    %154 = vector.shape_cast %153 : vector<1x7x128xbf16> to vector<7x128xbf16>
    %155 = vector.shape_cast %152 : vector<7x128xbf16> to vector<1x7x128xbf16>
    tpu.vector_store %arg7[%c1_167, %c0_168, %c0_169], %155 {strides = array<i32>} : memref<2x7x128xbf16, #tpu.memory_space<vmem>>, vector<1x7x128xbf16>,
    %cst_170 = arith.constant 0.000000e+00 : f32
    %156 = vector.broadcast %cst_170 : f32 to vector<5x256xf32>
    %c0_171 = arith.constant 0 : index
    %c0_172 = arith.constant 0 : index
    %c0_173 = arith.constant 0 : index
    %157 = vector.load %arg7[%c0_171, %c0_172, %c0_173] : memref<2x7x128xbf16, #tpu.memory_space<vmem>>, vector<1x5x128xbf16>
    %158 = vector.shape_cast %157 : vector<1x5x128xbf16> to vector<5x128xbf16>
    %c0_174 = arith.constant 0 : index
    %c0_175 = arith.constant 0 : index
    %c0_176 = arith.constant 0 : index
    %159 = vector.load %arg4[%c0_174, %c0_175, %c0_176] : memref<5x128x256xbf16, #tpu.memory_space<vmem>>, vector<1x128x256xbf16>
    %160 = vector.shape_cast %159 : vector<1x128x256xbf16> to vector<128x256xbf16>
    %cst_177 = arith.constant dense<0.000000e+00> : vector<5x256xf32>
    %161 = tpu.matmul %158, %160, %cst_177 {dimension_numbers = #tpu.dot_dimension_numbers<[1], [0], [0], [1], [0, 0, 1, 1], [], []>} : vector<5x128xbf16>, vector<128x256xbf16>, vector<5x256xf32> -> vector<5x256xf32>
    %162 = arith.addf %156, %161 : vector<5x256xf32>
    %c1_178 = arith.constant 1 : index
    %c0_179 = arith.constant 0 : index
    %c0_180 = arith.constant 0 : index
    %163 = vector.load %arg7[%c1_178, %c0_179, %c0_180] : memref<2x7x128xbf16, #tpu.memory_space<vmem>>, vector<1x5x128xbf16>
    %164 = vector.shape_cast %163 : vector<1x5x128xbf16> to vector<5x128xbf16>
    %c1_181 = arith.constant 1 : index
    %c0_182 = arith.constant 0 : index
    %c0_183 = arith.constant 0 : index
    %165 = vector.load %arg4[%c1_181, %c0_182, %c0_183] : memref<5x128x256xbf16, #tpu.memory_space<vmem>>, vector<1x128x256xbf16>
    %166 = vector.shape_cast %165 : vector<1x128x256xbf16> to vector<128x256xbf16>
    %cst_184 = arith.constant dense<0.000000e+00> : vector<5x256xf32>
    %167 = tpu.matmul %164, %166, %cst_184 {dimension_numbers = #tpu.dot_dimension_numbers<[1], [0], [0], [1], [0, 0, 1, 1], [], []>} : vector<5x128xbf16>, vector<128x256xbf16>, vector<5x256xf32> -> vector<5x256xf32>
    %168 = arith.addf %162, %167 : vector<5x256xf32>
    %c0_185 = arith.constant 0 : index
    %c1_186 = arith.constant 1 : index
    %c0_187 = arith.constant 0 : index
    %169 = vector.load %arg7[%c0_185, %c1_186, %c0_187] : memref<2x7x128xbf16, #tpu.memory_space<vmem>>, vector<1x5x128xbf16>
    %170 = vector.shape_cast %169 : vector<1x5x128xbf16> to vector<5x128xbf16>
    %c2_188 = arith.constant 2 : index
    %c0_189 = arith.constant 0 : index
    %c0_190 = arith.constant 0 : index
    %171 = vector.load %arg4[%c2_188, %c0_189, %c0_190] : memref<5x128x256xbf16, #tpu.memory_space<vmem>>, vector<1x128x256xbf16>
    %172 = vector.shape_cast %171 : vector<1x128x256xbf16> to vector<128x256xbf16>
    %cst_191 = arith.constant dense<0.000000e+00> : vector<5x256xf32>
    %173 = tpu.matmul %170, %172, %cst_191 {dimension_numbers = #tpu.dot_dimension_numbers<[1], [0], [0], [1], [0, 0, 1, 1], [], []>} : vector<5x128xbf16>, vector<128x256xbf16>, vector<5x256xf32> -> vector<5x256xf32>
    %174 = arith.addf %168, %173 : vector<5x256xf32>
    %c1_192 = arith.constant 1 : index
    %c1_193 = arith.constant 1 : index
    %c0_194 = arith.constant 0 : index
    %175 = vector.load %arg7[%c1_192, %c1_193, %c0_194] : memref<2x7x128xbf16, #tpu.memory_space<vmem>>, vector<1x5x128xbf16>
    %176 = vector.shape_cast %175 : vector<1x5x128xbf16> to vector<5x128xbf16>
    %c3_195 = arith.constant 3 : index
    %c0_196 = arith.constant 0 : index
    %c0_197 = arith.constant 0 : index
    %177 = vector.load %arg4[%c3_195, %c0_196, %c0_197] : memref<5x128x256xbf16, #tpu.memory_space<vmem>>, vector<1x128x256xbf16>
    %178 = vector.shape_cast %177 : vector<1x128x256xbf16> to vector<128x256xbf16>
    %cst_198 = arith.constant dense<0.000000e+00> : vector<5x256xf32>
    %179 = tpu.matmul %176, %178, %cst_198 {dimension_numbers = #tpu.dot_dimension_numbers<[1], [0], [0], [1], [0, 0, 1, 1], [], []>} : vector<5x128xbf16>, vector<128x256xbf16>, vector<5x256xf32> -> vector<5x256xf32>
    %180 = arith.addf %174, %179 : vector<5x256xf32>
    %c0_199 = arith.constant 0 : index
    %c2_200 = arith.constant 2 : index
    %c0_201 = arith.constant 0 : index
    %181 = vector.load %arg7[%c0_199, %c2_200, %c0_201] : memref<2x7x128xbf16, #tpu.memory_space<vmem>>, vector<1x5x128xbf16>
    %182 = vector.shape_cast %181 : vector<1x5x128xbf16> to vector<5x128xbf16>
    %c4_202 = arith.constant 4 : index
    %c0_203 = arith.constant 0 : index
    %c0_204 = arith.constant 0 : index
    %183 = vector.load %arg4[%c4_202, %c0_203, %c0_204] : memref<5x128x256xbf16, #tpu.memory_space<vmem>>, vector<1x128x256xbf16>
    %184 = vector.shape_cast %183 : vector<1x128x256xbf16> to vector<128x256xbf16>
    %cst_205 = arith.constant dense<0.000000e+00> : vector<5x256xf32>
    %185 = tpu.matmul %182, %184, %cst_205 {dimension_numbers = #tpu.dot_dimension_numbers<[1], [0], [0], [1], [0, 0, 1, 1], [], []>} : vector<5x128xbf16>, vector<128x256xbf16>, vector<5x256xf32> -> vector<5x256xf32>
    %186 = arith.addf %180, %185 : vector<5x256xf32>
    %187 = vector.extract_strided_slice %186 {offsets = [0, 0], sizes = [5, 128], strides = [1, 1]} : vector<5x256xf32> to vector<5x128xf32>
    %188 = vector.extract_strided_slice %186 {offsets = [0, 128], sizes = [5, 128], strides = [1, 1]} : vector<5x256xf32> to vector<5x128xf32>
    %189 = arith.maximumf %187, %188 : vector<5x128xf32>
    %cst_206 = arith.constant 0.000000e+00 : f32
    %190 = vector.broadcast %cst_206 : f32 to vector<5x256xf32>
    %c1_207 = arith.constant 1 : index
    %c0_208 = arith.constant 0 : index
    %c0_209 = arith.constant 0 : index
    %191 = vector.load %arg7[%c1_207, %c0_208, %c0_209] : memref<2x7x128xbf16, #tpu.memory_space<vmem>>, vector<1x5x128xbf16>
    %192 = vector.shape_cast %191 : vector<1x5x128xbf16> to vector<5x128xbf16>
    %c0_210 = arith.constant 0 : index
    %c0_211 = arith.constant 0 : index
    %c0_212 = arith.constant 0 : index
    %193 = vector.load %arg4[%c0_210, %c0_211, %c0_212] : memref<5x128x256xbf16, #tpu.memory_space<vmem>>, vector<1x128x256xbf16>
    %194 = vector.shape_cast %193 : vector<1x128x256xbf16> to vector<128x256xbf16>
    %cst_213 = arith.constant dense<0.000000e+00> : vector<5x256xf32>
    %195 = tpu.matmul %192, %194, %cst_213 {dimension_numbers = #tpu.dot_dimension_numbers<[1], [0], [0], [1], [0, 0, 1, 1], [], []>} : vector<5x128xbf16>, vector<128x256xbf16>, vector<5x256xf32> -> vector<5x256xf32>
    %196 = arith.addf %190, %195 : vector<5x256xf32>
    %c0_214 = arith.constant 0 : index
    %c1_215 = arith.constant 1 : index
    %c0_216 = arith.constant 0 : index
    %197 = vector.load %arg7[%c0_214, %c1_215, %c0_216] : memref<2x7x128xbf16, #tpu.memory_space<vmem>>, vector<1x5x128xbf16>
    %198 = vector.shape_cast %197 : vector<1x5x128xbf16> to vector<5x128xbf16>
    %c1_217 = arith.constant 1 : index
    %c0_218 = arith.constant 0 : index
    %c0_219 = arith.constant 0 : index
    %199 = vector.load %arg4[%c1_217, %c0_218, %c0_219] : memref<5x128x256xbf16, #tpu.memory_space<vmem>>, vector<1x128x256xbf16>
    %200 = vector.shape_cast %199 : vector<1x128x256xbf16> to vector<128x256xbf16>
    %cst_220 = arith.constant dense<0.000000e+00> : vector<5x256xf32>
    %201 = tpu.matmul %198, %200, %cst_220 {dimension_numbers = #tpu.dot_dimension_numbers<[1], [0], [0], [1], [0, 0, 1, 1], [], []>} : vector<5x128xbf16>, vector<128x256xbf16>, vector<5x256xf32> -> vector<5x256xf32>
    %202 = arith.addf %196, %201 : vector<5x256xf32>
    %c1_221 = arith.constant 1 : index
    %c1_222 = arith.constant 1 : index
    %c0_223 = arith.constant 0 : index
    %203 = vector.load %arg7[%c1_221, %c1_222, %c0_223] : memref<2x7x128xbf16, #tpu.memory_space<vmem>>, vector<1x5x128xbf16>
    %204 = vector.shape_cast %203 : vector<1x5x128xbf16> to vector<5x128xbf16>
    %c2_224 = arith.constant 2 : index
    %c0_225 = arith.constant 0 : index
    %c0_226 = arith.constant 0 : index
    %205 = vector.load %arg4[%c2_224, %c0_225, %c0_226] : memref<5x128x256xbf16, #tpu.memory_space<vmem>>, vector<1x128x256xbf16>
    %206 = vector.shape_cast %205 : vector<1x128x256xbf16> to vector<128x256xbf16>
    %cst_227 = arith.constant dense<0.000000e+00> : vector<5x256xf32>
    %207 = tpu.matmul %204, %206, %cst_227 {dimension_numbers = #tpu.dot_dimension_numbers<[1], [0], [0], [1], [0, 0, 1, 1], [], []>} : vector<5x128xbf16>, vector<128x256xbf16>, vector<5x256xf32> -> vector<5x256xf32>
    %208 = arith.addf %202, %207 : vector<5x256xf32>
    %c0_228 = arith.constant 0 : index
    %c2_229 = arith.constant 2 : index
    %c0_230 = arith.constant 0 : index
    %209 = vector.load %arg7[%c0_228, %c2_229, %c0_230] : memref<2x7x128xbf16, #tpu.memory_space<vmem>>, vector<1x5x128xbf16>
    %210 = vector.shape_cast %209 : vector<1x5x128xbf16> to vector<5x128xbf16>
    %c3_231 = arith.constant 3 : index
    %c0_232 = arith.constant 0 : index
    %c0_233 = arith.constant 0 : index
    %211 = vector.load %arg4[%c3_231, %c0_232, %c0_233] : memref<5x128x256xbf16, #tpu.memory_space<vmem>>, vector<1x128x256xbf16>
    %212 = vector.shape_cast %211 : vector<1x128x256xbf16> to vector<128x256xbf16>
    %cst_234 = arith.constant dense<0.000000e+00> : vector<5x256xf32>
    %213 = tpu.matmul %210, %212, %cst_234 {dimension_numbers = #tpu.dot_dimension_numbers<[1], [0], [0], [1], [0, 0, 1, 1], [], []>} : vector<5x128xbf16>, vector<128x256xbf16>, vector<5x256xf32> -> vector<5x256xf32>
    %214 = arith.addf %208, %213 : vector<5x256xf32>
    %c1_235 = arith.constant 1 : index
    %c2_236 = arith.constant 2 : index
    %c0_237 = arith.constant 0 : index
    %215 = vector.load %arg7[%c1_235, %c2_236, %c0_237] : memref<2x7x128xbf16, #tpu.memory_space<vmem>>, vector<1x5x128xbf16>
    %216 = vector.shape_cast %215 : vector<1x5x128xbf16> to vector<5x128xbf16>
    %c4_238 = arith.constant 4 : index
    %c0_239 = arith.constant 0 : index
    %c0_240 = arith.constant 0 : index
    %217 = vector.load %arg4[%c4_238, %c0_239, %c0_240] : memref<5x128x256xbf16, #tpu.memory_space<vmem>>, vector<1x128x256xbf16>
    %218 = vector.shape_cast %217 : vector<1x128x256xbf16> to vector<128x256xbf16>
    %cst_241 = arith.constant dense<0.000000e+00> : vector<5x256xf32>
    %219 = tpu.matmul %216, %218, %cst_241 {dimension_numbers = #tpu.dot_dimension_numbers<[1], [0], [0], [1], [0, 0, 1, 1], [], []>} : vector<5x128xbf16>, vector<128x256xbf16>, vector<5x256xf32> -> vector<5x256xf32>
    %220 = arith.addf %214, %219 : vector<5x256xf32>
    %221 = vector.extract_strided_slice %220 {offsets = [0, 0], sizes = [5, 128], strides = [1, 1]} : vector<5x256xf32> to vector<5x128xf32>
    %222 = vector.extract_strided_slice %220 {offsets = [0, 128], sizes = [5, 128], strides = [1, 1]} : vector<5x256xf32> to vector<5x128xf32>
    %223 = arith.maximumf %221, %222 : vector<5x128xf32>
    %224 = arith.maximumf %189, %223 : vector<5x128xf32>
    %c0_242 = arith.constant 0 : index
    %c0_243 = arith.constant 0 : index
    %225 = vector.load %arg5[%c0_242, %c0_243] : memref<1x128xf32, #tpu.memory_space<vmem>>, vector<1x128xf32>
    %226 = vector.broadcast %225 : vector<1x128xf32> to vector<5x128xf32>
    %227 = arith.addf %224, %226 : vector<5x128xf32>
    %cst_244 = arith.constant 0.000000e+00 : f32
    %228 = vector.broadcast %cst_244 : f32 to vector<5x128xf32>
    %229 = arith.maximumf %227, %228 : vector<5x128xf32>
    %230 = arith.truncf %229 : vector<5x128xf32> to vector<5x128xbf16>
    %c0_245 = arith.constant 0 : index
    %c0_246 = arith.constant 0 : index
    %c0_247 = arith.constant 0 : index
    %231 = vector.load %arg6[%c0_245, %c0_246, %c0_247] : memref<1x5x128xbf16, #tpu.memory_space<vmem>>, vector<1x5x128xbf16>
    %232 = vector.shape_cast %231 : vector<1x5x128xbf16> to vector<5x128xbf16>
    %233 = vector.shape_cast %230 : vector<5x128xbf16> to vector<1x5x128xbf16>
    tpu.vector_store %arg6[%c0_245, %c0_246, %c0_247], %233 {strides = array<i32>} : memref<1x5x128xbf16, #tpu.memory_space<vmem>>, vector<1x5x128xbf16>,
    return
  }
  func.func @transform_0(%arg0: i32) -> (i32, i32, i32, i32) {
    %c0_i32 = arith.constant 0 : i32
    %c0_i32_0 = arith.constant 0 : i32
    %c0_i32_1 = arith.constant 0 : i32
    %c0_i32_2 = arith.constant 0 : i32
    return %arg0, %c0_i32, %c0_i32_0, %c0_i32_1 : i32, i32, i32, i32
  }
  func.func @transform_1(%arg0: i32) -> (i32, i32, i32) {
    %c0_i32 = arith.constant 0 : i32
    %c0_i32_0 = arith.constant 0 : i32
    %c0_i32_1 = arith.constant 0 : i32
    %c0_i32_2 = arith.constant 0 : i32
    return %c0_i32, %c0_i32_0, %c0_i32_1 : i32, i32, i32
  }
  func.func @transform_2(%arg0: i32) -> (i32, i32) {
    %c0_i32 = arith.constant 0 : i32
    %c0_i32_0 = arith.constant 0 : i32
    %c0_i32_1 = arith.constant 0 : i32
    return %c0_i32, %c0_i32_0 : i32, i32
  }
  func.func @transform_3(%arg0: i32) -> (i32, i32, i32) {
    %c0_i32 = arith.constant 0 : i32
    %c0_i32_0 = arith.constant 0 : i32
    %c0_i32_1 = arith.constant 0 : i32
    %c0_i32_2 = arith.constant 0 : i32
    return %c0_i32, %c0_i32_0, %c0_i32_1 : i32, i32, i32
  }
  func.func @transform_4(%arg0: i32) -> (i32, i32) {
    %c0_i32 = arith.constant 0 : i32
    %c0_i32_0 = arith.constant 0 : i32
    %c0_i32_1 = arith.constant 0 : i32
    return %c0_i32, %c0_i32_0 : i32, i32
  }
  func.func @transform_5(%arg0: i32) -> (i32, i32, i32) {
    %c0_i32 = arith.constant 0 : i32
    %c0_i32_0 = arith.constant 0 : i32
    %c0_i32_1 = arith.constant 0 : i32
    return %arg0, %c0_i32, %c0_i32_0 : i32, i32, i32
  }
}

module attributes {stable_mosaic.version = 11 : i64} {
  func.func @fused_mlp_kernel(%arg0: i32, %arg1: memref<8x640xbf16, #tpu.memory_space<vmem>>, %arg2: memref<640x128xbf16, #tpu.memory_space<vmem>>, %arg3: memref<1x128xf32, #tpu.memory_space<vmem>>, %arg4: memref<128x128xbf16, #tpu.memory_space<vmem>>, %arg5: memref<1x128xf32, #tpu.memory_space<vmem>>, %arg6: memref<128x128xbf16, #tpu.memory_space<vmem>>, %arg7: memref<1x128xf32, #tpu.memory_space<vmem>>, %arg8: memref<8x128xf32, #tpu.memory_space<vmem>>) attributes {dimension_semantics = [#tpu.dimension_semantics<parallel>], iteration_bounds = array<i64: 1>, scalar_prefetch = 0 : i64, scratch_operands = 0 : i64, tpu.core_type = #tpu.core_type<tc>, window_params = [{transform_indices = @transform_0, window_bounds = array<i64: 8, 640>}, {pipeline_mode = #tpu.pipeline_mode<synchronous>, transform_indices = @transform_1, window_bounds = array<i64: 640, 128>}, {pipeline_mode = #tpu.pipeline_mode<synchronous>, transform_indices = @transform_2, window_bounds = array<i64: 1, 128>}, {pipeline_mode = #tpu.pipeline_mode<synchronous>, transform_indices = @transform_3, window_bounds = array<i64: 128, 128>}, {pipeline_mode = #tpu.pipeline_mode<synchronous>, transform_indices = @transform_4, window_bounds = array<i64: 1, 128>}, {pipeline_mode = #tpu.pipeline_mode<synchronous>, transform_indices = @transform_5, window_bounds = array<i64: 128, 128>}, {pipeline_mode = #tpu.pipeline_mode<synchronous>, transform_indices = @transform_6, window_bounds = array<i64: 1, 128>}, {transform_indices = @transform_7, window_bounds = array<i64: 8, 128>}]} {
    %c0 = arith.constant 0 : index
    %c0_0 = arith.constant 0 : index
    %0 = vector.load %arg1[%c0, %c0_0] : memref<8x640xbf16, #tpu.memory_space<vmem>>, vector<8x640xbf16>
    %c0_1 = arith.constant 0 : index
    %c0_2 = arith.constant 0 : index
    %1 = vector.load %arg2[%c0_1, %c0_2] : memref<640x128xbf16, #tpu.memory_space<vmem>>, vector<640x128xbf16>
    %cst = arith.constant dense<0.000000e+00> : vector<8x128xf32>
    %2 = tpu.matmul %0, %1, %cst {dimension_numbers = #tpu.dot_dimension_numbers<[1], [0], [0], [1], [0, 0, 1, 1], [], []>} : vector<8x640xbf16>, vector<640x128xbf16>, vector<8x128xf32> -> vector<8x128xf32>
    %c0_3 = arith.constant 0 : index
    %c0_4 = arith.constant 0 : index
    %3 = vector.load %arg3[%c0_3, %c0_4] : memref<1x128xf32, #tpu.memory_space<vmem>>, vector<1x128xf32>
    %4 = vector.broadcast %3 : vector<1x128xf32> to vector<8x128xf32>
    %5 = arith.addf %2, %4 : vector<8x128xf32>
    %cst_5 = arith.constant 0.000000e+00 : f32
    %6 = vector.broadcast %cst_5 : f32 to vector<8x128xf32>
    %7 = arith.maximumf %5, %6 : vector<8x128xf32>
    %8 = arith.truncf %7 : vector<8x128xf32> to vector<8x128xbf16>
    %c0_6 = arith.constant 0 : index
    %c0_7 = arith.constant 0 : index
    %9 = vector.load %arg4[%c0_6, %c0_7] : memref<128x128xbf16, #tpu.memory_space<vmem>>, vector<128x128xbf16>
    %cst_8 = arith.constant dense<0.000000e+00> : vector<8x128xf32>
    %10 = tpu.matmul %8, %9, %cst_8 {dimension_numbers = #tpu.dot_dimension_numbers<[1], [0], [0], [1], [0, 0, 1, 1], [], []>} : vector<8x128xbf16>, vector<128x128xbf16>, vector<8x128xf32> -> vector<8x128xf32>
    %c0_9 = arith.constant 0 : index
    %c0_10 = arith.constant 0 : index
    %11 = vector.load %arg5[%c0_9, %c0_10] : memref<1x128xf32, #tpu.memory_space<vmem>>, vector<1x128xf32>
    %12 = vector.broadcast %11 : vector<1x128xf32> to vector<8x128xf32>
    %13 = arith.addf %10, %12 : vector<8x128xf32>
    %cst_11 = arith.constant 0.000000e+00 : f32
    %14 = vector.broadcast %cst_11 : f32 to vector<8x128xf32>
    %15 = arith.maximumf %13, %14 : vector<8x128xf32>
    %16 = arith.truncf %15 : vector<8x128xf32> to vector<8x128xbf16>
    %c0_12 = arith.constant 0 : index
    %c0_13 = arith.constant 0 : index
    %17 = vector.load %arg6[%c0_12, %c0_13] : memref<128x128xbf16, #tpu.memory_space<vmem>>, vector<128x128xbf16>
    %cst_14 = arith.constant dense<0.000000e+00> : vector<8x128xf32>
    %18 = tpu.matmul %16, %17, %cst_14 {dimension_numbers = #tpu.dot_dimension_numbers<[1], [0], [0], [1], [0, 0, 1, 1], [], []>} : vector<8x128xbf16>, vector<128x128xbf16>, vector<8x128xf32> -> vector<8x128xf32>
    %c0_15 = arith.constant 0 : index
    %c0_16 = arith.constant 0 : index
    %19 = vector.load %arg7[%c0_15, %c0_16] : memref<1x128xf32, #tpu.memory_space<vmem>>, vector<1x128xf32>
    %20 = vector.broadcast %19 : vector<1x128xf32> to vector<8x128xf32>
    %21 = arith.addf %18, %20 : vector<8x128xf32>
    %c0_17 = arith.constant 0 : index
    %c0_18 = arith.constant 0 : index
    %22 = vector.load %arg8[%c0_17, %c0_18] : memref<8x128xf32, #tpu.memory_space<vmem>>, vector<8x128xf32>
    tpu.vector_store %arg8[%c0_17, %c0_18], %21 {strides = array<i32>} : memref<8x128xf32, #tpu.memory_space<vmem>>, vector<8x128xf32>,
    return
  }
  func.func @transform_0(%arg0: i32) -> (i32, i32) {
    %c0_i32 = arith.constant 0 : i32
    %c0_i32_0 = arith.constant 0 : i32
    return %arg0, %c0_i32 : i32, i32
  }
  func.func @transform_1(%arg0: i32) -> (i32, i32) {
    %c0_i32 = arith.constant 0 : i32
    %c0_i32_0 = arith.constant 0 : i32
    %c0_i32_1 = arith.constant 0 : i32
    return %c0_i32, %c0_i32_0 : i32, i32
  }
  func.func @transform_2(%arg0: i32) -> (i32, i32) {
    %c0_i32 = arith.constant 0 : i32
    %c0_i32_0 = arith.constant 0 : i32
    %c0_i32_1 = arith.constant 0 : i32
    return %c0_i32, %c0_i32_0 : i32, i32
  }
  func.func @transform_3(%arg0: i32) -> (i32, i32) {
    %c0_i32 = arith.constant 0 : i32
    %c0_i32_0 = arith.constant 0 : i32
    %c0_i32_1 = arith.constant 0 : i32
    return %c0_i32, %c0_i32_0 : i32, i32
  }
  func.func @transform_4(%arg0: i32) -> (i32, i32) {
    %c0_i32 = arith.constant 0 : i32
    %c0_i32_0 = arith.constant 0 : i32
    %c0_i32_1 = arith.constant 0 : i32
    return %c0_i32, %c0_i32_0 : i32, i32
  }
  func.func @transform_5(%arg0: i32) -> (i32, i32) {
    %c0_i32 = arith.constant 0 : i32
    %c0_i32_0 = arith.constant 0 : i32
    %c0_i32_1 = arith.constant 0 : i32
    return %c0_i32, %c0_i32_0 : i32, i32
  }
  func.func @transform_6(%arg0: i32) -> (i32, i32) {
    %c0_i32 = arith.constant 0 : i32
    %c0_i32_0 = arith.constant 0 : i32
    %c0_i32_1 = arith.constant 0 : i32
    return %c0_i32, %c0_i32_0 : i32, i32
  }
  func.func @transform_7(%arg0: i32) -> (i32, i32) {
    %c0_i32 = arith.constant 0 : i32
    %c0_i32_0 = arith.constant 0 : i32
    return %arg0, %c0_i32 : i32, i32
  }
}

</mosaic_0001>

<llo_original>
// kernel: net_forward.3
$region0: #{net_forward.3}
  #allocation0 [shape = 'u32[]', space=smem, size = 0x4, offset = 0x4, fixed_abs, tag = 'smem constant byte address 0x4 - core index']
  #allocation1 [shape = 'u32[144,128]{1,0:T(1,128)}', space=vmem, size = 0x12000, scoped, tag = 'internal scratch']
  %s0 = inlined_call_operand.vmem [shape: bf16[8,640], index: 0, kind: input, shape index: {}]
  %s1 = inlined_call_operand.vmem [shape: bf16[640,128], index: 1, kind: input, shape index: {}]
  %s2 = inlined_call_operand.vmem [shape: f32[1,128], index: 2, kind: input, shape index: {}]
  %s3 = inlined_call_operand.vmem [shape: bf16[128,128], index: 3, kind: input, shape index: {}]
  %s4 = inlined_call_operand.vmem [shape: f32[1,128], index: 4, kind: input, shape index: {}]
  %s5 = inlined_call_operand.vmem [shape: bf16[128,128], index: 5, kind: input, shape index: {}]
  %s6 = inlined_call_operand.vmem [shape: f32[1,128], index: 6, kind: input, shape index: {}]
  %s7 = inlined_call_operand.vmem [shape: f32[8,128], index: 7, kind: output, shape index: {}]
  %s8 = sld [smem:[#allocation0]]
  $region38: #{net_forward.3} parent=0
    _
  %s10 = ssub.s32 1, %s8
  %s11 = scalar_select 0, %s10, %s8
  // Predicated region
  $region2: #{net_forward.3} parent=0 // pred_check
    _
  $region3: #{net_forward.3} parent=0 // pred_check_branch
    %13 = sbr.rel (0) target = $region5
  $region4: #{net_forward.3} parent=0 // pred_region
    _
  $region5: #{net_forward.3} parent=0 // pred_fallthru
    _
  // Predicated region
  $region6: #{net_forward.3} parent=0 // pred_check
    _
  $region7: #{net_forward.3} parent=0 // pred_check_branch
    %15 = sbr.rel (0) target = $region9
  $region8: #{net_forward.3} parent=0 // pred_region
    _
  $region9: #{net_forward.3} parent=0 // pred_fallthru
    _
  // Predicated region
  $region10: #{net_forward.3} parent=0 // pred_check
    _
  $region11: #{net_forward.3} parent=0 // pred_check_branch
    %17 = sbr.rel (0) target = $region13
  $region12: #{net_forward.3} parent=0 // pred_region
    _
  $region13: #{net_forward.3} parent=0 // pred_fallthru
    _
  // Predicated region
  $region14: #{net_forward.3} parent=0 // pred_check
    _
  $region15: #{net_forward.3} parent=0 // pred_check_branch
    %19 = sbr.rel (0) target = $region17
  $region16: #{net_forward.3} parent=0 // pred_region
    _
  $region17: #{net_forward.3} parent=0 // pred_fallthru
    _
  // Predicated region
  $region18: #{net_forward.3} parent=0 // pred_check
    _
  $region19: #{net_forward.3} parent=0 // pred_check_branch
    %21 = sbr.rel (0) target = $region21
  $region20: #{net_forward.3} parent=0 // pred_region
    _
  $region21: #{net_forward.3} parent=0 // pred_fallthru
    _
  // Predicated region
  $region22: #{net_forward.3} parent=0 // pred_check
    _
  $region23: #{net_forward.3} parent=0 // pred_check_branch
    %23 = sbr.rel (0) target = $region25
  $region24: #{net_forward.3} parent=0 // pred_region
    _
  $region25: #{net_forward.3} parent=0 // pred_fallthru
    _
  // Predicated region
  $region26: #{net_forward.3} parent=0 // pred_check
    _
  $region27: #{net_forward.3} parent=0 // pred_check_branch
    %25 = sbr.rel (0) target = $region29
  $region28: #{net_forward.3} parent=0 // pred_region
    _
  $region29: #{net_forward.3} parent=0 // pred_fallthru
    _
  %v27 = vld [vmem:[%s0] sm:$0xff]
  %v28 = vld [vmem:[%s0 + $0x8] sm:$0xff]
  %v29 = vld [vmem:[%s0 + $0x10] sm:$0xf]
  %v30 = vld [vmem:[%s1] sm:$0xf]
  %v31 = vld [vmem:[%s1 + $0x4] sm:$0xf]
  %v32 = vld [vmem:[%s1 + $0x8] sm:$0xf]
  %v33 = vld [vmem:[%s1 + $0xc] sm:$0xf]
  %v34 = vld [vmem:[%s1 + $0x10] sm:$0xf]
  %v35 = vld [vmem:[%s1 + $0x14] sm:$0xf]
  %v36 = vld [vmem:[%s1 + $0x18] sm:$0xf]
  %v37 = vld [vmem:[%s1 + $0x1c] sm:$0xf]
  %v38 = vld [vmem:[%s1 + $0x20] sm:$0xf]
  %v39 = vld [vmem:[%s1 + $0x24] sm:$0xf]
  %v40 = vld [vmem:[%s1 + $0x28] sm:$0xf]
  %v41 = vld [vmem:[%s1 + $0x2c] sm:$0xf]
  %v42 = vld [vmem:[%s1 + $0x30] sm:$0xf]
  %v43 = vld [vmem:[%s1 + $0x34] sm:$0xf]
  %v44 = vld [vmem:[%s1 + $0x38] sm:$0xf]
  %v45 = vld [vmem:[%s1 + $0x3c] sm:$0xf]
  %v46 = vld [vmem:[%s1 + $0x40] sm:$0xf]
  %v47 = vld [vmem:[%s1 + $0x44] sm:$0xf]
  %v48 = vld [vmem:[%s1 + $0x48] sm:$0xf]
  %v49 = vld [vmem:[%s1 + $0x4c] sm:$0xf]
  %v50 = vld [vmem:[%s1 + $0x50] sm:$0xf]
  %v51 = vld [vmem:[%s1 + $0x54] sm:$0xf]
  %v52 = vld [vmem:[%s1 + $0x58] sm:$0xf]
  %v53 = vld [vmem:[%s1 + $0x5c] sm:$0xf]
  %v54 = vld [vmem:[%s1 + $0x60] sm:$0xf]
  %v55 = vld [vmem:[%s1 + $0x64] sm:$0xf]
  %v56 = vld [vmem:[%s1 + $0x68] sm:$0xf]
  %v57 = vld [vmem:[%s1 + $0x6c] sm:$0xf]
  %v58 = vld [vmem:[%s1 + $0x70] sm:$0xf]
  %v59 = vld [vmem:[%s1 + $0x74] sm:$0xf]
  %v60 = vld [vmem:[%s1 + $0x78] sm:$0xf]
  %v61 = vld [vmem:[%s1 + $0x7c] sm:$0xf]
  %v62 = vld [vmem:[%s1 + $0x80] sm:$0xf]
  %v63 = vld [vmem:[%s1 + $0x84] sm:$0xf]
  %v64 = vld [vmem:[%s1 + $0x88] sm:$0xf]
  %v65 = vld [vmem:[%s1 + $0x8c] sm:$0xf]
  %v66 = vld [vmem:[%s1 + $0x90] sm:$0xf]
  %v67 = vld [vmem:[%s1 + $0x94] sm:$0xf]
  %v68 = vld [vmem:[%s1 + $0x98] sm:$0xf]
  %v69 = vld [vmem:[%s1 + $0x9c] sm:$0xf]
  %v70 = vld [vmem:[%s1 + $0xa0] sm:$0xf]
  %v71 = vld [vmem:[%s1 + $0xa4] sm:$0xf]
  %v72 = vld [vmem:[%s1 + $0xa8] sm:$0xf]
  %v73 = vld [vmem:[%s1 + $0xac] sm:$0xf]
  %v74 = vld [vmem:[%s1 + $0xb0] sm:$0xf]
  %v75 = vld [vmem:[%s1 + $0xb4] sm:$0xf]
  %v76 = vld [vmem:[%s1 + $0xb8] sm:$0xf]
  %v77 = vld [vmem:[%s1 + $0xbc] sm:$0xf]
  %v78 = vld [vmem:[%s1 + $0xc0] sm:$0xf]
  %v79 = vld [vmem:[%s1 + $0xc4] sm:$0xf]
  %v80 = vld [vmem:[%s1 + $0xc8] sm:$0xf]
  %v81 = vld [vmem:[%s1 + $0xcc] sm:$0xf]
  %v82 = vld [vmem:[%s1 + $0xd0] sm:$0xf]
  %v83 = vld [vmem:[%s1 + $0xd4] sm:$0xf]
  %v84 = vld [vmem:[%s1 + $0xd8] sm:$0xf]
  %v85 = vld [vmem:[%s1 + $0xdc] sm:$0xf]
  %v86 = vld [vmem:[%s1 + $0xe0] sm:$0xf]
  %v87 = vld [vmem:[%s1 + $0xe4] sm:$0xf]
  %v88 = vld [vmem:[%s1 + $0xe8] sm:$0xf]
  %v89 = vld [vmem:[%s1 + $0xec] sm:$0xf]
  %v90 = vld [vmem:[%s1 + $0xf0] sm:$0xf]
  %v91 = vld [vmem:[%s1 + $0xf4] sm:$0xf]
  %v92 = vld [vmem:[%s1 + $0xf8] sm:$0xf]
  %v93 = vld [vmem:[%s1 + $0xfc] sm:$0xf]
  %v94 = vld [vmem:[%s1 + $0x100] sm:$0xf]
  %v95 = vld [vmem:[%s1 + $0x104] sm:$0xf]
  %v96 = vld [vmem:[%s1 + $0x108] sm:$0xf]
  %v97 = vld [vmem:[%s1 + $0x10c] sm:$0xf]
  %v98 = vld [vmem:[%s1 + $0x110] sm:$0xf]
  %v99 = vld [vmem:[%s1 + $0x114] sm:$0xf]
  %v100 = vld [vmem:[%s1 + $0x118] sm:$0xf]
  %v101 = vld [vmem:[%s1 + $0x11c] sm:$0xf]
  %v102 = vld [vmem:[%s1 + $0x120] sm:$0xf]
  %v103 = vld [vmem:[%s1 + $0x124] sm:$0xf]
  %v104 = vld [vmem:[%s1 + $0x128] sm:$0xf]
  %v105 = vld [vmem:[%s1 + $0x12c] sm:$0xf]
  %v106 = vld [vmem:[%s1 + $0x130] sm:$0xf]
  %v107 = vld [vmem:[%s1 + $0x134] sm:$0xf]
  %v108 = vld [vmem:[%s1 + $0x138] sm:$0xf]
  %v109 = vld [vmem:[%s1 + $0x13c] sm:$0xf]
  %v110 = vld [vmem:[%s2] sm:$0x1]
  %v112 = vlaneseq
  %v113 = vshrl.u32 %v112, 7
  %v114 = vsub.s32 0, %v113
  %v115 = vrot.slane %v110, %v114
  %v120 = vunpack.c.l.b16 %v27
  %v121 = vunpack.c.h.b16 %v27
  %v122 = vunpack.c.l.b16 %v28
  %v123 = vunpack.c.h.b16 %v28
  %v124 = vunpack.c.l.b16 %v29
  %v125 = vpack.c.b16 %v120, %v120
  %v126 = vpack.c.b16 %v121, %v121
  %v127 = vpack.c.b16 %v122, %v122
  %v128 = vpack.c.b16 %v123, %v123
  %v129 = vpack.c.b16 %v124, %v124
  %v215 = vunpack.c.l.b16 %v30
  %v216 = vunpack.c.l.b16 %v31
  %v217 = vunpack.c.l.b16 %v32
  %v218 = vunpack.c.l.b16 %v33
  %v219 = vunpack.c.l.b16 %v34
  %v220 = vunpack.c.l.b16 %v35
  %v221 = vunpack.c.l.b16 %v36
  %v222 = vunpack.c.l.b16 %v37
  %v223 = vunpack.c.l.b16 %v38
  %v224 = vunpack.c.l.b16 %v39
  %v225 = vunpack.c.l.b16 %v40
  %v226 = vunpack.c.l.b16 %v41
  %v227 = vunpack.c.l.b16 %v42
  %v228 = vunpack.c.l.b16 %v43
  %v229 = vunpack.c.l.b16 %v44
  %v230 = vunpack.c.l.b16 %v45
  %v231 = vunpack.c.l.b16 %v46
  %v232 = vunpack.c.l.b16 %v47
  %v233 = vunpack.c.l.b16 %v48
  %v234 = vunpack.c.l.b16 %v49
  %v235 = vunpack.c.l.b16 %v50
  %v236 = vunpack.c.l.b16 %v51
  %v237 = vunpack.c.l.b16 %v52
  %v238 = vunpack.c.l.b16 %v53
  %v239 = vunpack.c.l.b16 %v54
  %v240 = vunpack.c.l.b16 %v55
  %v241 = vunpack.c.l.b16 %v56
  %v242 = vunpack.c.l.b16 %v57
  %v243 = vunpack.c.l.b16 %v58
  %v244 = vunpack.c.l.b16 %v59
  %v245 = vunpack.c.l.b16 %v60
  %v246 = vunpack.c.l.b16 %v61
  %v247 = vunpack.c.l.b16 %v62
  %v248 = vunpack.c.l.b16 %v63
  %v249 = vunpack.c.l.b16 %v64
  %v250 = vunpack.c.l.b16 %v65
  %v251 = vunpack.c.l.b16 %v66
  %v252 = vunpack.c.l.b16 %v67
  %v253 = vunpack.c.l.b16 %v68
  %v254 = vunpack.c.l.b16 %v69
  %v255 = vunpack.c.l.b16 %v70
  %v256 = vunpack.c.l.b16 %v71
  %v257 = vunpack.c.l.b16 %v72
  %v258 = vunpack.c.l.b16 %v73
  %v259 = vunpack.c.l.b16 %v74
  %v260 = vunpack.c.l.b16 %v75
  %v261 = vunpack.c.l.b16 %v76
  %v262 = vunpack.c.l.b16 %v77
  %v263 = vunpack.c.l.b16 %v78
  %v264 = vunpack.c.l.b16 %v79
  %v265 = vunpack.c.l.b16 %v80
  %v266 = vunpack.c.l.b16 %v81
  %v267 = vunpack.c.l.b16 %v82
  %v268 = vunpack.c.l.b16 %v83
  %v269 = vunpack.c.l.b16 %v84
  %v270 = vunpack.c.l.b16 %v85
  %v271 = vunpack.c.l.b16 %v86
  %v272 = vunpack.c.l.b16 %v87
  %v273 = vunpack.c.l.b16 %v88
  %v274 = vunpack.c.l.b16 %v89
  %v275 = vunpack.c.l.b16 %v90
  %v276 = vunpack.c.l.b16 %v91
  %v277 = vunpack.c.l.b16 %v92
  %v278 = vunpack.c.l.b16 %v93
  %v279 = vunpack.c.l.b16 %v94
  %v280 = vunpack.c.l.b16 %v95
  %v281 = vunpack.c.l.b16 %v96
  %v282 = vunpack.c.l.b16 %v97
  %v283 = vunpack.c.l.b16 %v98
  %v284 = vunpack.c.l.b16 %v99
  %v285 = vunpack.c.l.b16 %v100
  %v286 = vunpack.c.l.b16 %v101
  %v287 = vunpack.c.l.b16 %v102
  %v288 = vunpack.c.l.b16 %v103
  %v289 = vunpack.c.l.b16 %v104
  %v290 = vunpack.c.l.b16 %v105
  %v291 = vunpack.c.l.b16 %v106
  %v292 = vunpack.c.l.b16 %v107
  %v293 = vunpack.c.l.b16 %v108
  %v294 = vunpack.c.l.b16 %v109
  %v295 = vpack.c.b16 %v216, %v215
  %v296 = vpack.c.b16 %v218, %v217
  %v297 = vpack.c.b16 %v220, %v219
  %v298 = vpack.c.b16 %v222, %v221
  %v299 = vpack.c.b16 %v224, %v223
  %v300 = vpack.c.b16 %v226, %v225
  %v301 = vpack.c.b16 %v228, %v227
  %v302 = vpack.c.b16 %v230, %v229
  %v303 = vpack.c.b16 %v232, %v231
  %v304 = vpack.c.b16 %v234, %v233
  %v305 = vpack.c.b16 %v236, %v235
  %v306 = vpack.c.b16 %v238, %v237
  %v307 = vpack.c.b16 %v240, %v239
  %v308 = vpack.c.b16 %v242, %v241
  %v309 = vpack.c.b16 %v244, %v243
  %v310 = vpack.c.b16 %v246, %v245
  %v311 = vpack.c.b16 %v248, %v247
  %v312 = vpack.c.b16 %v250, %v249
  %v313 = vpack.c.b16 %v252, %v251
  %v314 = vpack.c.b16 %v254, %v253
  %v315 = vpack.c.b16 %v256, %v255
  %v316 = vpack.c.b16 %v258, %v257
  %v317 = vpack.c.b16 %v260, %v259
  %v318 = vpack.c.b16 %v262, %v261
  %v319 = vpack.c.b16 %v264, %v263
  %v320 = vpack.c.b16 %v266, %v265
  %v321 = vpack.c.b16 %v268, %v267
  %v322 = vpack.c.b16 %v270, %v269
  %v323 = vpack.c.b16 %v272, %v271
  %v324 = vpack.c.b16 %v274, %v273
  %v325 = vpack.c.b16 %v276, %v275
  %v326 = vpack.c.b16 %v278, %v277
  %v327 = vpack.c.b16 %v280, %v279
  %v328 = vpack.c.b16 %v282, %v281
  %v329 = vpack.c.b16 %v284, %v283
  %v330 = vpack.c.b16 %v286, %v285
  %v331 = vpack.c.b16 %v288, %v287
  %v332 = vpack.c.b16 %v290, %v289
  %v333 = vpack.c.b16 %v292, %v291
  %v334 = vpack.c.b16 %v294, %v293
  %375 = vmatprep.subr.bf16.mxu0 0
  %376 = vmatpush1.bf16.msra.mxu0 %v295
  %377 = vmatprep.subr.bf16.mxu0 0
  %378 = vmatpush1.bf16.msra.mxu0 %v296
  %379 = vmatprep.subr.bf16.mxu0 0
  %380 = vmatpush1.bf16.msra.mxu0 %v297
  %381 = vmatprep.subr.bf16.mxu0 0
  %382 = vmatpush1.bf16.msra.mxu0 %v298
  %383 = vmatprep.subr.bf16.mxu0 0
  %384 = vmatpush1.bf16.msra.mxu0 %v299
  %385 = vmatprep.subr.bf16.mxu0 0
  %386 = vmatpush1.bf16.msra.mxu0 %v300
  %387 = vmatprep.subr.bf16.mxu0 0
  %388 = vmatpush1.bf16.msra.mxu0 %v301
  %389 = vmatprep.subr.bf16.mxu0 0
  %390 = vmatpush1.bf16.msra.mxu0 %v302
  %391 = vmatprep.subr.bf16.mxu0 0
  %392 = vmatpush1.bf16.msra.mxu0 %v303
  %393 = vmatprep.subr.bf16.mxu0 0
  %394 = vmatpush1.bf16.msra.mxu0 %v304
  %395 = vmatprep.subr.bf16.mxu0 0
  %396 = vmatpush1.bf16.msra.mxu0 %v305
  %397 = vmatprep.subr.bf16.mxu0 0
  %398 = vmatpush1.bf16.msra.mxu0 %v306
  %399 = vmatprep.subr.bf16.mxu0 0
  %400 = vmatpush1.bf16.msra.mxu0 %v307
  %401 = vmatprep.subr.bf16.mxu0 0
  %402 = vmatpush1.bf16.msra.mxu0 %v308
  %403 = vmatprep.subr.bf16.mxu0 0
  %404 = vmatpush1.bf16.msra.mxu0 %v309
  %405 = vmatprep.subr.bf16.mxu0 0
  %406 = vmatpush1.bf16.msra.mxu0 %v310
  %407 = vmatprep.mubr.bf16.mxu0 %v126
  %408 = vmatmul.mubr.bf16.gmra.mrb[0].mxu0 %v125
  %v409 = vpop.f32.mrb[0].mxu0
  %v410 = vadd.f32 %v115, %v409
  %v411 = vpop.f32.mrb[0].mxu0
  %v412 = vpop.f32.mrb[0].mxu0
  %v413 = vpop.f32.mrb[0].mxu0
  %414 = vdwg.mxu0
  %415 = vmatprep.subr.bf16.mxu0 0
  %416 = vmatpush1.bf16.msra.mxu0 %v311
  %417 = vmatprep.subr.bf16.mxu0 0
  %418 = vmatpush1.bf16.msra.mxu0 %v312
  %419 = vmatprep.subr.bf16.mxu0 0
  %420 = vmatpush1.bf16.msra.mxu0 %v313
  %421 = vmatprep.subr.bf16.mxu0 0
  %422 = vmatpush1.bf16.msra.mxu0 %v314
  %423 = vmatprep.subr.bf16.mxu0 0
  %424 = vmatpush1.bf16.msra.mxu0 %v315
  %425 = vmatprep.subr.bf16.mxu0 0
  %426 = vmatpush1.bf16.msra.mxu0 %v316
  %427 = vmatprep.subr.bf16.mxu0 0
  %428 = vmatpush1.bf16.msra.mxu0 %v317
  %429 = vmatprep.subr.bf16.mxu0 0
  %430 = vmatpush1.bf16.msra.mxu0 %v318
  %431 = vmatprep.subr.bf16.mxu0 0
  %432 = vmatpush1.bf16.msra.mxu0 %v319
  %433 = vmatprep.subr.bf16.mxu0 0
  %434 = vmatpush1.bf16.msra.mxu0 %v320
  %435 = vmatprep.subr.bf16.mxu0 0
  %436 = vmatpush1.bf16.msra.mxu0 %v321
  %437 = vmatprep.subr.bf16.mxu0 0
  %438 = vmatpush1.bf16.msra.mxu0 %v322
  %439 = vmatprep.subr.bf16.mxu0 0
  %440 = vmatpush1.bf16.msra.mxu0 %v323
  %441 = vmatprep.subr.bf16.mxu0 0
  %442 = vmatpush1.bf16.msra.mxu0 %v324
  %443 = vmatprep.subr.bf16.mxu0 0
  %444 = vmatpush1.bf16.msra.mxu0 %v325
  %445 = vmatprep.subr.bf16.mxu0 0
  %446 = vmatpush1.bf16.msra.mxu0 %v326
  %447 = vmatprep.mubr.bf16.mxu0 %v128
  %448 = vmatmul.mubr.bf16.gmra.mrb[0].mxu0 %v127
  %v449 = vpop.f32.mrb[0].mxu0
  %v450 = vadd.f32 %v410, %v449
  %v451 = vpop.f32.mrb[0].mxu0
  %v452 = vpop.f32.mrb[0].mxu0
  %v453 = vpop.f32.mrb[0].mxu0
  %454 = vdwg.mxu0
  %455 = vmatprep.subr.bf16.mxu0 0
  %456 = vmatpush1.bf16.msra.mxu0 %v327
  %457 = vmatprep.subr.bf16.mxu0 0
  %458 = vmatpush1.bf16.msra.mxu0 %v328
  %459 = vmatprep.subr.bf16.mxu0 0
  %460 = vmatpush1.bf16.msra.mxu0 %v329
  %461 = vmatprep.subr.bf16.mxu0 0
  %462 = vmatpush1.bf16.msra.mxu0 %v330
  %463 = vmatprep.subr.bf16.mxu0 0
  %464 = vmatpush1.bf16.msra.mxu0 %v331
  %465 = vmatprep.subr.bf16.mxu0 0
  %466 = vmatpush1.bf16.msra.mxu0 %v332
  %467 = vmatprep.subr.bf16.mxu0 0
  %468 = vmatpush1.bf16.msra.mxu0 %v333
  %469 = vmatprep.subr.bf16.mxu0 0
  %470 = vmatpush1.bf16.msra.mxu0 %v334
  %471 = vmatprep.subr.bf16.mxu0 0
  %472 = vmatpush1.bf16.msra.mxu0 0
  %473 = vmatprep.subr.bf16.mxu0 0
  %474 = vmatpush1.bf16.msra.mxu0 0
  %475 = vmatprep.subr.bf16.mxu0 0
  %476 = vmatpush1.bf16.msra.mxu0 0
  %477 = vmatprep.subr.bf16.mxu0 0
  %478 = vmatpush1.bf16.msra.mxu0 0
  %479 = vmatprep.subr.bf16.mxu0 0
  %480 = vmatpush1.bf16.msra.mxu0 0
  %481 = vmatprep.subr.bf16.mxu0 0
  %482 = vmatpush1.bf16.msra.mxu0 0
  %483 = vmatprep.subr.bf16.mxu0 0
  %484 = vmatpush1.bf16.msra.mxu0 0
  %485 = vmatprep.subr.bf16.mxu0 0
  %486 = vmatpush1.bf16.msra.mxu0 0
  %487 = vmatprep.mubr.bf16.mxu0 0
  %488 = vmatmul.mubr.bf16.gmra.mrb[0].mxu0 %v129
  %v489 = vpop.f32.mrb[0].mxu0
  %v490 = vadd.f32 %v450, %v489
  %v491 = vpop.f32.mrb[0].mxu0
  %v492 = vpop.f32.mrb[0].mxu0
  %v493 = vpop.f32.mrb[0].mxu0
  %494 = vdwg.mxu0
  %v495 = vmax.f32 %v490, 0.0
  %v496 = vpack.c.bf16 %v495, %v495
  %v497 = vld [vmem:[%s3] sm:$0xf]
  %v498 = vld [vmem:[%s3 + $0x4] sm:$0xf]
  %v499 = vld [vmem:[%s3 + $0x8] sm:$0xf]
  %v500 = vld [vmem:[%s3 + $0xc] sm:$0xf]
  %v501 = vld [vmem:[%s3 + $0x10] sm:$0xf]
  %v502 = vld [vmem:[%s3 + $0x14] sm:$0xf]
  %v503 = vld [vmem:[%s3 + $0x18] sm:$0xf]
  %v504 = vld [vmem:[%s3 + $0x1c] sm:$0xf]
  %v505 = vld [vmem:[%s3 + $0x20] sm:$0xf]
  %v506 = vld [vmem:[%s3 + $0x24] sm:$0xf]
  %v507 = vld [vmem:[%s3 + $0x28] sm:$0xf]
  %v508 = vld [vmem:[%s3 + $0x2c] sm:$0xf]
  %v509 = vld [vmem:[%s3 + $0x30] sm:$0xf]
  %v510 = vld [vmem:[%s3 + $0x34] sm:$0xf]
  %v511 = vld [vmem:[%s3 + $0x38] sm:$0xf]
  %v512 = vld [vmem:[%s3 + $0x3c] sm:$0xf]
  %v513 = vld [vmem:[%s4] sm:$0x1]
  %v515 = vlaneseq
  %v516 = vshrl.u32 %v515, 7
  %v517 = vsub.s32 0, %v516
  %v518 = vrot.slane %v513, %v517
  %v536 = vunpack.c.l.b16 %v497
  %v537 = vunpack.c.l.b16 %v498
  %v538 = vunpack.c.l.b16 %v499
  %v539 = vunpack.c.l.b16 %v500
  %v540 = vunpack.c.l.b16 %v501
  %v541 = vunpack.c.l.b16 %v502
  %v542 = vunpack.c.l.b16 %v503
  %v543 = vunpack.c.l.b16 %v504
  %v544 = vunpack.c.l.b16 %v505
  %v545 = vunpack.c.l.b16 %v506
  %v546 = vunpack.c.l.b16 %v507
  %v547 = vunpack.c.l.b16 %v508
  %v548 = vunpack.c.l.b16 %v509
  %v549 = vunpack.c.l.b16 %v510
  %v550 = vunpack.c.l.b16 %v511
  %v551 = vunpack.c.l.b16 %v512
  %v552 = vpack.c.b16 %v537, %v536
  %v553 = vpack.c.b16 %v539, %v538
  %v554 = vpack.c.b16 %v541, %v540
  %v555 = vpack.c.b16 %v543, %v542
  %v556 = vpack.c.b16 %v545, %v544
  %v557 = vpack.c.b16 %v547, %v546
  %v558 = vpack.c.b16 %v549, %v548
  %v559 = vpack.c.b16 %v551, %v550
  %568 = vmatprep.subr.bf16.mxu0 0
  %569 = vmatpush1.bf16.msra.mxu0 %v552
  %570 = vmatprep.subr.bf16.mxu0 0
  %571 = vmatpush1.bf16.msra.mxu0 %v553
  %572 = vmatprep.subr.bf16.mxu0 0
  %573 = vmatpush1.bf16.msra.mxu0 %v554
  %574 = vmatprep.subr.bf16.mxu0 0
  %575 = vmatpush1.bf16.msra.mxu0 %v555
  %576 = vmatprep.subr.bf16.mxu0 0
  %577 = vmatpush1.bf16.msra.mxu0 %v556
  %578 = vmatprep.subr.bf16.mxu0 0
  %579 = vmatpush1.bf16.msra.mxu0 %v557
  %580 = vmatprep.subr.bf16.mxu0 0
  %581 = vmatpush1.bf16.msra.mxu0 %v558
  %582 = vmatprep.subr.bf16.mxu0 0
  %583 = vmatpush1.bf16.msra.mxu0 %v559
  %584 = vmatprep.subr.bf16.mxu0 0
  %585 = vmatpush1.bf16.msra.mxu0 0
  %586 = vmatprep.subr.bf16.mxu0 0
  %587 = vmatpush1.bf16.msra.mxu0 0
  %588 = vmatprep.subr.bf16.mxu0 0
  %589 = vmatpush1.bf16.msra.mxu0 0
  %590 = vmatprep.subr.bf16.mxu0 0
  %591 = vmatpush1.bf16.msra.mxu0 0
  %592 = vmatprep.subr.bf16.mxu0 0
  %593 = vmatpush1.bf16.msra.mxu0 0
  %594 = vmatprep.subr.bf16.mxu0 0
  %595 = vmatpush1.bf16.msra.mxu0 0
  %596 = vmatprep.subr.bf16.mxu0 0
  %597 = vmatpush1.bf16.msra.mxu0 0
  %598 = vmatprep.subr.bf16.mxu0 0
  %599 = vmatpush1.bf16.msra.mxu0 0
  %600 = vmatprep.mubr.bf16.mxu0 0
  %601 = vmatmul.mubr.bf16.gmra.mrb[0].mxu0 %v496
  %v602 = vpop.f32.mrb[0].mxu0
  %v603 = vadd.f32 %v518, %v602
  %v604 = vpop.f32.mrb[0].mxu0
  %v605 = vpop.f32.mrb[0].mxu0
  %v606 = vpop.f32.mrb[0].mxu0
  %607 = vdwg.mxu0
  %v608 = vmax.f32 %v603, 0.0
  %v609 = vpack.c.bf16 %v608, %v608
  %v610 = vld [vmem:[%s5] sm:$0xf]
  %v611 = vld [vmem:[%s5 + $0x4] sm:$0xf]
  %v612 = vld [vmem:[%s5 + $0x8] sm:$0xf]
  %v613 = vld [vmem:[%s5 + $0xc] sm:$0xf]
  %v614 = vld [vmem:[%s5 + $0x10] sm:$0xf]
  %v615 = vld [vmem:[%s5 + $0x14] sm:$0xf]
  %v616 = vld [vmem:[%s5 + $0x18] sm:$0xf]
  %v617 = vld [vmem:[%s5 + $0x1c] sm:$0xf]
  %v618 = vld [vmem:[%s5 + $0x20] sm:$0xf]
  %v619 = vld [vmem:[%s5 + $0x24] sm:$0xf]
  %v620 = vld [vmem:[%s5 + $0x28] sm:$0xf]
  %v621 = vld [vmem:[%s5 + $0x2c] sm:$0xf]
  %v622 = vld [vmem:[%s5 + $0x30] sm:$0xf]
  %v623 = vld [vmem:[%s5 + $0x34] sm:$0xf]
  %v624 = vld [vmem:[%s5 + $0x38] sm:$0xf]
  %v625 = vld [vmem:[%s5 + $0x3c] sm:$0xf]
  %v626 = vld [vmem:[%s6] sm:$0x1]
  %v628 = vlaneseq
  %v629 = vshrl.u32 %v628, 7
  %v630 = vsub.s32 0, %v629
  %v631 = vrot.slane %v626, %v630
  %v649 = vunpack.c.l.b16 %v610
  %v650 = vunpack.c.l.b16 %v611
  %v651 = vunpack.c.l.b16 %v612
  %v652 = vunpack.c.l.b16 %v613
  %v653 = vunpack.c.l.b16 %v614
  %v654 = vunpack.c.l.b16 %v615
  %v655 = vunpack.c.l.b16 %v616
  %v656 = vunpack.c.l.b16 %v617
  %v657 = vunpack.c.l.b16 %v618
  %v658 = vunpack.c.l.b16 %v619
  %v659 = vunpack.c.l.b16 %v620
  %v660 = vunpack.c.l.b16 %v621
  %v661 = vunpack.c.l.b16 %v622
  %v662 = vunpack.c.l.b16 %v623
  %v663 = vunpack.c.l.b16 %v624
  %v664 = vunpack.c.l.b16 %v625
  %v665 = vpack.c.b16 %v650, %v649
  %v666 = vpack.c.b16 %v652, %v651
  %v667 = vpack.c.b16 %v654, %v653
  %v668 = vpack.c.b16 %v656, %v655
  %v669 = vpack.c.b16 %v658, %v657
  %v670 = vpack.c.b16 %v660, %v659
  %v671 = vpack.c.b16 %v662, %v661
  %v672 = vpack.c.b16 %v664, %v663
  %681 = vmatprep.subr.bf16.mxu0 0
  %682 = vmatpush1.bf16.msra.mxu0 %v665
  %683 = vmatprep.subr.bf16.mxu0 0
  %684 = vmatpush1.bf16.msra.mxu0 %v666
  %685 = vmatprep.subr.bf16.mxu0 0
  %686 = vmatpush1.bf16.msra.mxu0 %v667
  %687 = vmatprep.subr.bf16.mxu0 0
  %688 = vmatpush1.bf16.msra.mxu0 %v668
  %689 = vmatprep.subr.bf16.mxu0 0
  %690 = vmatpush1.bf16.msra.mxu0 %v669
  %691 = vmatprep.subr.bf16.mxu0 0
  %692 = vmatpush1.bf16.msra.mxu0 %v670
  %693 = vmatprep.subr.bf16.mxu0 0
  %694 = vmatpush1.bf16.msra.mxu0 %v671
  %695 = vmatprep.subr.bf16.mxu0 0
  %696 = vmatpush1.bf16.msra.mxu0 %v672
  %697 = vmatprep.subr.bf16.mxu0 0
  %698 = vmatpush1.bf16.msra.mxu0 0
  %699 = vmatprep.subr.bf16.mxu0 0
  %700 = vmatpush1.bf16.msra.mxu0 0
  %701 = vmatprep.subr.bf16.mxu0 0
  %702 = vmatpush1.bf16.msra.mxu0 0
  %703 = vmatprep.subr.bf16.mxu0 0
  %704 = vmatpush1.bf16.msra.mxu0 0
  %705 = vmatprep.subr.bf16.mxu0 0
  %706 = vmatpush1.bf16.msra.mxu0 0
  %707 = vmatprep.subr.bf16.mxu0 0
  %708 = vmatpush1.bf16.msra.mxu0 0
  %709 = vmatprep.subr.bf16.mxu0 0
  %710 = vmatpush1.bf16.msra.mxu0 0
  %711 = vmatprep.subr.bf16.mxu0 0
  %712 = vmatpush1.bf16.msra.mxu0 0
  %713 = vmatprep.mubr.bf16.mxu0 0
  %714 = vmatmul.mubr.bf16.gmra.mrb[0].mxu0 %v609
  %v715 = vpop.f32.mrb[0].mxu0
  %v716 = vadd.f32 %v631, %v715
  %v717 = vpop.f32.mrb[0].mxu0
  %v718 = vpop.f32.mrb[0].mxu0
  %v719 = vpop.f32.mrb[0].mxu0
  %720 = vdwg.mxu0
  %721 = vst [vmem:[%s7] sm:$0xff] %v716
  // Predicated region
  $region30: #{net_forward.3} parent=0 // pred_check
    _
  $region31: #{net_forward.3} parent=0 // pred_check_branch
    %723 = sbr.rel (0) target = $region33
  $region32: #{net_forward.3} parent=0 // pred_region
    _
  $region33: #{net_forward.3} parent=0 // pred_fallthru
    _
  // Predicated region
  $region34: #{net_forward.3} parent=0 // pred_check
    _
  $region35: #{net_forward.3} parent=0 // pred_check_branch
    %725 = sbr.rel (0) target = $region37
  $region36: #{net_forward.3} parent=0 // pred_region
    _
  $region37: #{net_forward.3} parent=0 // pred_fallthru
    _

// kernel: net_forward.2
$region0: #{net_forward.2}
  #allocation0 [shape = 'u32[]', space=smem, size = 0x4, offset = 0x4, fixed_abs, tag = 'smem constant byte address 0x4 - core index']
  #allocation1 [shape = 'u32[144,128]{1,0:T(1,128)}', space=vmem, size = 0x12000, scoped, tag = 'internal scratch']
  #allocation2 [shape = 'bf16[2,7,128]{2,1,0:T(8,128)(2,1)}', space=vmem, size = 0x1000, scoped, tag = 'scratch operand']
  %s0 = inlined_call_operand.vmem [shape: bf16[2,4,8,96], index: 0, kind: input, shape index: {}]
  %s1 = inlined_call_operand.vmem [shape: bf16[5,96,256], index: 1, kind: input, shape index: {}]
  %s2 = inlined_call_operand.vmem [shape: f32[1,128], index: 2, kind: input, shape index: {}]
  %s3 = inlined_call_operand.vmem [shape: bf16[5,128,256], index: 3, kind: input, shape index: {}]
  %s4 = inlined_call_operand.vmem [shape: f32[1,128], index: 4, kind: input, shape index: {}]
  %s5 = inlined_call_operand.vmem [shape: bf16[2,5,128], index: 5, kind: output, shape index: {}]
  %s6 = sld [smem:[#allocation0]]
  $region53: #{net_forward.2} parent=0
    _
  %s8 = ssub.s32 1, %s6
  %s9 = scalar_select 0, %s8, %s6
  loop: start=0, step=1, limit=4
  $region2: #{net_forward.2} parent=0 // loop_pre_header
    _
  $region3: #{net_forward.2} parent=0 // loop_header
    %s11 = sphi 0, %s15
    %p12 = scmp.ge.s32.totalorder %s11, 4
    %s21 = sphi 0, %s23
    %s24 = sphi 0, %s21
    %s25 = sphi 0, %s24
    %s41 = sphi 0, %s25
    %s45 = sphi 0, %s45
    %s47 = sphi 0, %s45
    %s48 = sphi 0, %s47
    %s62 = sphi 0, %s48
    %s66 = sphi 0, %s66
    %s68 = sphi 0, %s66
    %s69 = sphi 0, %s68
    %s83 = sphi 0, %s69
    %s87 = sphi 0, %s87
    %s89 = sphi 0, %s87
    %s90 = sphi 0, %s89
    %s104 = sphi 0, %s90
    %s108 = sphi 0, %s108
    %s110 = sphi 0, %s108
    %s111 = sphi 0, %s110
    %s125 = sphi 0, %s111
    %s131 = sphi 0, %s133
    %s134 = sphi 0, %s131
    %s135 = sphi 0, %s134
    %s151 = sphi 0, %s135
  $region4: #{net_forward.2} parent=0 // loop_header_branch
    %14 = sbr.rel (%p12) target = $region8
  $region5: #{net_forward.2} parent=0 // loop_body
    %s16 = ssub.s32 %s11, 1
    %s17 = ssub.s32 %s11, 2
    %s18 = sadd.s32 %s11, 1
    %s19 = ssub.s32 %s11, %s18
    %p20 = scmp.eq.s32.totalorder %s19, 0
    %s22 = sadd.s32 %s21, 1
    %s23 = scalar_select %p20, %s21, %s22
    %p26 = pneg %p20
    %p27 = scmp.eq.s32.totalorder %s11, 1
    %p28 = por %p26, %p27
    %p29 = scmp.ne.s32.totalorder %s21, %s24
    %p30 = scmp.eq.s32.totalorder %s11, 0
    %p31 = por %p29, %p30
    %p32 = scmp.ne.s32.totalorder %s21, %s24
    %p33 = scmp.eq.s32.totalorder %s16, 1
    %p34 = por %p32, %p33
    %p35 = scmp.ne.s32.totalorder %s24, %s25
    %p36 = scmp.eq.s32.totalorder %s16, 0
    %p37 = por %p35, %p36
    %p38 = scmp.ne.s32.totalorder %s24, %s25
    %p39 = scmp.eq.s32.totalorder %s17, 1
    %p40 = por %p38, %p39
    %p42 = scmp.ne.s32.totalorder %s25, %s41
    %p43 = scmp.eq.s32.totalorder %s17, 0
    %p44 = por %p42, %p43
    %s46 = sadd.s32 %s45, 1
    %p49 = scmp.eq.s32.totalorder %s11, 1
    %p50 = scmp.ne.s32.totalorder %s45, %s47
    %p51 = scmp.eq.s32.totalorder %s11, 0
    %p52 = por %p50, %p51
    %p53 = scmp.ne.s32.totalorder %s45, %s47
    %p54 = scmp.eq.s32.totalorder %s16, 1
    %p55 = por %p53, %p54
    %p56 = scmp.ne.s32.totalorder %s47, %s48
    %p57 = scmp.eq.s32.totalorder %s16, 0
    %p58 = por %p56, %p57
    %p59 = scmp.ne.s32.totalorder %s47, %s48
    %p60 = scmp.eq.s32.totalorder %s17, 1
    %p61 = por %p59, %p60
    %p63 = scmp.ne.s32.totalorder %s48, %s62
    %p64 = scmp.eq.s32.totalorder %s17, 0
    %p65 = por %p63, %p64
    %s67 = sadd.s32 %s66, 1
    %p70 = scmp.eq.s32.totalorder %s11, 1
    %p71 = scmp.ne.s32.totalorder %s66, %s68
    %p72 = scmp.eq.s32.totalorder %s11, 0
    %p73 = por %p71, %p72
    %p74 = scmp.ne.s32.totalorder %s66, %s68
    %p75 = scmp.eq.s32.totalorder %s16, 1
    %p76 = por %p74, %p75
    %p77 = scmp.ne.s32.totalorder %s68, %s69
    %p78 = scmp.eq.s32.totalorder %s16, 0
    %p79 = por %p77, %p78
    %p80 = scmp.ne.s32.totalorder %s68, %s69
    %p81 = scmp.eq.s32.totalorder %s17, 1
    %p82 = por %p80, %p81
    %p84 = scmp.ne.s32.totalorder %s69, %s83
    %p85 = scmp.eq.s32.totalorder %s17, 0
    %p86 = por %p84, %p85
    %s88 = sadd.s32 %s87, 1
    %p91 = scmp.eq.s32.totalorder %s11, 1
    %p92 = scmp.ne.s32.totalorder %s87, %s89
    %p93 = scmp.eq.s32.totalorder %s11, 0
    %p94 = por %p92, %p93
    %p95 = scmp.ne.s32.totalorder %s87, %s89
    %p96 = scmp.eq.s32.totalorder %s16, 1
    %p97 = por %p95, %p96
    %p98 = scmp.ne.s32.totalorder %s89, %s90
    %p99 = scmp.eq.s32.totalorder %s16, 0
    %p100 = por %p98, %p99
    %p101 = scmp.ne.s32.totalorder %s89, %s90
    %p102 = scmp.eq.s32.totalorder %s17, 1
    %p103 = por %p101, %p102
    %p105 = scmp.ne.s32.totalorder %s90, %s104
    %p106 = scmp.eq.s32.totalorder %s17, 0
    %p107 = por %p105, %p106
    %s109 = sadd.s32 %s108, 1
    %p112 = scmp.eq.s32.totalorder %s11, 1
    %p113 = scmp.ne.s32.totalorder %s108, %s110
    %p114 = scmp.eq.s32.totalorder %s11, 0
    %p115 = por %p113, %p114
    %p116 = scmp.ne.s32.totalorder %s108, %s110
    %p117 = scmp.eq.s32.totalorder %s16, 1
    %p118 = por %p116, %p117
    %p119 = scmp.ne.s32.totalorder %s110, %s111
    %p120 = scmp.eq.s32.totalorder %s16, 0
    %p121 = por %p119, %p120
    %p122 = scmp.ne.s32.totalorder %s110, %s111
    %p123 = scmp.eq.s32.totalorder %s17, 1
    %p124 = por %p122, %p123
    %p126 = scmp.ne.s32.totalorder %s111, %s125
    %p127 = scmp.eq.s32.totalorder %s17, 0
    %p128 = por %p126, %p127
    %s129 = ssub.s32 %s11, %s18
    %p130 = scmp.eq.s32.totalorder %s129, 0
    %s132 = sadd.s32 %s131, 1
    %s133 = scalar_select %p130, %s131, %s132
    %p136 = pneg %p130
    %p137 = scmp.eq.s32.totalorder %s11, 1
    %p138 = por %p136, %p137
    %p139 = scmp.ne.s32.totalorder %s131, %s134
    %p140 = scmp.eq.s32.totalorder %s11, 0
    %p141 = por %p139, %p140
    %p142 = scmp.ne.s32.totalorder %s131, %s134
    %p143 = scmp.eq.s32.totalorder %s16, 1
    %p144 = por %p142, %p143
    %p145 = scmp.ne.s32.totalorder %s134, %s135
    %p146 = scmp.eq.s32.totalorder %s16, 0
    %p147 = por %p145, %p146
    %p148 = scmp.ne.s32.totalorder %s134, %s135
    %p149 = scmp.eq.s32.totalorder %s17, 1
    %p150 = por %p148, %p149
    %p152 = scmp.ne.s32.totalorder %s135, %s151
    %p153 = scmp.eq.s32.totalorder %s17, 0
    %p154 = por %p152, %p153
    %p155 = scmp.le.s32.totalorder 1, %s11
    %p156 = scmp.lt.s32.totalorder %s11, 3
    %p157 = pnand %p155, %p156
    %p158 = pneg %p157
    // Predicated region
    $region9: #{net_forward.2} parent=5 // pred_check
      _
    $region10: #{net_forward.2} parent=5 // pred_check_branch
      %160 = sbr.rel (%p157) target = $region12
    $region11: #{net_forward.2} parent=5 // pred_region
      %s161 = ssub.s32 %s11, 1
      // Predicated region
      $region13: #{net_forward.2} parent=11 // pred_check
        %p162 = pneg %p58
      $region14: #{net_forward.2} parent=11 // pred_check_branch
        %164 = sbr.rel (%p162) target = $region16
      $region15: #{net_forward.2} parent=11 // pred_region
        _
      $region16: #{net_forward.2} parent=11 // pred_fallthru
        _
      // Predicated region
      $region17: #{net_forward.2} parent=11 // pred_check
        %p165 = pneg %p79
      $region18: #{net_forward.2} parent=11 // pred_check_branch
        %167 = sbr.rel (%p165) target = $region20
      $region19: #{net_forward.2} parent=11 // pred_region
        _
      $region20: #{net_forward.2} parent=11 // pred_fallthru
        _
      // Predicated region
      $region21: #{net_forward.2} parent=11 // pred_check
        %p168 = pneg %p100
      $region22: #{net_forward.2} parent=11 // pred_check_branch
        %170 = sbr.rel (%p168) target = $region24
      $region23: #{net_forward.2} parent=11 // pred_region
        _
      $region24: #{net_forward.2} parent=11 // pred_fallthru
        _
      // Predicated region
      $region25: #{net_forward.2} parent=11 // pred_check
        %p171 = pneg %p121
      $region26: #{net_forward.2} parent=11 // pred_check_branch
        %173 = sbr.rel (%p171) target = $region28
      $region27: #{net_forward.2} parent=11 // pred_region
        _
      $region28: #{net_forward.2} parent=11 // pred_fallthru
        _
    $region12: #{net_forward.2} parent=5 // pred_fallthru
      _
    %p174 = scmp.lt.s32.totalorder %s11, 2
    // Predicated region
    $region29: #{net_forward.2} parent=5 // pred_check
      %p175 = pneg %p174
    $region30: #{net_forward.2} parent=5 // pred_check_branch
      %177 = sbr.rel (%p175) target = $region32
    $region31: #{net_forward.2} parent=5 // pred_region
      // Predicated region
      $region33: #{net_forward.2} parent=31 // pred_check
        %p178 = pneg %p31
      $region34: #{net_forward.2} parent=31 // pred_check_branch
        %180 = sbr.rel (%p178) target = $region36
      $region35: #{net_forward.2} parent=31 // pred_region
        %p181 = scmp.lt.s32.totalorder %s11, 1
        %s182 = scalar_select %p181, %s11, 1
        %s183 = smul.addr %s182, 4
        %s184 = smul.addr %s183, 4
        %s185 = scalar_lea.vmem %s0, %s184
      $region36: #{net_forward.2} parent=31 // pred_fallthru
        _
    $region32: #{net_forward.2} parent=5 // pred_fallthru
      _
    %p186 = scmp.le.s32.totalorder 1, %s11
    %p187 = scmp.lt.s32.totalorder %s11, 3
    %p188 = pnand %p186, %p187
    %p189 = pneg %p188
    // Predicated region
    $region37: #{net_forward.2} parent=5 // pred_check
      _
    $region38: #{net_forward.2} parent=5 // pred_check_branch
      %191 = sbr.rel (%p188) target = $region40
    $region39: #{net_forward.2} parent=5 // pred_region
      %s192 = ssub.s32 %s11, 1
      %p193 = scmp.lt.s32.totalorder %s16, 1
      %s194 = scalar_select %p193, %s16, 1
      %s195 = smul.addr %s194, 4
      %s196 = smul.addr %s195, 4
      %s197 = scalar_lea.vmem %s0, %s196
      %p198 = pneg %p37
      %p199 = pneg %p34
      %p200 = pneg %p58
      %p201 = pneg %p55
      %p202 = pneg %p79
      %p203 = pneg %p76
      %p204 = pneg %p100
      %p205 = pneg %p97
      %p206 = pneg %p121
      %p207 = pneg %p118
      %p208 = pneg %p147
      %p209 = pneg %p144
      %p210 = scmp.lt.s32.totalorder %s16, 1
      %s211 = scalar_select %p210, %s16, 1
      %s212 = smul.addr %s211, 4
      %s213 = scalar_lea.vmem %s5, %s212
      %p214 = scmp.lt.s32.totalorder %s16, 1
      %s215 = scalar_select %p214, %s16, 1
      %s216 = smul.addr %s215, 4
      %s217 = smul.addr %s216, 4
      %s218 = scalar_lea.vmem %s0, %s217
      %p219 = scmp.lt.s32.totalorder %s16, 1
      %s220 = scalar_select %p219, %s16, 1
      %s221 = smul.addr %s220, 4
      %s222 = scalar_lea.vmem %s5, %s221
      %v224 = vld [vmem:[%s218] sm:$0xf]
      %v225 = vld [vmem:[%s1] sm:$0xff]
      %v226 = vld [vmem:[%s1 + $0x8] sm:$0xff]
      %v227 = vld [vmem:[%s1 + $0x10] sm:$0xff]
      %v228 = vld [vmem:[%s1 + $0x18] sm:$0xff]
      %v229 = vld [vmem:[%s1 + $0x20] sm:$0xff]
      %v230 = vld [vmem:[%s1 + $0x28] sm:$0xff]
      %v231 = vld [vmem:[%s1 + $0x30] sm:$0xff]
      %v232 = vld [vmem:[%s1 + $0x38] sm:$0xff]
      %v233 = vld [vmem:[%s1 + $0x40] sm:$0xff]
      %v234 = vld [vmem:[%s1 + $0x48] sm:$0xff]
      %v235 = vld [vmem:[%s1 + $0x50] sm:$0xff]
      %v236 = vld [vmem:[%s1 + $0x58] sm:$0xff]
      %s237 = scalar_lea.vmem %s218, 4
      %v238 = vld [vmem:[%s237] sm:$0xf]
      %s239 = scalar_lea.vmem %s1, 96
      %v240 = vld [vmem:[%s239] sm:$0xff]
      %v241 = vld [vmem:[%s239 + $0x8] sm:$0xff]
      %v242 = vld [vmem:[%s239 + $0x10] sm:$0xff]
      %v243 = vld [vmem:[%s239 + $0x18] sm:$0xff]
      %v244 = vld [vmem:[%s239 + $0x20] sm:$0xff]
      %v245 = vld [vmem:[%s239 + $0x28] sm:$0xff]
      %v246 = vld [vmem:[%s239 + $0x30] sm:$0xff]
      %v247 = vld [vmem:[%s239 + $0x38] sm:$0xff]
      %v248 = vld [vmem:[%s239 + $0x40] sm:$0xff]
      %v249 = vld [vmem:[%s239 + $0x48] sm:$0xff]
      %v250 = vld [vmem:[%s239 + $0x50] sm:$0xff]
      %v251 = vld [vmem:[%s239 + $0x58] sm:$0xff]
      %v264 = vunpack.c.l.b16 %v240
      %v265 = vunpack.c.h.b16 %v240
      %v266 = vunpack.c.l.b16 %v241
      %v267 = vunpack.c.h.b16 %v241
      %v268 = vunpack.c.l.b16 %v242
      %v269 = vunpack.c.h.b16 %v242
      %v270 = vunpack.c.l.b16 %v243
      %v271 = vunpack.c.h.b16 %v243
      %v272 = vunpack.c.l.b16 %v244
      %v273 = vunpack.c.h.b16 %v244
      %v274 = vunpack.c.l.b16 %v245
      %v275 = vunpack.c.h.b16 %v245
      %v276 = vunpack.c.l.b16 %v246
      %v277 = vunpack.c.h.b16 %v246
      %v278 = vunpack.c.l.b16 %v247
      %v279 = vunpack.c.h.b16 %v247
      %v280 = vunpack.c.l.b16 %v248
      %v281 = vunpack.c.h.b16 %v248
      %v282 = vunpack.c.l.b16 %v249
      %v283 = vunpack.c.h.b16 %v249
      %v284 = vunpack.c.l.b16 %v250
      %v285 = vunpack.c.h.b16 %v250
      %v286 = vunpack.c.l.b16 %v251
      %v287 = vunpack.c.h.b16 %v251
      %v288 = vpack.c.b16 %v266, %v264
      %v289 = vpack.c.b16 %v267, %v265
      %v290 = vpack.c.b16 %v270, %v268
      %v291 = vpack.c.b16 %v271, %v269
      %v292 = vpack.c.b16 %v274, %v272
      %v293 = vpack.c.b16 %v275, %v273
      %v294 = vpack.c.b16 %v278, %v276
      %v295 = vpack.c.b16 %v279, %v277
      %v296 = vpack.c.b16 %v282, %v280
      %v297 = vpack.c.b16 %v283, %v281
      %v298 = vpack.c.b16 %v286, %v284
      %v299 = vpack.c.b16 %v287, %v285
      %vm312 = vcmask 785408
      %v314 = vsel %vm312, %v238, 0
      %316 = vmatprep.subr.bf16.mxu0 %v289
      %317 = vmatpush1.bf16.msra.mxu0 %v288
      %318 = vmatprep.subr.bf16.mxu0 %v291
      %319 = vmatpush1.bf16.msra.mxu0 %v290
      %320 = vmatprep.subr.bf16.mxu0 %v293
      %321 = vmatpush1.bf16.msra.mxu0 %v292
      %322 = vmatprep.subr.bf16.mxu0 %v295
      %323 = vmatpush1.bf16.msra.mxu0 %v294
      %324 = vmatprep.subr.bf16.mxu0 %v297
      %325 = vmatpush1.bf16.msra.mxu0 %v296
      %326 = vmatprep.subr.bf16.mxu0 %v299
      %327 = vmatpush1.bf16.msra.mxu0 %v298
      %328 = vmatprep.subr.bf16.mxu0 0
      %329 = vmatpush1.bf16.msra.mxu0 0
      %330 = vmatprep.subr.bf16.mxu0 0
      %331 = vmatpush1.bf16.msra.mxu0 0
      %332 = vmatprep.subr.bf16.mxu0 0
      %333 = vmatpush1.bf16.msra.mxu0 0
      %334 = vmatprep.subr.bf16.mxu0 0
      %335 = vmatpush1.bf16.msra.mxu0 0
      %336 = vmatprep.subr.bf16.mxu0 0
      %337 = vmatpush1.bf16.msra.mxu0 0
      %338 = vmatprep.subr.bf16.mxu0 0
      %339 = vmatpush1.bf16.msra.mxu0 0
      %340 = vmatprep.subr.bf16.mxu0 0
      %341 = vmatpush1.bf16.msra.mxu0 0
      %342 = vmatprep.subr.bf16.mxu0 0
      %343 = vmatpush1.bf16.msra.mxu0 0
      %344 = vmatprep.subr.bf16.mxu0 0
      %345 = vmatpush1.bf16.msra.mxu0 0
      %346 = vmatprep.subr.bf16.mxu0 0
      %347 = vmatpush1.bf16.msra.mxu0 0
      %348 = vmatprep.mubr.bf16.mxu0 0
      %349 = vmatmul.mubr.bf16.gmra.mrb[0].mxu0 %v314
      %v350 = vpop.f32.mrb[0].mxu0
      %v351 = vadd.f32 0.0, %v350
      %v352 = vpop.f32.mrb[0].mxu0
      %v353 = vadd.f32 0.0, %v352
      %v354 = vpop.f32.mrb[0].mxu0
      %v355 = vpop.f32.mrb[0].mxu0
      %356 = vdwg.mxu0
      %v369 = vunpack.c.l.b16 %v225
      %v370 = vunpack.c.h.b16 %v225
      %v371 = vunpack.c.l.b16 %v226
      %v372 = vunpack.c.h.b16 %v226
      %v373 = vunpack.c.l.b16 %v227
      %v374 = vunpack.c.h.b16 %v227
      %v375 = vunpack.c.l.b16 %v228
      %v376 = vunpack.c.h.b16 %v228
      %v377 = vunpack.c.l.b16 %v229
      %v378 = vunpack.c.h.b16 %v229
      %v379 = vunpack.c.l.b16 %v230
      %v380 = vunpack.c.h.b16 %v230
      %v381 = vunpack.c.l.b16 %v231
      %v382 = vunpack.c.h.b16 %v231
      %v383 = vunpack.c.l.b16 %v232
      %v384 = vunpack.c.h.b16 %v232
      %v385 = vunpack.c.l.b16 %v233
      %v386 = vunpack.c.h.b16 %v233
      %v387 = vunpack.c.l.b16 %v234
      %v388 = vunpack.c.h.b16 %v234
      %v389 = vunpack.c.l.b16 %v235
      %v390 = vunpack.c.h.b16 %v235
      %v391 = vunpack.c.l.b16 %v236
      %v392 = vunpack.c.h.b16 %v236
      %v393 = vpack.c.b16 %v371, %v369
      %v394 = vpack.c.b16 %v372, %v370
      %v395 = vpack.c.b16 %v375, %v373
      %v396 = vpack.c.b16 %v376, %v374
      %v397 = vpack.c.b16 %v379, %v377
      %v398 = vpack.c.b16 %v380, %v378
      %v399 = vpack.c.b16 %v383, %v381
      %v400 = vpack.c.b16 %v384, %v382
      %v401 = vpack.c.b16 %v387, %v385
      %v402 = vpack.c.b16 %v388, %v386
      %v403 = vpack.c.b16 %v391, %v389
      %v404 = vpack.c.b16 %v392, %v390
      %v418 = vsel %vm312, %v224, 0
      %420 = vmatprep.subr.bf16.mxu0 %v394
      %421 = vmatpush1.bf16.msra.mxu0 %v393
      %422 = vmatprep.subr.bf16.mxu0 %v396
      %423 = vmatpush1.bf16.msra.mxu0 %v395
      %424 = vmatprep.subr.bf16.mxu0 %v398
      %425 = vmatpush1.bf16.msra.mxu0 %v397
      %426 = vmatprep.subr.bf16.mxu0 %v400
      %427 = vmatpush1.bf16.msra.mxu0 %v399
      %428 = vmatprep.subr.bf16.mxu0 %v402
      %429 = vmatpush1.bf16.msra.mxu0 %v401
      %430 = vmatprep.subr.bf16.mxu0 %v404
      %431 = vmatpush1.bf16.msra.mxu0 %v403
      %432 = vmatprep.subr.bf16.mxu0 0
      %433 = vmatpush1.bf16.msra.mxu0 0
      %434 = vmatprep.subr.bf16.mxu0 0
      %435 = vmatpush1.bf16.msra.mxu0 0
      %436 = vmatprep.subr.bf16.mxu0 0
      %437 = vmatpush1.bf16.msra.mxu0 0
      %438 = vmatprep.subr.bf16.mxu0 0
      %439 = vmatpush1.bf16.msra.mxu0 0
      %440 = vmatprep.subr.bf16.mxu0 0
      %441 = vmatpush1.bf16.msra.mxu0 0
      %442 = vmatprep.subr.bf16.mxu0 0
      %443 = vmatpush1.bf16.msra.mxu0 0
      %444 = vmatprep.subr.bf16.mxu0 0
      %445 = vmatpush1.bf16.msra.mxu0 0
      %446 = vmatprep.subr.bf16.mxu0 0
      %447 = vmatpush1.bf16.msra.mxu0 0
      %448 = vmatprep.subr.bf16.mxu0 0
      %449 = vmatpush1.bf16.msra.mxu0 0
      %450 = vmatprep.subr.bf16.mxu0 0
      %451 = vmatpush1.bf16.msra.mxu0 0
      %452 = vmatprep.mubr.bf16.mxu0 0
      %453 = vmatmul.mubr.bf16.gmra.mrb[0].mxu0 %v418
      %v454 = vpop.f32.mrb[0].mxu0
      %v455 = vadd.f32 %v351, %v454
      %v456 = vpop.f32.mrb[0].mxu0
      %v457 = vadd.f32 %v353, %v456
      %v458 = vpop.f32.mrb[0].mxu0
      %v459 = vpop.f32.mrb[0].mxu0
      %460 = vdwg.mxu0
      %s461 = scalar_lea.vmem %s218, 8
      %v462 = vld [vmem:[%s461] sm:$0xf]
      %s463 = scalar_lea.vmem %s1, 192
      %v464 = vld [vmem:[%s463] sm:$0xff]
      %v465 = vld [vmem:[%s463 + $0x8] sm:$0xff]
      %v466 = vld [vmem:[%s463 + $0x10] sm:$0xff]
      %v467 = vld [vmem:[%s463 + $0x18] sm:$0xff]
      %v468 = vld [vmem:[%s463 + $0x20] sm:$0xff]
      %v469 = vld [vmem:[%s463 + $0x28] sm:$0xff]
      %v470 = vld [vmem:[%s463 + $0x30] sm:$0xff]
      %v471 = vld [vmem:[%s463 + $0x38] sm:$0xff]
      %v472 = vld [vmem:[%s463 + $0x40] sm:$0xff]
      %v473 = vld [vmem:[%s463 + $0x48] sm:$0xff]
      %v474 = vld [vmem:[%s463 + $0x50] sm:$0xff]
      %v475 = vld [vmem:[%s463 + $0x58] sm:$0xff]
      %v488 = vunpack.c.l.b16 %v464
      %v489 = vunpack.c.h.b16 %v464
      %v490 = vunpack.c.l.b16 %v465
      %v491 = vunpack.c.h.b16 %v465
      %v492 = vunpack.c.l.b16 %v466
      %v493 = vunpack.c.h.b16 %v466
      %v494 = vunpack.c.l.b16 %v467
      %v495 = vunpack.c.h.b16 %v467
      %v496 = vunpack.c.l.b16 %v468
      %v497 = vunpack.c.h.b16 %v468
      %v498 = vunpack.c.l.b16 %v469
      %v499 = vunpack.c.h.b16 %v469
      %v500 = vunpack.c.l.b16 %v470
      %v501 = vunpack.c.h.b16 %v470
      %v502 = vunpack.c.l.b16 %v471
      %v503 = vunpack.c.h.b16 %v471
      %v504 = vunpack.c.l.b16 %v472
      %v505 = vunpack.c.h.b16 %v472
      %v506 = vunpack.c.l.b16 %v473
      %v507 = vunpack.c.h.b16 %v473
      %v508 = vunpack.c.l.b16 %v474
      %v509 = vunpack.c.h.b16 %v474
      %v510 = vunpack.c.l.b16 %v475
      %v511 = vunpack.c.h.b16 %v475
      %v512 = vpack.c.b16 %v490, %v488
      %v513 = vpack.c.b16 %v491, %v489
      %v514 = vpack.c.b16 %v494, %v492
      %v515 = vpack.c.b16 %v495, %v493
      %v516 = vpack.c.b16 %v498, %v496
      %v517 = vpack.c.b16 %v499, %v497
      %v518 = vpack.c.b16 %v502, %v500
      %v519 = vpack.c.b16 %v503, %v501
      %v520 = vpack.c.b16 %v506, %v504
      %v521 = vpack.c.b16 %v507, %v505
      %v522 = vpack.c.b16 %v510, %v508
      %v523 = vpack.c.b16 %v511, %v509
      %v537 = vsel %vm312, %v462, 0
      %539 = vmatprep.subr.bf16.mxu0 %v513
      %540 = vmatpush1.bf16.msra.mxu0 %v512
      %541 = vmatprep.subr.bf16.mxu0 %v515
      %542 = vmatpush1.bf16.msra.mxu0 %v514
      %543 = vmatprep.subr.bf16.mxu0 %v517
      %544 = vmatpush1.bf16.msra.mxu0 %v516
      %545 = vmatprep.subr.bf16.mxu0 %v519
      %546 = vmatpush1.bf16.msra.mxu0 %v518
      %547 = vmatprep.subr.bf16.mxu0 %v521
      %548 = vmatpush1.bf16.msra.mxu0 %v520
      %549 = vmatprep.subr.bf16.mxu0 %v523
      %550 = vmatpush1.bf16.msra.mxu0 %v522
      %551 = vmatprep.subr.bf16.mxu0 0
      %552 = vmatpush1.bf16.msra.mxu0 0
      %553 = vmatprep.subr.bf16.mxu0 0
      %554 = vmatpush1.bf16.msra.mxu0 0
      %555 = vmatprep.subr.bf16.mxu0 0
      %556 = vmatpush1.bf16.msra.mxu0 0
      %557 = vmatprep.subr.bf16.mxu0 0
      %558 = vmatpush1.bf16.msra.mxu0 0
      %559 = vmatprep.subr.bf16.mxu0 0
      %560 = vmatpush1.bf16.msra.mxu0 0
      %561 = vmatprep.subr.bf16.mxu0 0
      %562 = vmatpush1.bf16.msra.mxu0 0
      %563 = vmatprep.subr.bf16.mxu0 0
      %564 = vmatpush1.bf16.msra.mxu0 0
      %565 = vmatprep.subr.bf16.mxu0 0
      %566 = vmatpush1.bf16.msra.mxu0 0
      %567 = vmatprep.subr.bf16.mxu0 0
      %568 = vmatpush1.bf16.msra.mxu0 0
      %569 = vmatprep.subr.bf16.mxu0 0
      %570 = vmatpush1.bf16.msra.mxu0 0
      %571 = vmatprep.mubr.bf16.mxu0 0
      %572 = vmatmul.mubr.bf16.gmra.mrb[0].mxu0 %v537
      %v573 = vpop.f32.mrb[0].mxu0
      %v574 = vadd.f32 0.0, %v573
      %v575 = vpop.f32.mrb[0].mxu0
      %v576 = vadd.f32 0.0, %v575
      %v577 = vpop.f32.mrb[0].mxu0
      %v578 = vpop.f32.mrb[0].mxu0
      %579 = vdwg.mxu0
      %v580 = vadd.f32 %v455, %v574
      %v581 = vadd.f32 %v457, %v576
      %s582 = scalar_lea.vmem %s218, 12
      %v583 = vld [vmem:[%s582] sm:$0xf]
      %s584 = scalar_lea.vmem %s1, 288
      %v585 = vld [vmem:[%s584] sm:$0xff]
      %v586 = vld [vmem:[%s584 + $0x8] sm:$0xff]
      %v587 = vld [vmem:[%s584 + $0x10] sm:$0xff]
      %v588 = vld [vmem:[%s584 + $0x18] sm:$0xff]
      %v589 = vld [vmem:[%s584 + $0x20] sm:$0xff]
      %v590 = vld [vmem:[%s584 + $0x28] sm:$0xff]
      %v591 = vld [vmem:[%s584 + $0x30] sm:$0xff]
      %v592 = vld [vmem:[%s584 + $0x38] sm:$0xff]
      %v593 = vld [vmem:[%s584 + $0x40] sm:$0xff]
      %v594 = vld [vmem:[%s584 + $0x48] sm:$0xff]
      %v595 = vld [vmem:[%s584 + $0x50] sm:$0xff]
      %v596 = vld [vmem:[%s584 + $0x58] sm:$0xff]
      %v609 = vunpack.c.l.b16 %v585
      %v610 = vunpack.c.h.b16 %v585
      %v611 = vunpack.c.l.b16 %v586
      %v612 = vunpack.c.h.b16 %v586
      %v613 = vunpack.c.l.b16 %v587
      %v614 = vunpack.c.h.b16 %v587
      %v615 = vunpack.c.l.b16 %v588
      %v616 = vunpack.c.h.b16 %v588
      %v617 = vunpack.c.l.b16 %v589
      %v618 = vunpack.c.h.b16 %v589
      %v619 = vunpack.c.l.b16 %v590
      %v620 = vunpack.c.h.b16 %v590
      %v621 = vunpack.c.l.b16 %v591
      %v622 = vunpack.c.h.b16 %v591
      %v623 = vunpack.c.l.b16 %v592
      %v624 = vunpack.c.h.b16 %v592
      %v625 = vunpack.c.l.b16 %v593
      %v626 = vunpack.c.h.b16 %v593
      %v627 = vunpack.c.l.b16 %v594
      %v628 = vunpack.c.h.b16 %v594
      %v629 = vunpack.c.l.b16 %v595
      %v630 = vunpack.c.h.b16 %v595
      %v631 = vunpack.c.l.b16 %v596
      %v632 = vunpack.c.h.b16 %v596
      %v633 = vpack.c.b16 %v611, %v609
      %v634 = vpack.c.b16 %v612, %v610
      %v635 = vpack.c.b16 %v615, %v613
      %v636 = vpack.c.b16 %v616, %v614
      %v637 = vpack.c.b16 %v619, %v617
      %v638 = vpack.c.b16 %v620, %v618
      %v639 = vpack.c.b16 %v623, %v621
      %v640 = vpack.c.b16 %v624, %v622
      %v641 = vpack.c.b16 %v627, %v625
      %v642 = vpack.c.b16 %v628, %v626
      %v643 = vpack.c.b16 %v631, %v629
      %v644 = vpack.c.b16 %v632, %v630
      %v658 = vsel %vm312, %v583, 0
      %660 = vmatprep.subr.bf16.mxu0 %v634
      %661 = vmatpush1.bf16.msra.mxu0 %v633
      %662 = vmatprep.subr.bf16.mxu0 %v636
      %663 = vmatpush1.bf16.msra.mxu0 %v635
      %664 = vmatprep.subr.bf16.mxu0 %v638
      %665 = vmatpush1.bf16.msra.mxu0 %v637
      %666 = vmatprep.subr.bf16.mxu0 %v640
      %667 = vmatpush1.bf16.msra.mxu0 %v639
      %668 = vmatprep.subr.bf16.mxu0 %v642
      %669 = vmatpush1.bf16.msra.mxu0 %v641
      %670 = vmatprep.subr.bf16.mxu0 %v644
      %671 = vmatpush1.bf16.msra.mxu0 %v643
      %672 = vmatprep.subr.bf16.mxu0 0
      %673 = vmatpush1.bf16.msra.mxu0 0
      %674 = vmatprep.subr.bf16.mxu0 0
      %675 = vmatpush1.bf16.msra.mxu0 0
      %676 = vmatprep.subr.bf16.mxu0 0
      %677 = vmatpush1.bf16.msra.mxu0 0
      %678 = vmatprep.subr.bf16.mxu0 0
      %679 = vmatpush1.bf16.msra.mxu0 0
      %680 = vmatprep.subr.bf16.mxu0 0
      %681 = vmatpush1.bf16.msra.mxu0 0
      %682 = vmatprep.subr.bf16.mxu0 0
      %683 = vmatpush1.bf16.msra.mxu0 0
      %684 = vmatprep.subr.bf16.mxu0 0
      %685 = vmatpush1.bf16.msra.mxu0 0
      %686 = vmatprep.subr.bf16.mxu0 0
      %687 = vmatpush1.bf16.msra.mxu0 0
      %688 = vmatprep.subr.bf16.mxu0 0
      %689 = vmatpush1.bf16.msra.mxu0 0
      %690 = vmatprep.subr.bf16.mxu0 0
      %691 = vmatpush1.bf16.msra.mxu0 0
      %692 = vmatprep.mubr.bf16.mxu0 0
      %693 = vmatmul.mubr.bf16.gmra.mrb[0].mxu0 %v658
      %v694 = vpop.f32.mrb[0].mxu0
      %v695 = vadd.f32 0.0, %v694
      %v696 = vpop.f32.mrb[0].mxu0
      %v697 = vadd.f32 0.0, %v696
      %v698 = vpop.f32.mrb[0].mxu0
      %v699 = vpop.f32.mrb[0].mxu0
      %700 = vdwg.mxu0
      %v701 = vadd.f32 %v580, %v695
      %v702 = vadd.f32 %v581, %v697
      %s703 = scalar_lea.vmem %s1, 384
      %v704 = vld [vmem:[%s703] sm:$0xff]
      %v705 = vld [vmem:[%s703 + $0x8] sm:$0xff]
      %v706 = vld [vmem:[%s703 + $0x10] sm:$0xff]
      %v707 = vld [vmem:[%s703 + $0x18] sm:$0xff]
      %v708 = vld [vmem:[%s703 + $0x20] sm:$0xff]
      %v709 = vld [vmem:[%s703 + $0x28] sm:$0xff]
      %v710 = vld [vmem:[%s703 + $0x30] sm:$0xff]
      %v711 = vld [vmem:[%s703 + $0x38] sm:$0xff]
      %v712 = vld [vmem:[%s703 + $0x40] sm:$0xff]
      %v713 = vld [vmem:[%s703 + $0x48] sm:$0xff]
      %v714 = vld [vmem:[%s703 + $0x50] sm:$0xff]
      %v715 = vld [vmem:[%s703 + $0x58] sm:$0xff]
      %v717 = vunpack.c.l.b16 %v224
      %v718 = vpack.c.b16 %v717, %v717
      %v720 = vshrl.u32 %v718, 16
      %v722 = vshll.u32 %v718, 16
      %v724 = vrot.slane %v722, 1
      %v725 = vor.u32 %v720, %v724
      %v738 = vunpack.c.l.b16 %v704
      %v739 = vunpack.c.h.b16 %v704
      %v740 = vunpack.c.l.b16 %v705
      %v741 = vunpack.c.h.b16 %v705
      %v742 = vunpack.c.l.b16 %v706
      %v743 = vunpack.c.h.b16 %v706
      %v744 = vunpack.c.l.b16 %v707
      %v745 = vunpack.c.h.b16 %v707
      %v746 = vunpack.c.l.b16 %v708
      %v747 = vunpack.c.h.b16 %v708
      %v748 = vunpack.c.l.b16 %v709
      %v749 = vunpack.c.h.b16 %v709
      %v750 = vunpack.c.l.b16 %v710
      %v751 = vunpack.c.h.b16 %v710
      %v752 = vunpack.c.l.b16 %v711
      %v753 = vunpack.c.h.b16 %v711
      %v754 = vunpack.c.l.b16 %v712
      %v755 = vunpack.c.h.b16 %v712
      %v756 = vunpack.c.l.b16 %v713
      %v757 = vunpack.c.h.b16 %v713
      %v758 = vunpack.c.l.b16 %v714
      %v759 = vunpack.c.h.b16 %v714
      %v760 = vunpack.c.l.b16 %v715
      %v761 = vunpack.c.h.b16 %v715
      %v762 = vpack.c.b16 %v740, %v738
      %v763 = vpack.c.b16 %v741, %v739
      %v764 = vpack.c.b16 %v744, %v742
      %v765 = vpack.c.b16 %v745, %v743
      %v766 = vpack.c.b16 %v748, %v746
      %v767 = vpack.c.b16 %v749, %v747
      %v768 = vpack.c.b16 %v752, %v750
      %v769 = vpack.c.b16 %v753, %v751
      %v770 = vpack.c.b16 %v756, %v754
      %v771 = vpack.c.b16 %v757, %v755
      %v772 = vpack.c.b16 %v760, %v758
      %v773 = vpack.c.b16 %v761, %v759
      %v787 = vsel %vm312, %v725, 0
      %789 = vmatprep.subr.bf16.mxu0 %v763
      %790 = vmatpush1.bf16.msra.mxu0 %v762
      %791 = vmatprep.subr.bf16.mxu0 %v765
      %792 = vmatpush1.bf16.msra.mxu0 %v764
      %793 = vmatprep.subr.bf16.mxu0 %v767
      %794 = vmatpush1.bf16.msra.mxu0 %v766
      %795 = vmatprep.subr.bf16.mxu0 %v769
      %796 = vmatpush1.bf16.msra.mxu0 %v768
      %797 = vmatprep.subr.bf16.mxu0 %v771
      %798 = vmatpush1.bf16.msra.mxu0 %v770
      %799 = vmatprep.subr.bf16.mxu0 %v773
      %800 = vmatpush1.bf16.msra.mxu0 %v772
      %801 = vmatprep.subr.bf16.mxu0 0
      %802 = vmatpush1.bf16.msra.mxu0 0
      %803 = vmatprep.subr.bf16.mxu0 0
      %804 = vmatpush1.bf16.msra.mxu0 0
      %805 = vmatprep.subr.bf16.mxu0 0
      %806 = vmatpush1.bf16.msra.mxu0 0
      %807 = vmatprep.subr.bf16.mxu0 0
      %808 = vmatpush1.bf16.msra.mxu0 0
      %809 = vmatprep.subr.bf16.mxu0 0
      %810 = vmatpush1.bf16.msra.mxu0 0
      %811 = vmatprep.subr.bf16.mxu0 0
      %812 = vmatpush1.bf16.msra.mxu0 0
      %813 = vmatprep.subr.bf16.mxu0 0
      %814 = vmatpush1.bf16.msra.mxu0 0
      %815 = vmatprep.subr.bf16.mxu0 0
      %816 = vmatpush1.bf16.msra.mxu0 0
      %817 = vmatprep.subr.bf16.mxu0 0
      %818 = vmatpush1.bf16.msra.mxu0 0
      %819 = vmatprep.subr.bf16.mxu0 0
      %820 = vmatpush1.bf16.msra.mxu0 0
      %821 = vmatprep.mubr.bf16.mxu0 0
      %822 = vmatmul.mubr.bf16.gmra.mrb[0].mxu0 %v787
      %v823 = vpop.f32.mrb[0].mxu0
      %v824 = vadd.f32 0.0, %v823
      %v825 = vpop.f32.mrb[0].mxu0
      %v826 = vadd.f32 0.0, %v825
      %v827 = vpop.f32.mrb[0].mxu0
      %v828 = vpop.f32.mrb[0].mxu0
      %829 = vdwg.mxu0
      %v830 = vadd.f32 %v701, %v824
      %v831 = vadd.f32 %v702, %v826
      %v832 = vmax.f32 %v830, %v831
      %833 = vmatprep.subr.bf16.mxu0 %v289
      %834 = vmatpush1.bf16.msra.mxu0 %v288
      %835 = vmatprep.subr.bf16.mxu0 %v291
      %836 = vmatpush1.bf16.msra.mxu0 %v290
      %837 = vmatprep.subr.bf16.mxu0 %v293
      %838 = vmatpush1.bf16.msra.mxu0 %v292
      %839 = vmatprep.subr.bf16.mxu0 %v295
      %840 = vmatpush1.bf16.msra.mxu0 %v294
      %841 = vmatprep.subr.bf16.mxu0 %v297
      %842 = vmatpush1.bf16.msra.mxu0 %v296
      %843 = vmatprep.subr.bf16.mxu0 %v299
      %844 = vmatpush1.bf16.msra.mxu0 %v298
      %845 = vmatprep.subr.bf16.mxu0 0
      %846 = vmatpush1.bf16.msra.mxu0 0
      %847 = vmatprep.subr.bf16.mxu0 0
      %848 = vmatpush1.bf16.msra.mxu0 0
      %849 = vmatprep.subr.bf16.mxu0 0
      %850 = vmatpush1.bf16.msra.mxu0 0
      %851 = vmatprep.subr.bf16.mxu0 0
      %852 = vmatpush1.bf16.msra.mxu0 0
      %853 = vmatprep.subr.bf16.mxu0 0
      %854 = vmatpush1.bf16.msra.mxu0 0
      %855 = vmatprep.subr.bf16.mxu0 0
      %856 = vmatpush1.bf16.msra.mxu0 0
      %857 = vmatprep.subr.bf16.mxu0 0
      %858 = vmatpush1.bf16.msra.mxu0 0
      %859 = vmatprep.subr.bf16.mxu0 0
      %860 = vmatpush1.bf16.msra.mxu0 0
      %861 = vmatprep.subr.bf16.mxu0 0
      %862 = vmatpush1.bf16.msra.mxu0 0
      %863 = vmatprep.subr.bf16.mxu0 0
      %864 = vmatpush1.bf16.msra.mxu0 0
      %865 = vmatprep.mubr.bf16.mxu0 0
      %866 = vmatmul.mubr.bf16.gmra.mrb[0].mxu0 %v537
      %v867 = vpop.f32.mrb[0].mxu0
      %v868 = vadd.f32 0.0, %v867
      %v869 = vpop.f32.mrb[0].mxu0
      %v870 = vadd.f32 0.0, %v869
      %v871 = vpop.f32.mrb[0].mxu0
      %v872 = vpop.f32.mrb[0].mxu0
      %873 = vdwg.mxu0
      %874 = vmatprep.subr.bf16.mxu0 %v394
      %875 = vmatpush1.bf16.msra.mxu0 %v393
      %876 = vmatprep.subr.bf16.mxu0 %v396
      %877 = vmatpush1.bf16.msra.mxu0 %v395
      %878 = vmatprep.subr.bf16.mxu0 %v398
      %879 = vmatpush1.bf16.msra.mxu0 %v397
      %880 = vmatprep.subr.bf16.mxu0 %v400
      %881 = vmatpush1.bf16.msra.mxu0 %v399
      %882 = vmatprep.subr.bf16.mxu0 %v402
      %883 = vmatpush1.bf16.msra.mxu0 %v401
      %884 = vmatprep.subr.bf16.mxu0 %v404
      %885 = vmatpush1.bf16.msra.mxu0 %v403
      %886 = vmatprep.subr.bf16.mxu0 0
      %887 = vmatpush1.bf16.msra.mxu0 0
      %888 = vmatprep.subr.bf16.mxu0 0
      %889 = vmatpush1.bf16.msra.mxu0 0
      %890 = vmatprep.subr.bf16.mxu0 0
      %891 = vmatpush1.bf16.msra.mxu0 0
      %892 = vmatprep.subr.bf16.mxu0 0
      %893 = vmatpush1.bf16.msra.mxu0 0
      %894 = vmatprep.subr.bf16.mxu0 0
      %895 = vmatpush1.bf16.msra.mxu0 0
      %896 = vmatprep.subr.bf16.mxu0 0
      %897 = vmatpush1.bf16.msra.mxu0 0
      %898 = vmatprep.subr.bf16.mxu0 0
      %899 = vmatpush1.bf16.msra.mxu0 0
      %900 = vmatprep.subr.bf16.mxu0 0
      %901 = vmatpush1.bf16.msra.mxu0 0
      %902 = vmatprep.subr.bf16.mxu0 0
      %903 = vmatpush1.bf16.msra.mxu0 0
      %904 = vmatprep.subr.bf16.mxu0 0
      %905 = vmatpush1.bf16.msra.mxu0 0
      %906 = vmatprep.mubr.bf16.mxu0 0
      %907 = vmatmul.mubr.bf16.gmra.mrb[0].mxu0 %v314
      %v908 = vpop.f32.mrb[0].mxu0
      %v909 = vadd.f32 %v868, %v908
      %v910 = vpop.f32.mrb[0].mxu0
      %v911 = vadd.f32 %v870, %v910
      %v912 = vpop.f32.mrb[0].mxu0
      %v913 = vpop.f32.mrb[0].mxu0
      %914 = vdwg.mxu0
      %915 = vmatprep.subr.bf16.mxu0 %v513
      %916 = vmatpush1.bf16.msra.mxu0 %v512
      %917 = vmatprep.subr.bf16.mxu0 %v515
      %918 = vmatpush1.bf16.msra.mxu0 %v514
      %919 = vmatprep.subr.bf16.mxu0 %v517
      %920 = vmatpush1.bf16.msra.mxu0 %v516
      %921 = vmatprep.subr.bf16.mxu0 %v519
      %922 = vmatpush1.bf16.msra.mxu0 %v518
      %923 = vmatprep.subr.bf16.mxu0 %v521
      %924 = vmatpush1.bf16.msra.mxu0 %v520
      %925 = vmatprep.subr.bf16.mxu0 %v523
      %926 = vmatpush1.bf16.msra.mxu0 %v522
      %927 = vmatprep.subr.bf16.mxu0 0
      %928 = vmatpush1.bf16.msra.mxu0 0
      %929 = vmatprep.subr.bf16.mxu0 0
      %930 = vmatpush1.bf16.msra.mxu0 0
      %931 = vmatprep.subr.bf16.mxu0 0
      %932 = vmatpush1.bf16.msra.mxu0 0
      %933 = vmatprep.subr.bf16.mxu0 0
      %934 = vmatpush1.bf16.msra.mxu0 0
      %935 = vmatprep.subr.bf16.mxu0 0
      %936 = vmatpush1.bf16.msra.mxu0 0
      %937 = vmatprep.subr.bf16.mxu0 0
      %938 = vmatpush1.bf16.msra.mxu0 0
      %939 = vmatprep.subr.bf16.mxu0 0
      %940 = vmatpush1.bf16.msra.mxu0 0
      %941 = vmatprep.subr.bf16.mxu0 0
      %942 = vmatpush1.bf16.msra.mxu0 0
      %943 = vmatprep.subr.bf16.mxu0 0
      %944 = vmatpush1.bf16.msra.mxu0 0
      %945 = vmatprep.subr.bf16.mxu0 0
      %946 = vmatpush1.bf16.msra.mxu0 0
      %947 = vmatprep.mubr.bf16.mxu0 0
      %948 = vmatmul.mubr.bf16.gmra.mrb[0].mxu0 %v658
      %v949 = vpop.f32.mrb[0].mxu0
      %v950 = vadd.f32 0.0, %v949
      %v951 = vpop.f32.mrb[0].mxu0
      %v952 = vadd.f32 0.0, %v951
      %v953 = vpop.f32.mrb[0].mxu0
      %v954 = vpop.f32.mrb[0].mxu0
      %955 = vdwg.mxu0
      %v956 = vadd.f32 %v909, %v950
      %v957 = vadd.f32 %v911, %v952
      %958 = vmatprep.subr.bf16.mxu0 %v634
      %959 = vmatpush1.bf16.msra.mxu0 %v633
      %960 = vmatprep.subr.bf16.mxu0 %v636
      %961 = vmatpush1.bf16.msra.mxu0 %v635
      %962 = vmatprep.subr.bf16.mxu0 %v638
      %963 = vmatpush1.bf16.msra.mxu0 %v637
      %964 = vmatprep.subr.bf16.mxu0 %v640
      %965 = vmatpush1.bf16.msra.mxu0 %v639
      %966 = vmatprep.subr.bf16.mxu0 %v642
      %967 = vmatpush1.bf16.msra.mxu0 %v641
      %968 = vmatprep.subr.bf16.mxu0 %v644
      %969 = vmatpush1.bf16.msra.mxu0 %v643
      %970 = vmatprep.subr.bf16.mxu0 0
      %971 = vmatpush1.bf16.msra.mxu0 0
      %972 = vmatprep.subr.bf16.mxu0 0
      %973 = vmatpush1.bf16.msra.mxu0 0
      %974 = vmatprep.subr.bf16.mxu0 0
      %975 = vmatpush1.bf16.msra.mxu0 0
      %976 = vmatprep.subr.bf16.mxu0 0
      %977 = vmatpush1.bf16.msra.mxu0 0
      %978 = vmatprep.subr.bf16.mxu0 0
      %979 = vmatpush1.bf16.msra.mxu0 0
      %980 = vmatprep.subr.bf16.mxu0 0
      %981 = vmatpush1.bf16.msra.mxu0 0
      %982 = vmatprep.subr.bf16.mxu0 0
      %983 = vmatpush1.bf16.msra.mxu0 0
      %984 = vmatprep.subr.bf16.mxu0 0
      %985 = vmatpush1.bf16.msra.mxu0 0
      %986 = vmatprep.subr.bf16.mxu0 0
      %987 = vmatpush1.bf16.msra.mxu0 0
      %988 = vmatprep.subr.bf16.mxu0 0
      %989 = vmatpush1.bf16.msra.mxu0 0
      %990 = vmatprep.mubr.bf16.mxu0 0
      %991 = vmatmul.mubr.bf16.gmra.mrb[0].mxu0 %v787
      %v992 = vpop.f32.mrb[0].mxu0
      %v993 = vadd.f32 0.0, %v992
      %v994 = vpop.f32.mrb[0].mxu0
      %v995 = vadd.f32 0.0, %v994
      %v996 = vpop.f32.mrb[0].mxu0
      %v997 = vpop.f32.mrb[0].mxu0
      %998 = vdwg.mxu0
      %v999 = vadd.f32 %v956, %v993
      %v1000 = vadd.f32 %v957, %v995
      %v1002 = vunpack.c.l.b16 %v238
      %v1003 = vpack.c.b16 %v1002, %v1002
      %v1005 = vshrl.u32 %v1003, 16
      %v1007 = vshll.u32 %v1003, 16
      %v1009 = vrot.slane %v1007, 1
      %v1010 = vor.u32 %v1005, %v1009
      %v1012 = vsel %vm312, %v1010, 0
      %1014 = vmatprep.subr.bf16.mxu0 %v763
      %1015 = vmatpush1.bf16.msra.mxu0 %v762
      %1016 = vmatprep.subr.bf16.mxu0 %v765
      %1017 = vmatpush1.bf16.msra.mxu0 %v764
      %1018 = vmatprep.subr.bf16.mxu0 %v767
      %1019 = vmatpush1.bf16.msra.mxu0 %v766
      %1020 = vmatprep.subr.bf16.mxu0 %v769
      %1021 = vmatpush1.bf16.msra.mxu0 %v768
      %1022 = vmatprep.subr.bf16.mxu0 %v771
      %1023 = vmatpush1.bf16.msra.mxu0 %v770
      %1024 = vmatprep.subr.bf16.mxu0 %v773
      %1025 = vmatpush1.bf16.msra.mxu0 %v772
      %1026 = vmatprep.subr.bf16.mxu0 0
      %1027 = vmatpush1.bf16.msra.mxu0 0
      %1028 = vmatprep.subr.bf16.mxu0 0
      %1029 = vmatpush1.bf16.msra.mxu0 0
      %1030 = vmatprep.subr.bf16.mxu0 0
      %1031 = vmatpush1.bf16.msra.mxu0 0
      %1032 = vmatprep.subr.bf16.mxu0 0
      %1033 = vmatpush1.bf16.msra.mxu0 0
      %1034 = vmatprep.subr.bf16.mxu0 0
      %1035 = vmatpush1.bf16.msra.mxu0 0
      %1036 = vmatprep.subr.bf16.mxu0 0
      %1037 = vmatpush1.bf16.msra.mxu0 0
      %1038 = vmatprep.subr.bf16.mxu0 0
      %1039 = vmatpush1.bf16.msra.mxu0 0
      %1040 = vmatprep.subr.bf16.mxu0 0
      %1041 = vmatpush1.bf16.msra.mxu0 0
      %1042 = vmatprep.subr.bf16.mxu0 0
      %1043 = vmatpush1.bf16.msra.mxu0 0
      %1044 = vmatprep.subr.bf16.mxu0 0
      %1045 = vmatpush1.bf16.msra.mxu0 0
      %1046 = vmatprep.mubr.bf16.mxu0 0
      %1047 = vmatmul.mubr.bf16.gmra.mrb[0].mxu0 %v1012
      %v1048 = vpop.f32.mrb[0].mxu0
      %v1049 = vadd.f32 0.0, %v1048
      %v1050 = vpop.f32.mrb[0].mxu0
      %v1051 = vadd.f32 0.0, %v1050
      %v1052 = vpop.f32.mrb[0].mxu0
      %v1053 = vpop.f32.mrb[0].mxu0
      %1054 = vdwg.mxu0
      %v1055 = vadd.f32 %v999, %v1049
      %v1056 = vadd.f32 %v1000, %v1051
      %v1057 = vmax.f32 %v1055, %v1056
      %v1058 = vmax.f32 %v832, %v1057
      %v1059 = vld [vmem:[%s2] sm:$0x1]
      %v1061 = vlaneseq
      %v1062 = vshrl.u32 %v1061, 7
      %v1063 = vsub.s32 0, %v1062
      %v1064 = vrot.slane %v1059, %v1063
      %v1066 = vadd.f32 %v1058, %v1064
      %v1067 = vmax.f32 %v1066, 0.0
      %v1068 = vpack.c.bf16 %v1067, %v1067
      %vm1069 = vcmask 1043456
      %vm1070 = vsmask.f32 3328
      %vm1071 = vmand %vm1069, %vm1070
      %v1072 = vld [vmem:[#allocation2] sm:$0xf]
      %v1073 = vsel %vm1071, %v1068, %v1072
      %1074 = vst [vmem:[#allocation2] sm:$0xf] %v1073
      %v1075 = vld [vmem:[%s461] sm:$0xf]
      %v1076 = vld [vmem:[%s1] sm:$0xff]
      %v1077 = vld [vmem:[%s1 + $0x8] sm:$0xff]
      %v1078 = vld [vmem:[%s1 + $0x10] sm:$0xff]
      %v1079 = vld [vmem:[%s1 + $0x18] sm:$0xff]
      %v1080 = vld [vmem:[%s1 + $0x20] sm:$0xff]
      %v1081 = vld [vmem:[%s1 + $0x28] sm:$0xff]
      %v1082 = vld [vmem:[%s1 + $0x30] sm:$0xff]
      %v1083 = vld [vmem:[%s1 + $0x38] sm:$0xff]
      %v1084 = vld [vmem:[%s1 + $0x40] sm:$0xff]
      %v1085 = vld [vmem:[%s1 + $0x48] sm:$0xff]
      %v1086 = vld [vmem:[%s1 + $0x50] sm:$0xff]
      %v1087 = vld [vmem:[%s1 + $0x58] sm:$0xff]
      %v1088 = vld [vmem:[%s582] sm:$0xf]
      %v1089 = vld [vmem:[%s239] sm:$0xff]
      %v1090 = vld [vmem:[%s239 + $0x8] sm:$0xff]
      %v1091 = vld [vmem:[%s239 + $0x10] sm:$0xff]
      %v1092 = vld [vmem:[%s239 + $0x18] sm:$0xff]
      %v1093 = vld [vmem:[%s239 + $0x20] sm:$0xff]
      %v1094 = vld [vmem:[%s239 + $0x28] sm:$0xff]
      %v1095 = vld [vmem:[%s239 + $0x30] sm:$0xff]
      %v1096 = vld [vmem:[%s239 + $0x38] sm:$0xff]
      %v1097 = vld [vmem:[%s239 + $0x40] sm:$0xff]
      %v1098 = vld [vmem:[%s239 + $0x48] sm:$0xff]
      %v1099 = vld [vmem:[%s239 + $0x50] sm:$0xff]
      %v1100 = vld [vmem:[%s239 + $0x58] sm:$0xff]
      %v1113 = vunpack.c.l.b16 %v1089
      %v1114 = vunpack.c.h.b16 %v1089
      %v1115 = vunpack.c.l.b16 %v1090
      %v1116 = vunpack.c.h.b16 %v1090
      %v1117 = vunpack.c.l.b16 %v1091
      %v1118 = vunpack.c.h.b16 %v1091
      %v1119 = vunpack.c.l.b16 %v1092
      %v1120 = vunpack.c.h.b16 %v1092
      %v1121 = vunpack.c.l.b16 %v1093
      %v1122 = vunpack.c.h.b16 %v1093
      %v1123 = vunpack.c.l.b16 %v1094
      %v1124 = vunpack.c.h.b16 %v1094
      %v1125 = vunpack.c.l.b16 %v1095
      %v1126 = vunpack.c.h.b16 %v1095
      %v1127 = vunpack.c.l.b16 %v1096
      %v1128 = vunpack.c.h.b16 %v1096
      %v1129 = vunpack.c.l.b16 %v1097
      %v1130 = vunpack.c.h.b16 %v1097
      %v1131 = vunpack.c.l.b16 %v1098
      %v1132 = vunpack.c.h.b16 %v1098
      %v1133 = vunpack.c.l.b16 %v1099
      %v1134 = vunpack.c.h.b16 %v1099
      %v1135 = vunpack.c.l.b16 %v1100
      %v1136 = vunpack.c.h.b16 %v1100
      %v1137 = vpack.c.b16 %v1115, %v1113
      %v1138 = vpack.c.b16 %v1116, %v1114
      %v1139 = vpack.c.b16 %v1119, %v1117
      %v1140 = vpack.c.b16 %v1120, %v1118
      %v1141 = vpack.c.b16 %v1123, %v1121
      %v1142 = vpack.c.b16 %v1124, %v1122
      %v1143 = vpack.c.b16 %v1127, %v1125
      %v1144 = vpack.c.b16 %v1128, %v1126
      %v1145 = vpack.c.b16 %v1131, %v1129
      %v1146 = vpack.c.b16 %v1132, %v1130
      %v1147 = vpack.c.b16 %v1135, %v1133
      %v1148 = vpack.c.b16 %v1136, %v1134
      %v1162 = vsel %vm312, %v1088, 0
      %1164 = vmatprep.subr.bf16.mxu0 %v1138
      %1165 = vmatpush1.bf16.msra.mxu0 %v1137
      %1166 = vmatprep.subr.bf16.mxu0 %v1140
      %1167 = vmatpush1.bf16.msra.mxu0 %v1139
      %1168 = vmatprep.subr.bf16.mxu0 %v1142
      %1169 = vmatpush1.bf16.msra.mxu0 %v1141
      %1170 = vmatprep.subr.bf16.mxu0 %v1144
      %1171 = vmatpush1.bf16.msra.mxu0 %v1143
      %1172 = vmatprep.subr.bf16.mxu0 %v1146
      %1173 = vmatpush1.bf16.msra.mxu0 %v1145
      %1174 = vmatprep.subr.bf16.mxu0 %v1148
      %1175 = vmatpush1.bf16.msra.mxu0 %v1147
      %1176 = vmatprep.subr.bf16.mxu0 0
      %1177 = vmatpush1.bf16.msra.mxu0 0
      %1178 = vmatprep.subr.bf16.mxu0 0
      %1179 = vmatpush1.bf16.msra.mxu0 0
      %1180 = vmatprep.subr.bf16.mxu0 0
      %1181 = vmatpush1.bf16.msra.mxu0 0
      %1182 = vmatprep.subr.bf16.mxu0 0
      %1183 = vmatpush1.bf16.msra.mxu0 0
      %1184 = vmatprep.subr.bf16.mxu0 0
      %1185 = vmatpush1.bf16.msra.mxu0 0
      %1186 = vmatprep.subr.bf16.mxu0 0
      %1187 = vmatpush1.bf16.msra.mxu0 0
      %1188 = vmatprep.subr.bf16.mxu0 0
      %1189 = vmatpush1.bf16.msra.mxu0 0
      %1190 = vmatprep.subr.bf16.mxu0 0
      %1191 = vmatpush1.bf16.msra.mxu0 0
      %1192 = vmatprep.subr.bf16.mxu0 0
      %1193 = vmatpush1.bf16.msra.mxu0 0
      %1194 = vmatprep.subr.bf16.mxu0 0
      %1195 = vmatpush1.bf16.msra.mxu0 0
      %1196 = vmatprep.mubr.bf16.mxu0 0
      %1197 = vmatmul.mubr.bf16.gmra.mrb[0].mxu0 %v1162
      %v1198 = vpop.f32.mrb[0].mxu0
      %v1199 = vadd.f32 0.0, %v1198
      %v1200 = vpop.f32.mrb[0].mxu0
      %v1201 = vadd.f32 0.0, %v1200
      %v1202 = vpop.f32.mrb[0].mxu0
      %v1203 = vpop.f32.mrb[0].mxu0
      %1204 = vdwg.mxu0
      %v1217 = vunpack.c.l.b16 %v1076
      %v1218 = vunpack.c.h.b16 %v1076
      %v1219 = vunpack.c.l.b16 %v1077
      %v1220 = vunpack.c.h.b16 %v1077
      %v1221 = vunpack.c.l.b16 %v1078
      %v1222 = vunpack.c.h.b16 %v1078
      %v1223 = vunpack.c.l.b16 %v1079
      %v1224 = vunpack.c.h.b16 %v1079
      %v1225 = vunpack.c.l.b16 %v1080
      %v1226 = vunpack.c.h.b16 %v1080
      %v1227 = vunpack.c.l.b16 %v1081
      %v1228 = vunpack.c.h.b16 %v1081
      %v1229 = vunpack.c.l.b16 %v1082
      %v1230 = vunpack.c.h.b16 %v1082
      %v1231 = vunpack.c.l.b16 %v1083
      %v1232 = vunpack.c.h.b16 %v1083
      %v1233 = vunpack.c.l.b16 %v1084
      %v1234 = vunpack.c.h.b16 %v1084
      %v1235 = vunpack.c.l.b16 %v1085
      %v1236 = vunpack.c.h.b16 %v1085
      %v1237 = vunpack.c.l.b16 %v1086
      %v1238 = vunpack.c.h.b16 %v1086
      %v1239 = vunpack.c.l.b16 %v1087
      %v1240 = vunpack.c.h.b16 %v1087
      %v1241 = vpack.c.b16 %v1219, %v1217
      %v1242 = vpack.c.b16 %v1220, %v1218
      %v1243 = vpack.c.b16 %v1223, %v1221
      %v1244 = vpack.c.b16 %v1224, %v1222
      %v1245 = vpack.c.b16 %v1227, %v1225
      %v1246 = vpack.c.b16 %v1228, %v1226
      %v1247 = vpack.c.b16 %v1231, %v1229
      %v1248 = vpack.c.b16 %v1232, %v1230
      %v1249 = vpack.c.b16 %v1235, %v1233
      %v1250 = vpack.c.b16 %v1236, %v1234
      %v1251 = vpack.c.b16 %v1239, %v1237
      %v1252 = vpack.c.b16 %v1240, %v1238
      %v1266 = vsel %vm312, %v1075, 0
      %1268 = vmatprep.subr.bf16.mxu0 %v1242
      %1269 = vmatpush1.bf16.msra.mxu0 %v1241
      %1270 = vmatprep.subr.bf16.mxu0 %v1244
      %1271 = vmatpush1.bf16.msra.mxu0 %v1243
      %1272 = vmatprep.subr.bf16.mxu0 %v1246
      %1273 = vmatpush1.bf16.msra.mxu0 %v1245
      %1274 = vmatprep.subr.bf16.mxu0 %v1248
      %1275 = vmatpush1.bf16.msra.mxu0 %v1247
      %1276 = vmatprep.subr.bf16.mxu0 %v1250
      %1277 = vmatpush1.bf16.msra.mxu0 %v1249
      %1278 = vmatprep.subr.bf16.mxu0 %v1252
      %1279 = vmatpush1.bf16.msra.mxu0 %v1251
      %1280 = vmatprep.subr.bf16.mxu0 0
      %1281 = vmatpush1.bf16.msra.mxu0 0
      %1282 = vmatprep.subr.bf16.mxu0 0
      %1283 = vmatpush1.bf16.msra.mxu0 0
      %1284 = vmatprep.subr.bf16.mxu0 0
      %1285 = vmatpush1.bf16.msra.mxu0 0
      %1286 = vmatprep.subr.bf16.mxu0 0
      %1287 = vmatpush1.bf16.msra.mxu0 0
      %1288 = vmatprep.subr.bf16.mxu0 0
      %1289 = vmatpush1.bf16.msra.mxu0 0
      %1290 = vmatprep.subr.bf16.mxu0 0
      %1291 = vmatpush1.bf16.msra.mxu0 0
      %1292 = vmatprep.subr.bf16.mxu0 0
      %1293 = vmatpush1.bf16.msra.mxu0 0
      %1294 = vmatprep.subr.bf16.mxu0 0
      %1295 = vmatpush1.bf16.msra.mxu0 0
      %1296 = vmatprep.subr.bf16.mxu0 0
      %1297 = vmatpush1.bf16.msra.mxu0 0
      %1298 = vmatprep.subr.bf16.mxu0 0
      %1299 = vmatpush1.bf16.msra.mxu0 0
      %1300 = vmatprep.mubr.bf16.mxu0 0
      %1301 = vmatmul.mubr.bf16.gmra.mrb[0].mxu0 %v1266
      %v1302 = vpop.f32.mrb[0].mxu0
      %v1303 = vadd.f32 %v1199, %v1302
      %v1304 = vpop.f32.mrb[0].mxu0
      %v1305 = vadd.f32 %v1201, %v1304
      %v1306 = vpop.f32.mrb[0].mxu0
      %v1307 = vpop.f32.mrb[0].mxu0
      %1308 = vdwg.mxu0
      %v1309 = vld [vmem:[%s218] sm:$0xf]
      %v1310 = vld [vmem:[%s463] sm:$0xff]
      %v1311 = vld [vmem:[%s463 + $0x8] sm:$0xff]
      %v1312 = vld [vmem:[%s463 + $0x10] sm:$0xff]
      %v1313 = vld [vmem:[%s463 + $0x18] sm:$0xff]
      %v1314 = vld [vmem:[%s463 + $0x20] sm:$0xff]
      %v1315 = vld [vmem:[%s463 + $0x28] sm:$0xff]
      %v1316 = vld [vmem:[%s463 + $0x30] sm:$0xff]
      %v1317 = vld [vmem:[%s463 + $0x38] sm:$0xff]
      %v1318 = vld [vmem:[%s463 + $0x40] sm:$0xff]
      %v1319 = vld [vmem:[%s463 + $0x48] sm:$0xff]
      %v1320 = vld [vmem:[%s463 + $0x50] sm:$0xff]
      %v1321 = vld [vmem:[%s463 + $0x58] sm:$0xff]
      %v1323 = vunpack.c.l.b16 %v1309
      %v1324 = vpack.c.b16 %v1323, %v1323
      %v1326 = vshrl.u32 %v1324, 16
      %v1328 = vshll.u32 %v1324, 16
      %v1330 = vrot.slane %v1328, 1
      %v1331 = vor.u32 %v1326, %v1330
      %v1344 = vunpack.c.l.b16 %v1310
      %v1345 = vunpack.c.h.b16 %v1310
      %v1346 = vunpack.c.l.b16 %v1311
      %v1347 = vunpack.c.h.b16 %v1311
      %v1348 = vunpack.c.l.b16 %v1312
      %v1349 = vunpack.c.h.b16 %v1312
      %v1350 = vunpack.c.l.b16 %v1313
      %v1351 = vunpack.c.h.b16 %v1313
      %v1352 = vunpack.c.l.b16 %v1314
      %v1353 = vunpack.c.h.b16 %v1314
      %v1354 = vunpack.c.l.b16 %v1315
      %v1355 = vunpack.c.h.b16 %v1315
      %v1356 = vunpack.c.l.b16 %v1316
      %v1357 = vunpack.c.h.b16 %v1316
      %v1358 = vunpack.c.l.b16 %v1317
      %v1359 = vunpack.c.h.b16 %v1317
      %v1360 = vunpack.c.l.b16 %v1318
      %v1361 = vunpack.c.h.b16 %v1318
      %v1362 = vunpack.c.l.b16 %v1319
      %v1363 = vunpack.c.h.b16 %v1319
      %v1364 = vunpack.c.l.b16 %v1320
      %v1365 = vunpack.c.h.b16 %v1320
      %v1366 = vunpack.c.l.b16 %v1321
      %v1367 = vunpack.c.h.b16 %v1321
      %v1368 = vpack.c.b16 %v1346, %v1344
      %v1369 = vpack.c.b16 %v1347, %v1345
      %v1370 = vpack.c.b16 %v1350, %v1348
      %v1371 = vpack.c.b16 %v1351, %v1349
      %v1372 = vpack.c.b16 %v1354, %v1352
      %v1373 = vpack.c.b16 %v1355, %v1353
      %v1374 = vpack.c.b16 %v1358, %v1356
      %v1375 = vpack.c.b16 %v1359, %v1357
      %v1376 = vpack.c.b16 %v1362, %v1360
      %v1377 = vpack.c.b16 %v1363, %v1361
      %v1378 = vpack.c.b16 %v1366, %v1364
      %v1379 = vpack.c.b16 %v1367, %v1365
      %v1393 = vsel %vm312, %v1331, 0
      %1395 = vmatprep.subr.bf16.mxu0 %v1369
      %1396 = vmatpush1.bf16.msra.mxu0 %v1368
      %1397 = vmatprep.subr.bf16.mxu0 %v1371
      %1398 = vmatpush1.bf16.msra.mxu0 %v1370
      %1399 = vmatprep.subr.bf16.mxu0 %v1373
      %1400 = vmatpush1.bf16.msra.mxu0 %v1372
      %1401 = vmatprep.subr.bf16.mxu0 %v1375
      %1402 = vmatpush1.bf16.msra.mxu0 %v1374
      %1403 = vmatprep.subr.bf16.mxu0 %v1377
      %1404 = vmatpush1.bf16.msra.mxu0 %v1376
      %1405 = vmatprep.subr.bf16.mxu0 %v1379
      %1406 = vmatpush1.bf16.msra.mxu0 %v1378
      %1407 = vmatprep.subr.bf16.mxu0 0
      %1408 = vmatpush1.bf16.msra.mxu0 0
      %1409 = vmatprep.subr.bf16.mxu0 0
      %1410 = vmatpush1.bf16.msra.mxu0 0
      %1411 = vmatprep.subr.bf16.mxu0 0
      %1412 = vmatpush1.bf16.msra.mxu0 0
      %1413 = vmatprep.subr.bf16.mxu0 0
      %1414 = vmatpush1.bf16.msra.mxu0 0
      %1415 = vmatprep.subr.bf16.mxu0 0
      %1416 = vmatpush1.bf16.msra.mxu0 0
      %1417 = vmatprep.subr.bf16.mxu0 0
      %1418 = vmatpush1.bf16.msra.mxu0 0
      %1419 = vmatprep.subr.bf16.mxu0 0
      %1420 = vmatpush1.bf16.msra.mxu0 0
      %1421 = vmatprep.subr.bf16.mxu0 0
      %1422 = vmatpush1.bf16.msra.mxu0 0
      %1423 = vmatprep.subr.bf16.mxu0 0
      %1424 = vmatpush1.bf16.msra.mxu0 0
      %1425 = vmatprep.subr.bf16.mxu0 0
      %1426 = vmatpush1.bf16.msra.mxu0 0
      %1427 = vmatprep.mubr.bf16.mxu0 0
      %1428 = vmatmul.mubr.bf16.gmra.mrb[0].mxu0 %v1393
      %v1429 = vpop.f32.mrb[0].mxu0
      %v1430 = vadd.f32 0.0, %v1429
      %v1431 = vpop.f32.mrb[0].mxu0
      %v1432 = vadd.f32 0.0, %v1431
      %v1433 = vpop.f32.mrb[0].mxu0
      %v1434 = vpop.f32.mrb[0].mxu0
      %1435 = vdwg.mxu0
      %v1436 = vadd.f32 %v1303, %v1430
      %v1437 = vadd.f32 %v1305, %v1432
      %v1438 = vld [vmem:[%s237] sm:$0xf]
      %v1439 = vld [vmem:[%s584] sm:$0xff]
      %v1440 = vld [vmem:[%s584 + $0x8] sm:$0xff]
      %v1441 = vld [vmem:[%s584 + $0x10] sm:$0xff]
      %v1442 = vld [vmem:[%s584 + $0x18] sm:$0xff]
      %v1443 = vld [vmem:[%s584 + $0x20] sm:$0xff]
      %v1444 = vld [vmem:[%s584 + $0x28] sm:$0xff]
      %v1445 = vld [vmem:[%s584 + $0x30] sm:$0xff]
      %v1446 = vld [vmem:[%s584 + $0x38] sm:$0xff]
      %v1447 = vld [vmem:[%s584 + $0x40] sm:$0xff]
      %v1448 = vld [vmem:[%s584 + $0x48] sm:$0xff]
      %v1449 = vld [vmem:[%s584 + $0x50] sm:$0xff]
      %v1450 = vld [vmem:[%s584 + $0x58] sm:$0xff]
      %v1452 = vunpack.c.l.b16 %v1438
      %v1453 = vpack.c.b16 %v1452, %v1452
      %v1455 = vshrl.u32 %v1453, 16
      %v1457 = vshll.u32 %v1453, 16
      %v1459 = vrot.slane %v1457, 1
      %v1460 = vor.u32 %v1455, %v1459
      %v1473 = vunpack.c.l.b16 %v1439
      %v1474 = vunpack.c.h.b16 %v1439
      %v1475 = vunpack.c.l.b16 %v1440
      %v1476 = vunpack.c.h.b16 %v1440
      %v1477 = vunpack.c.l.b16 %v1441
      %v1478 = vunpack.c.h.b16 %v1441
      %v1479 = vunpack.c.l.b16 %v1442
      %v1480 = vunpack.c.h.b16 %v1442
      %v1481 = vunpack.c.l.b16 %v1443
      %v1482 = vunpack.c.h.b16 %v1443
      %v1483 = vunpack.c.l.b16 %v1444
      %v1484 = vunpack.c.h.b16 %v1444
      %v1485 = vunpack.c.l.b16 %v1445
      %v1486 = vunpack.c.h.b16 %v1445
      %v1487 = vunpack.c.l.b16 %v1446
      %v1488 = vunpack.c.h.b16 %v1446
      %v1489 = vunpack.c.l.b16 %v1447
      %v1490 = vunpack.c.h.b16 %v1447
      %v1491 = vunpack.c.l.b16 %v1448
      %v1492 = vunpack.c.h.b16 %v1448
      %v1493 = vunpack.c.l.b16 %v1449
      %v1494 = vunpack.c.h.b16 %v1449
      %v1495 = vunpack.c.l.b16 %v1450
      %v1496 = vunpack.c.h.b16 %v1450
      %v1497 = vpack.c.b16 %v1475, %v1473
      %v1498 = vpack.c.b16 %v1476, %v1474
      %v1499 = vpack.c.b16 %v1479, %v1477
      %v1500 = vpack.c.b16 %v1480, %v1478
      %v1501 = vpack.c.b16 %v1483, %v1481
      %v1502 = vpack.c.b16 %v1484, %v1482
      %v1503 = vpack.c.b16 %v1487, %v1485
      %v1504 = vpack.c.b16 %v1488, %v1486
      %v1505 = vpack.c.b16 %v1491, %v1489
      %v1506 = vpack.c.b16 %v1492, %v1490
      %v1507 = vpack.c.b16 %v1495, %v1493
      %v1508 = vpack.c.b16 %v1496, %v1494
      %v1522 = vsel %vm312, %v1460, 0
      %1524 = vmatprep.subr.bf16.mxu0 %v1498
      %1525 = vmatpush1.bf16.msra.mxu0 %v1497
      %1526 = vmatprep.subr.bf16.mxu0 %v1500
      %1527 = vmatpush1.bf16.msra.mxu0 %v1499
      %1528 = vmatprep.subr.bf16.mxu0 %v1502
      %1529 = vmatpush1.bf16.msra.mxu0 %v1501
      %1530 = vmatprep.subr.bf16.mxu0 %v1504
      %1531 = vmatpush1.bf16.msra.mxu0 %v1503
      %1532 = vmatprep.subr.bf16.mxu0 %v1506
      %1533 = vmatpush1.bf16.msra.mxu0 %v1505
      %1534 = vmatprep.subr.bf16.mxu0 %v1508
      %1535 = vmatpush1.bf16.msra.mxu0 %v1507
      %1536 = vmatprep.subr.bf16.mxu0 0
      %1537 = vmatpush1.bf16.msra.mxu0 0
      %1538 = vmatprep.subr.bf16.mxu0 0
      %1539 = vmatpush1.bf16.msra.mxu0 0
      %1540 = vmatprep.subr.bf16.mxu0 0
      %1541 = vmatpush1.bf16.msra.mxu0 0
      %1542 = vmatprep.subr.bf16.mxu0 0
      %1543 = vmatpush1.bf16.msra.mxu0 0
      %1544 = vmatprep.subr.bf16.mxu0 0
      %1545 = vmatpush1.bf16.msra.mxu0 0
      %1546 = vmatprep.subr.bf16.mxu0 0
      %1547 = vmatpush1.bf16.msra.mxu0 0
      %1548 = vmatprep.subr.bf16.mxu0 0
      %1549 = vmatpush1.bf16.msra.mxu0 0
      %1550 = vmatprep.subr.bf16.mxu0 0
      %1551 = vmatpush1.bf16.msra.mxu0 0
      %1552 = vmatprep.subr.bf16.mxu0 0
      %1553 = vmatpush1.bf16.msra.mxu0 0
      %1554 = vmatprep.subr.bf16.mxu0 0
      %1555 = vmatpush1.bf16.msra.mxu0 0
      %1556 = vmatprep.mubr.bf16.mxu0 0
      %1557 = vmatmul.mubr.bf16.gmra.mrb[0].mxu0 %v1522
      %v1558 = vpop.f32.mrb[0].mxu0
      %v1559 = vadd.f32 0.0, %v1558
      %v1560 = vpop.f32.mrb[0].mxu0
      %v1561 = vadd.f32 0.0, %v1560
      %v1562 = vpop.f32.mrb[0].mxu0
      %v1563 = vpop.f32.mrb[0].mxu0
      %1564 = vdwg.mxu0
      %v1565 = vadd.f32 %v1436, %v1559
      %v1566 = vadd.f32 %v1437, %v1561
      %v1567 = vld [vmem:[%s703] sm:$0xff]
      %v1568 = vld [vmem:[%s703 + $0x8] sm:$0xff]
      %v1569 = vld [vmem:[%s703 + $0x10] sm:$0xff]
      %v1570 = vld [vmem:[%s703 + $0x18] sm:$0xff]
      %v1571 = vld [vmem:[%s703 + $0x20] sm:$0xff]
      %v1572 = vld [vmem:[%s703 + $0x28] sm:$0xff]
      %v1573 = vld [vmem:[%s703 + $0x30] sm:$0xff]
      %v1574 = vld [vmem:[%s703 + $0x38] sm:$0xff]
      %v1575 = vld [vmem:[%s703 + $0x40] sm:$0xff]
      %v1576 = vld [vmem:[%s703 + $0x48] sm:$0xff]
      %v1577 = vld [vmem:[%s703 + $0x50] sm:$0xff]
      %v1578 = vld [vmem:[%s703 + $0x58] sm:$0xff]
      %v1580 = vunpack.c.l.b16 %v1075
      %v1581 = vpack.c.b16 %v1580, %v1580
      %v1583 = vshrl.u32 %v1581, 16
      %v1585 = vshll.u32 %v1581, 16
      %v1587 = vrot.slane %v1585, 1
      %v1588 = vor.u32 %v1583, %v1587
      %v1601 = vunpack.c.l.b16 %v1567
      %v1602 = vunpack.c.h.b16 %v1567
      %v1603 = vunpack.c.l.b16 %v1568
      %v1604 = vunpack.c.h.b16 %v1568
      %v1605 = vunpack.c.l.b16 %v1569
      %v1606 = vunpack.c.h.b16 %v1569
      %v1607 = vunpack.c.l.b16 %v1570
      %v1608 = vunpack.c.h.b16 %v1570
      %v1609 = vunpack.c.l.b16 %v1571
      %v1610 = vunpack.c.h.b16 %v1571
      %v1611 = vunpack.c.l.b16 %v1572
      %v1612 = vunpack.c.h.b16 %v1572
      %v1613 = vunpack.c.l.b16 %v1573
      %v1614 = vunpack.c.h.b16 %v1573
      %v1615 = vunpack.c.l.b16 %v1574
      %v1616 = vunpack.c.h.b16 %v1574
      %v1617 = vunpack.c.l.b16 %v1575
      %v1618 = vunpack.c.h.b16 %v1575
      %v1619 = vunpack.c.l.b16 %v1576
      %v1620 = vunpack.c.h.b16 %v1576
      %v1621 = vunpack.c.l.b16 %v1577
      %v1622 = vunpack.c.h.b16 %v1577
      %v1623 = vunpack.c.l.b16 %v1578
      %v1624 = vunpack.c.h.b16 %v1578
      %v1625 = vpack.c.b16 %v1603, %v1601
      %v1626 = vpack.c.b16 %v1604, %v1602
      %v1627 = vpack.c.b16 %v1607, %v1605
      %v1628 = vpack.c.b16 %v1608, %v1606
      %v1629 = vpack.c.b16 %v1611, %v1609
      %v1630 = vpack.c.b16 %v1612, %v1610
      %v1631 = vpack.c.b16 %v1615, %v1613
      %v1632 = vpack.c.b16 %v1616, %v1614
      %v1633 = vpack.c.b16 %v1619, %v1617
      %v1634 = vpack.c.b16 %v1620, %v1618
      %v1635 = vpack.c.b16 %v1623, %v1621
      %v1636 = vpack.c.b16 %v1624, %v1622
      %v1650 = vsel %vm312, %v1588, 0
      %1652 = vmatprep.subr.bf16.mxu0 %v1626
      %1653 = vmatpush1.bf16.msra.mxu0 %v1625
      %1654 = vmatprep.subr.bf16.mxu0 %v1628
      %1655 = vmatpush1.bf16.msra.mxu0 %v1627
      %1656 = vmatprep.subr.bf16.mxu0 %v1630
      %1657 = vmatpush1.bf16.msra.mxu0 %v1629
      %1658 = vmatprep.subr.bf16.mxu0 %v1632
      %1659 = vmatpush1.bf16.msra.mxu0 %v1631
      %1660 = vmatprep.subr.bf16.mxu0 %v1634
      %1661 = vmatpush1.bf16.msra.mxu0 %v1633
      %1662 = vmatprep.subr.bf16.mxu0 %v1636
      %1663 = vmatpush1.bf16.msra.mxu0 %v1635
      %1664 = vmatprep.subr.bf16.mxu0 0
      %1665 = vmatpush1.bf16.msra.mxu0 0
      %1666 = vmatprep.subr.bf16.mxu0 0
      %1667 = vmatpush1.bf16.msra.mxu0 0
      %1668 = vmatprep.subr.bf16.mxu0 0
      %1669 = vmatpush1.bf16.msra.mxu0 0
      %1670 = vmatprep.subr.bf16.mxu0 0
      %1671 = vmatpush1.bf16.msra.mxu0 0
      %1672 = vmatprep.subr.bf16.mxu0 0
      %1673 = vmatpush1.bf16.msra.mxu0 0
      %1674 = vmatprep.subr.bf16.mxu0 0
      %1675 = vmatpush1.bf16.msra.mxu0 0
      %1676 = vmatprep.subr.bf16.mxu0 0
      %1677 = vmatpush1.bf16.msra.mxu0 0
      %1678 = vmatprep.subr.bf16.mxu0 0
      %1679 = vmatpush1.bf16.msra.mxu0 0
      %1680 = vmatprep.subr.bf16.mxu0 0
      %1681 = vmatpush1.bf16.msra.mxu0 0
      %1682 = vmatprep.subr.bf16.mxu0 0
      %1683 = vmatpush1.bf16.msra.mxu0 0
      %1684 = vmatprep.mubr.bf16.mxu0 0
      %1685 = vmatmul.mubr.bf16.gmra.mrb[0].mxu0 %v1650
      %v1686 = vpop.f32.mrb[0].mxu0
      %v1687 = vadd.f32 0.0, %v1686
      %v1688 = vpop.f32.mrb[0].mxu0
      %v1689 = vadd.f32 0.0, %v1688
      %v1690 = vpop.f32.mrb[0].mxu0
      %v1691 = vpop.f32.mrb[0].mxu0
      %1692 = vdwg.mxu0
      %v1693 = vadd.f32 %v1565, %v1687
      %v1694 = vadd.f32 %v1566, %v1689
      %v1695 = vmax.f32 %v1693, %v1694
      %1696 = vmatprep.subr.bf16.mxu0 %v1138
      %1697 = vmatpush1.bf16.msra.mxu0 %v1137
      %1698 = vmatprep.subr.bf16.mxu0 %v1140
      %1699 = vmatpush1.bf16.msra.mxu0 %v1139
      %1700 = vmatprep.subr.bf16.mxu0 %v1142
      %1701 = vmatpush1.bf16.msra.mxu0 %v1141
      %1702 = vmatprep.subr.bf16.mxu0 %v1144
      %1703 = vmatpush1.bf16.msra.mxu0 %v1143
      %1704 = vmatprep.subr.bf16.mxu0 %v1146
      %1705 = vmatpush1.bf16.msra.mxu0 %v1145
      %1706 = vmatprep.subr.bf16.mxu0 %v1148
      %1707 = vmatpush1.bf16.msra.mxu0 %v1147
      %1708 = vmatprep.subr.bf16.mxu0 0
      %1709 = vmatpush1.bf16.msra.mxu0 0
      %1710 = vmatprep.subr.bf16.mxu0 0
      %1711 = vmatpush1.bf16.msra.mxu0 0
      %1712 = vmatprep.subr.bf16.mxu0 0
      %1713 = vmatpush1.bf16.msra.mxu0 0
      %1714 = vmatprep.subr.bf16.mxu0 0
      %1715 = vmatpush1.bf16.msra.mxu0 0
      %1716 = vmatprep.subr.bf16.mxu0 0
      %1717 = vmatpush1.bf16.msra.mxu0 0
      %1718 = vmatprep.subr.bf16.mxu0 0
      %1719 = vmatpush1.bf16.msra.mxu0 0
      %1720 = vmatprep.subr.bf16.mxu0 0
      %1721 = vmatpush1.bf16.msra.mxu0 0
      %1722 = vmatprep.subr.bf16.mxu0 0
      %1723 = vmatpush1.bf16.msra.mxu0 0
      %1724 = vmatprep.subr.bf16.mxu0 0
      %1725 = vmatpush1.bf16.msra.mxu0 0
      %1726 = vmatprep.subr.bf16.mxu0 0
      %1727 = vmatpush1.bf16.msra.mxu0 0
      %1728 = vmatprep.mubr.bf16.mxu0 0
      %1729 = vmatmul.mubr.bf16.gmra.mrb[0].mxu0 %v1393
      %v1730 = vpop.f32.mrb[0].mxu0
      %v1731 = vadd.f32 0.0, %v1730
      %v1732 = vpop.f32.mrb[0].mxu0
      %v1733 = vadd.f32 0.0, %v1732
      %v1734 = vpop.f32.mrb[0].mxu0
      %v1735 = vpop.f32.mrb[0].mxu0
      %1736 = vdwg.mxu0
      %1737 = vmatprep.subr.bf16.mxu0 %v1242
      %1738 = vmatpush1.bf16.msra.mxu0 %v1241
      %1739 = vmatprep.subr.bf16.mxu0 %v1244
      %1740 = vmatpush1.bf16.msra.mxu0 %v1243
      %1741 = vmatprep.subr.bf16.mxu0 %v1246
      %1742 = vmatpush1.bf16.msra.mxu0 %v1245
      %1743 = vmatprep.subr.bf16.mxu0 %v1248
      %1744 = vmatpush1.bf16.msra.mxu0 %v1247
      %1745 = vmatprep.subr.bf16.mxu0 %v1250
      %1746 = vmatpush1.bf16.msra.mxu0 %v1249
      %1747 = vmatprep.subr.bf16.mxu0 %v1252
      %1748 = vmatpush1.bf16.msra.mxu0 %v1251
      %1749 = vmatprep.subr.bf16.mxu0 0
      %1750 = vmatpush1.bf16.msra.mxu0 0
      %1751 = vmatprep.subr.bf16.mxu0 0
      %1752 = vmatpush1.bf16.msra.mxu0 0
      %1753 = vmatprep.subr.bf16.mxu0 0
      %1754 = vmatpush1.bf16.msra.mxu0 0
      %1755 = vmatprep.subr.bf16.mxu0 0
      %1756 = vmatpush1.bf16.msra.mxu0 0
      %1757 = vmatprep.subr.bf16.mxu0 0
      %1758 = vmatpush1.bf16.msra.mxu0 0
      %1759 = vmatprep.subr.bf16.mxu0 0
      %1760 = vmatpush1.bf16.msra.mxu0 0
      %1761 = vmatprep.subr.bf16.mxu0 0
      %1762 = vmatpush1.bf16.msra.mxu0 0
      %1763 = vmatprep.subr.bf16.mxu0 0
      %1764 = vmatpush1.bf16.msra.mxu0 0
      %1765 = vmatprep.subr.bf16.mxu0 0
      %1766 = vmatpush1.bf16.msra.mxu0 0
      %1767 = vmatprep.subr.bf16.mxu0 0
      %1768 = vmatpush1.bf16.msra.mxu0 0
      %1769 = vmatprep.mubr.bf16.mxu0 0
      %1770 = vmatmul.mubr.bf16.gmra.mrb[0].mxu0 %v1162
      %v1771 = vpop.f32.mrb[0].mxu0
      %v1772 = vadd.f32 %v1731, %v1771
      %v1773 = vpop.f32.mrb[0].mxu0
      %v1774 = vadd.f32 %v1733, %v1773
      %v1775 = vpop.f32.mrb[0].mxu0
      %v1776 = vpop.f32.mrb[0].mxu0
      %1777 = vdwg.mxu0
      %1778 = vmatprep.subr.bf16.mxu0 %v1369
      %1779 = vmatpush1.bf16.msra.mxu0 %v1368
      %1780 = vmatprep.subr.bf16.mxu0 %v1371
      %1781 = vmatpush1.bf16.msra.mxu0 %v1370
      %1782 = vmatprep.subr.bf16.mxu0 %v1373
      %1783 = vmatpush1.bf16.msra.mxu0 %v1372
      %1784 = vmatprep.subr.bf16.mxu0 %v1375
      %1785 = vmatpush1.bf16.msra.mxu0 %v1374
      %1786 = vmatprep.subr.bf16.mxu0 %v1377
      %1787 = vmatpush1.bf16.msra.mxu0 %v1376
      %1788 = vmatprep.subr.bf16.mxu0 %v1379
      %1789 = vmatpush1.bf16.msra.mxu0 %v1378
      %1790 = vmatprep.subr.bf16.mxu0 0
      %1791 = vmatpush1.bf16.msra.mxu0 0
      %1792 = vmatprep.subr.bf16.mxu0 0
      %1793 = vmatpush1.bf16.msra.mxu0 0
      %1794 = vmatprep.subr.bf16.mxu0 0
      %1795 = vmatpush1.bf16.msra.mxu0 0
      %1796 = vmatprep.subr.bf16.mxu0 0
      %1797 = vmatpush1.bf16.msra.mxu0 0
      %1798 = vmatprep.subr.bf16.mxu0 0
      %1799 = vmatpush1.bf16.msra.mxu0 0
      %1800 = vmatprep.subr.bf16.mxu0 0
      %1801 = vmatpush1.bf16.msra.mxu0 0
      %1802 = vmatprep.subr.bf16.mxu0 0
      %1803 = vmatpush1.bf16.msra.mxu0 0
      %1804 = vmatprep.subr.bf16.mxu0 0
      %1805 = vmatpush1.bf16.msra.mxu0 0
      %1806 = vmatprep.subr.bf16.mxu0 0
      %1807 = vmatpush1.bf16.msra.mxu0 0
      %1808 = vmatprep.subr.bf16.mxu0 0
      %1809 = vmatpush1.bf16.msra.mxu0 0
      %1810 = vmatprep.mubr.bf16.mxu0 0
      %1811 = vmatmul.mubr.bf16.gmra.mrb[0].mxu0 %v1522
      %v1812 = vpop.f32.mrb[0].mxu0
      %v1813 = vadd.f32 0.0, %v1812
      %v1814 = vpop.f32.mrb[0].mxu0
      %v1815 = vadd.f32 0.0, %v1814
      %v1816 = vpop.f32.mrb[0].mxu0
      %v1817 = vpop.f32.mrb[0].mxu0
      %1818 = vdwg.mxu0
      %v1819 = vadd.f32 %v1772, %v1813
      %v1820 = vadd.f32 %v1774, %v1815
      %1821 = vmatprep.subr.bf16.mxu0 %v1498
      %1822 = vmatpush1.bf16.msra.mxu0 %v1497
      %1823 = vmatprep.subr.bf16.mxu0 %v1500
      %1824 = vmatpush1.bf16.msra.mxu0 %v1499
      %1825 = vmatprep.subr.bf16.mxu0 %v1502
      %1826 = vmatpush1.bf16.msra.mxu0 %v1501
      %1827 = vmatprep.subr.bf16.mxu0 %v1504
      %1828 = vmatpush1.bf16.msra.mxu0 %v1503
      %1829 = vmatprep.subr.bf16.mxu0 %v1506
      %1830 = vmatpush1.bf16.msra.mxu0 %v1505
      %1831 = vmatprep.subr.bf16.mxu0 %v1508
      %1832 = vmatpush1.bf16.msra.mxu0 %v1507
      %1833 = vmatprep.subr.bf16.mxu0 0
      %1834 = vmatpush1.bf16.msra.mxu0 0
      %1835 = vmatprep.subr.bf16.mxu0 0
      %1836 = vmatpush1.bf16.msra.mxu0 0
      %1837 = vmatprep.subr.bf16.mxu0 0
      %1838 = vmatpush1.bf16.msra.mxu0 0
      %1839 = vmatprep.subr.bf16.mxu0 0
      %1840 = vmatpush1.bf16.msra.mxu0 0
      %1841 = vmatprep.subr.bf16.mxu0 0
      %1842 = vmatpush1.bf16.msra.mxu0 0
      %1843 = vmatprep.subr.bf16.mxu0 0
      %1844 = vmatpush1.bf16.msra.mxu0 0
      %1845 = vmatprep.subr.bf16.mxu0 0
      %1846 = vmatpush1.bf16.msra.mxu0 0
      %1847 = vmatprep.subr.bf16.mxu0 0
      %1848 = vmatpush1.bf16.msra.mxu0 0
      %1849 = vmatprep.subr.bf16.mxu0 0
      %1850 = vmatpush1.bf16.msra.mxu0 0
      %1851 = vmatprep.subr.bf16.mxu0 0
      %1852 = vmatpush1.bf16.msra.mxu0 0
      %1853 = vmatprep.mubr.bf16.mxu0 0
      %1854 = vmatmul.mubr.bf16.gmra.mrb[0].mxu0 %v1650
      %v1855 = vpop.f32.mrb[0].mxu0
      %v1856 = vadd.f32 0.0, %v1855
      %v1857 = vpop.f32.mrb[0].mxu0
      %v1858 = vadd.f32 0.0, %v1857
      %v1859 = vpop.f32.mrb[0].mxu0
      %v1860 = vpop.f32.mrb[0].mxu0
      %1861 = vdwg.mxu0
      %v1862 = vadd.f32 %v1819, %v1856
      %v1863 = vadd.f32 %v1820, %v1858
      %v1865 = vunpack.c.l.b16 %v1088
      %v1866 = vpack.c.b16 %v1865, %v1865
      %v1868 = vshrl.u32 %v1866, 16
      %v1870 = vshll.u32 %v1866, 16
      %v1872 = vrot.slane %v1870, 1
      %v1873 = vor.u32 %v1868, %v1872
      %v1875 = vsel %vm312, %v1873, 0
      %1877 = vmatprep.subr.bf16.mxu0 %v1626
      %1878 = vmatpush1.bf16.msra.mxu0 %v1625
      %1879 = vmatprep.subr.bf16.mxu0 %v1628
      %1880 = vmatpush1.bf16.msra.mxu0 %v1627
      %1881 = vmatprep.subr.bf16.mxu0 %v1630
      %1882 = vmatpush1.bf16.msra.mxu0 %v1629
      %1883 = vmatprep.subr.bf16.mxu0 %v1632
      %1884 = vmatpush1.bf16.msra.mxu0 %v1631
      %1885 = vmatprep.subr.bf16.mxu0 %v1634
      %1886 = vmatpush1.bf16.msra.mxu0 %v1633
      %1887 = vmatprep.subr.bf16.mxu0 %v1636
      %1888 = vmatpush1.bf16.msra.mxu0 %v1635
      %1889 = vmatprep.subr.bf16.mxu0 0
      %1890 = vmatpush1.bf16.msra.mxu0 0
      %1891 = vmatprep.subr.bf16.mxu0 0
      %1892 = vmatpush1.bf16.msra.mxu0 0
      %1893 = vmatprep.subr.bf16.mxu0 0
      %1894 = vmatpush1.bf16.msra.mxu0 0
      %1895 = vmatprep.subr.bf16.mxu0 0
      %1896 = vmatpush1.bf16.msra.mxu0 0
      %1897 = vmatprep.subr.bf16.mxu0 0
      %1898 = vmatpush1.bf16.msra.mxu0 0
      %1899 = vmatprep.subr.bf16.mxu0 0
      %1900 = vmatpush1.bf16.msra.mxu0 0
      %1901 = vmatprep.subr.bf16.mxu0 0
      %1902 = vmatpush1.bf16.msra.mxu0 0
      %1903 = vmatprep.subr.bf16.mxu0 0
      %1904 = vmatpush1.bf16.msra.mxu0 0
      %1905 = vmatprep.subr.bf16.mxu0 0
      %1906 = vmatpush1.bf16.msra.mxu0 0
      %1907 = vmatprep.subr.bf16.mxu0 0
      %1908 = vmatpush1.bf16.msra.mxu0 0
      %1909 = vmatprep.mubr.bf16.mxu0 0
      %1910 = vmatmul.mubr.bf16.gmra.mrb[0].mxu0 %v1875
      %v1911 = vpop.f32.mrb[0].mxu0
      %v1912 = vadd.f32 0.0, %v1911
      %v1913 = vpop.f32.mrb[0].mxu0
      %v1914 = vadd.f32 0.0, %v1913
      %v1915 = vpop.f32.mrb[0].mxu0
      %v1916 = vpop.f32.mrb[0].mxu0
      %1917 = vdwg.mxu0
      %v1918 = vadd.f32 %v1862, %v1912
      %v1919 = vadd.f32 %v1863, %v1914
      %v1920 = vmax.f32 %v1918, %v1919
      %v1921 = vmax.f32 %v1695, %v1920
      %v1922 = vld [vmem:[%s2] sm:$0x1]
      %v1924 = vlaneseq
      %v1925 = vshrl.u32 %v1924, 7
      %v1926 = vsub.s32 0, %v1925
      %v1927 = vrot.slane %v1922, %v1926
      %v1929 = vadd.f32 %v1921, %v1927
      %v1930 = vmax.f32 %v1929, 0.0
      %v1931 = vpack.c.bf16 %v1930, %v1930
      %s1932 = scalar_lea.vmem [#allocation2], 4
      %v1933 = vld [vmem:[%s1932] sm:$0xf]
      %v1934 = vsel %vm1071, %v1931, %v1933
      %1935 = vst [vmem:[%s1932] sm:$0xf] %v1934
      %v1936 = vld [vmem:[#allocation2] sm:$0x7]
      %v1937 = vld [vmem:[%s3] sm:$0xff]
      %v1938 = vld [vmem:[%s3 + $0x8] sm:$0xff]
      %v1939 = vld [vmem:[%s3 + $0x10] sm:$0xff]
      %v1940 = vld [vmem:[%s3 + $0x18] sm:$0xff]
      %v1941 = vld [vmem:[%s3 + $0x20] sm:$0xff]
      %v1942 = vld [vmem:[%s3 + $0x28] sm:$0xff]
      %v1943 = vld [vmem:[%s3 + $0x30] sm:$0xff]
      %v1944 = vld [vmem:[%s3 + $0x38] sm:$0xff]
      %v1945 = vld [vmem:[%s3 + $0x40] sm:$0xff]
      %v1946 = vld [vmem:[%s3 + $0x48] sm:$0xff]
      %v1947 = vld [vmem:[%s3 + $0x50] sm:$0xff]
      %v1948 = vld [vmem:[%s3 + $0x58] sm:$0xff]
      %v1949 = vld [vmem:[%s3 + $0x60] sm:$0xff]
      %v1950 = vld [vmem:[%s3 + $0x68] sm:$0xff]
      %v1951 = vld [vmem:[%s3 + $0x70] sm:$0xff]
      %v1952 = vld [vmem:[%s3 + $0x78] sm:$0xff]
      %v1953 = vld [vmem:[%s1932] sm:$0x7]
      %s1954 = scalar_lea.vmem %s3, 128
      %v1955 = vld [vmem:[%s1954] sm:$0xff]
      %v1956 = vld [vmem:[%s1954 + $0x8] sm:$0xff]
      %v1957 = vld [vmem:[%s1954 + $0x10] sm:$0xff]
      %v1958 = vld [vmem:[%s1954 + $0x18] sm:$0xff]
      %v1959 = vld [vmem:[%s1954 + $0x20] sm:$0xff]
      %v1960 = vld [vmem:[%s1954 + $0x28] sm:$0xff]
      %v1961 = vld [vmem:[%s1954 + $0x30] sm:$0xff]
      %v1962 = vld [vmem:[%s1954 + $0x38] sm:$0xff]
      %v1963 = vld [vmem:[%s1954 + $0x40] sm:$0xff]
      %v1964 = vld [vmem:[%s1954 + $0x48] sm:$0xff]
      %v1965 = vld [vmem:[%s1954 + $0x50] sm:$0xff]
      %v1966 = vld [vmem:[%s1954 + $0x58] sm:$0xff]
      %v1967 = vld [vmem:[%s1954 + $0x60] sm:$0xff]
      %v1968 = vld [vmem:[%s1954 + $0x68] sm:$0xff]
      %v1969 = vld [vmem:[%s1954 + $0x70] sm:$0xff]
      %v1970 = vld [vmem:[%s1954 + $0x78] sm:$0xff]
      %v1987 = vunpack.c.l.b16 %v1955
      %v1988 = vunpack.c.h.b16 %v1955
      %v1989 = vunpack.c.l.b16 %v1956
      %v1990 = vunpack.c.h.b16 %v1956
      %v1991 = vunpack.c.l.b16 %v1957
      %v1992 = vunpack.c.h.b16 %v1957
      %v1993 = vunpack.c.l.b16 %v1958
      %v1994 = vunpack.c.h.b16 %v1958
      %v1995 = vunpack.c.l.b16 %v1959
      %v1996 = vunpack.c.h.b16 %v1959
      %v1997 = vunpack.c.l.b16 %v1960
      %v1998 = vunpack.c.h.b16 %v1960
      %v1999 = vunpack.c.l.b16 %v1961
      %v2000 = vunpack.c.h.b16 %v1961
      %v2001 = vunpack.c.l.b16 %v1962
      %v2002 = vunpack.c.h.b16 %v1962
      %v2003 = vunpack.c.l.b16 %v1963
      %v2004 = vunpack.c.h.b16 %v1963
      %v2005 = vunpack.c.l.b16 %v1964
      %v2006 = vunpack.c.h.b16 %v1964
      %v2007 = vunpack.c.l.b16 %v1965
      %v2008 = vunpack.c.h.b16 %v1965
      %v2009 = vunpack.c.l.b16 %v1966
      %v2010 = vunpack.c.h.b16 %v1966
      %v2011 = vunpack.c.l.b16 %v1967
      %v2012 = vunpack.c.h.b16 %v1967
      %v2013 = vunpack.c.l.b16 %v1968
      %v2014 = vunpack.c.h.b16 %v1968
      %v2015 = vunpack.c.l.b16 %v1969
      %v2016 = vunpack.c.h.b16 %v1969
      %v2017 = vunpack.c.l.b16 %v1970
      %v2018 = vunpack.c.h.b16 %v1970
      %v2019 = vpack.c.b16 %v1989, %v1987
      %v2020 = vpack.c.b16 %v1990, %v1988
      %v2021 = vpack.c.b16 %v1993, %v1991
      %v2022 = vpack.c.b16 %v1994, %v1992
      %v2023 = vpack.c.b16 %v1997, %v1995
      %v2024 = vpack.c.b16 %v1998, %v1996
      %v2025 = vpack.c.b16 %v2001, %v1999
      %v2026 = vpack.c.b16 %v2002, %v2000
      %v2027 = vpack.c.b16 %v2005, %v2003
      %v2028 = vpack.c.b16 %v2006, %v2004
      %v2029 = vpack.c.b16 %v2009, %v2007
      %v2030 = vpack.c.b16 %v2010, %v2008
      %v2031 = vpack.c.b16 %v2013, %v2011
      %v2032 = vpack.c.b16 %v2014, %v2012
      %v2033 = vpack.c.b16 %v2017, %v2015
      %v2034 = vpack.c.b16 %v2018, %v2016
      %2051 = vmatprep.subr.bf16.mxu0 %v2020
      %2052 = vmatpush1.bf16.msra.mxu0 %v2019
      %2053 = vmatprep.subr.bf16.mxu0 %v2022
      %2054 = vmatpush1.bf16.msra.mxu0 %v2021
      %2055 = vmatprep.subr.bf16.mxu0 %v2024
      %2056 = vmatpush1.bf16.msra.mxu0 %v2023
      %2057 = vmatprep.subr.bf16.mxu0 %v2026
      %2058 = vmatpush1.bf16.msra.mxu0 %v2025
      %2059 = vmatprep.subr.bf16.mxu0 %v2028
      %2060 = vmatpush1.bf16.msra.mxu0 %v2027
      %2061 = vmatprep.subr.bf16.mxu0 %v2030
      %2062 = vmatpush1.bf16.msra.mxu0 %v2029
      %2063 = vmatprep.subr.bf16.mxu0 %v2032
      %2064 = vmatpush1.bf16.msra.mxu0 %v2031
      %2065 = vmatprep.subr.bf16.mxu0 %v2034
      %2066 = vmatpush1.bf16.msra.mxu0 %v2033
      %2067 = vmatprep.subr.bf16.mxu0 0
      %2068 = vmatpush1.bf16.msra.mxu0 0
      %2069 = vmatprep.subr.bf16.mxu0 0
      %2070 = vmatpush1.bf16.msra.mxu0 0
      %2071 = vmatprep.subr.bf16.mxu0 0
      %2072 = vmatpush1.bf16.msra.mxu0 0
      %2073 = vmatprep.subr.bf16.mxu0 0
      %2074 = vmatpush1.bf16.msra.mxu0 0
      %2075 = vmatprep.subr.bf16.mxu0 0
      %2076 = vmatpush1.bf16.msra.mxu0 0
      %2077 = vmatprep.subr.bf16.mxu0 0
      %2078 = vmatpush1.bf16.msra.mxu0 0
      %2079 = vmatprep.subr.bf16.mxu0 0
      %2080 = vmatpush1.bf16.msra.mxu0 0
      %2081 = vmatprep.subr.bf16.mxu0 0
      %2082 = vmatpush1.bf16.msra.mxu0 0
      %2083 = vmatprep.mubr.bf16.mxu0 0
      %2084 = vmatmul.mubr.bf16.gmra.mrb[0].mxu0 %v1953
      %v2085 = vpop.f32.mrb[0].mxu0
      %v2086 = vadd.f32 0.0, %v2085
      %v2087 = vpop.f32.mrb[0].mxu0
      %v2088 = vadd.f32 0.0, %v2087
      %v2089 = vpop.f32.mrb[0].mxu0
      %v2090 = vpop.f32.mrb[0].mxu0
      %2091 = vdwg.mxu0
      %v2108 = vunpack.c.l.b16 %v1937
      %v2109 = vunpack.c.h.b16 %v1937
      %v2110 = vunpack.c.l.b16 %v1938
      %v2111 = vunpack.c.h.b16 %v1938
      %v2112 = vunpack.c.l.b16 %v1939
      %v2113 = vunpack.c.h.b16 %v1939
      %v2114 = vunpack.c.l.b16 %v1940
      %v2115 = vunpack.c.h.b16 %v1940
      %v2116 = vunpack.c.l.b16 %v1941
      %v2117 = vunpack.c.h.b16 %v1941
      %v2118 = vunpack.c.l.b16 %v1942
      %v2119 = vunpack.c.h.b16 %v1942
      %v2120 = vunpack.c.l.b16 %v1943
      %v2121 = vunpack.c.h.b16 %v1943
      %v2122 = vunpack.c.l.b16 %v1944
      %v2123 = vunpack.c.h.b16 %v1944
      %v2124 = vunpack.c.l.b16 %v1945
      %v2125 = vunpack.c.h.b16 %v1945
      %v2126 = vunpack.c.l.b16 %v1946
      %v2127 = vunpack.c.h.b16 %v1946
      %v2128 = vunpack.c.l.b16 %v1947
      %v2129 = vunpack.c.h.b16 %v1947
      %v2130 = vunpack.c.l.b16 %v1948
      %v2131 = vunpack.c.h.b16 %v1948
      %v2132 = vunpack.c.l.b16 %v1949
      %v2133 = vunpack.c.h.b16 %v1949
      %v2134 = vunpack.c.l.b16 %v1950
      %v2135 = vunpack.c.h.b16 %v1950
      %v2136 = vunpack.c.l.b16 %v1951
      %v2137 = vunpack.c.h.b16 %v1951
      %v2138 = vunpack.c.l.b16 %v1952
      %v2139 = vunpack.c.h.b16 %v1952
      %v2140 = vpack.c.b16 %v2110, %v2108
      %v2141 = vpack.c.b16 %v2111, %v2109
      %v2142 = vpack.c.b16 %v2114, %v2112
      %v2143 = vpack.c.b16 %v2115, %v2113
      %v2144 = vpack.c.b16 %v2118, %v2116
      %v2145 = vpack.c.b16 %v2119, %v2117
      %v2146 = vpack.c.b16 %v2122, %v2120
      %v2147 = vpack.c.b16 %v2123, %v2121
      %v2148 = vpack.c.b16 %v2126, %v2124
      %v2149 = vpack.c.b16 %v2127, %v2125
      %v2150 = vpack.c.b16 %v2130, %v2128
      %v2151 = vpack.c.b16 %v2131, %v2129
      %v2152 = vpack.c.b16 %v2134, %v2132
      %v2153 = vpack.c.b16 %v2135, %v2133
      %v2154 = vpack.c.b16 %v2138, %v2136
      %v2155 = vpack.c.b16 %v2139, %v2137
      %2172 = vmatprep.subr.bf16.mxu0 %v2141
      %2173 = vmatpush1.bf16.msra.mxu0 %v2140
      %2174 = vmatprep.subr.bf16.mxu0 %v2143
      %2175 = vmatpush1.bf16.msra.mxu0 %v2142
      %2176 = vmatprep.subr.bf16.mxu0 %v2145
      %2177 = vmatpush1.bf16.msra.mxu0 %v2144
      %2178 = vmatprep.subr.bf16.mxu0 %v2147
      %2179 = vmatpush1.bf16.msra.mxu0 %v2146
      %2180 = vmatprep.subr.bf16.mxu0 %v2149
      %2181 = vmatpush1.bf16.msra.mxu0 %v2148
      %2182 = vmatprep.subr.bf16.mxu0 %v2151
      %2183 = vmatpush1.bf16.msra.mxu0 %v2150
      %2184 = vmatprep.subr.bf16.mxu0 %v2153
      %2185 = vmatpush1.bf16.msra.mxu0 %v2152
      %2186 = vmatprep.subr.bf16.mxu0 %v2155
      %2187 = vmatpush1.bf16.msra.mxu0 %v2154
      %2188 = vmatprep.subr.bf16.mxu0 0
      %2189 = vmatpush1.bf16.msra.mxu0 0
      %2190 = vmatprep.subr.bf16.mxu0 0
      %2191 = vmatpush1.bf16.msra.mxu0 0
      %2192 = vmatprep.subr.bf16.mxu0 0
      %2193 = vmatpush1.bf16.msra.mxu0 0
      %2194 = vmatprep.subr.bf16.mxu0 0
      %2195 = vmatpush1.bf16.msra.mxu0 0
      %2196 = vmatprep.subr.bf16.mxu0 0
      %2197 = vmatpush1.bf16.msra.mxu0 0
      %2198 = vmatprep.subr.bf16.mxu0 0
      %2199 = vmatpush1.bf16.msra.mxu0 0
      %2200 = vmatprep.subr.bf16.mxu0 0
      %2201 = vmatpush1.bf16.msra.mxu0 0
      %2202 = vmatprep.subr.bf16.mxu0 0
      %2203 = vmatpush1.bf16.msra.mxu0 0
      %2204 = vmatprep.mubr.bf16.mxu0 0
      %2205 = vmatmul.mubr.bf16.gmra.mrb[0].mxu0 %v1936
      %v2206 = vpop.f32.mrb[0].mxu0
      %v2207 = vadd.f32 %v2086, %v2206
      %v2208 = vpop.f32.mrb[0].mxu0
      %v2209 = vadd.f32 %v2088, %v2208
      %v2210 = vpop.f32.mrb[0].mxu0
      %v2211 = vpop.f32.mrb[0].mxu0
      %2212 = vdwg.mxu0
      %s2213 = scalar_lea.vmem %s3, 256
      %v2214 = vld [vmem:[%s2213] sm:$0xff]
      %v2215 = vld [vmem:[%s2213 + $0x8] sm:$0xff]
      %v2216 = vld [vmem:[%s2213 + $0x10] sm:$0xff]
      %v2217 = vld [vmem:[%s2213 + $0x18] sm:$0xff]
      %v2218 = vld [vmem:[%s2213 + $0x20] sm:$0xff]
      %v2219 = vld [vmem:[%s2213 + $0x28] sm:$0xff]
      %v2220 = vld [vmem:[%s2213 + $0x30] sm:$0xff]
      %v2221 = vld [vmem:[%s2213 + $0x38] sm:$0xff]
      %v2222 = vld [vmem:[%s2213 + $0x40] sm:$0xff]
      %v2223 = vld [vmem:[%s2213 + $0x48] sm:$0xff]
      %v2224 = vld [vmem:[%s2213 + $0x50] sm:$0xff]
      %v2225 = vld [vmem:[%s2213 + $0x58] sm:$0xff]
      %v2226 = vld [vmem:[%s2213 + $0x60] sm:$0xff]
      %v2227 = vld [vmem:[%s2213 + $0x68] sm:$0xff]
      %v2228 = vld [vmem:[%s2213 + $0x70] sm:$0xff]
      %v2229 = vld [vmem:[%s2213 + $0x78] sm:$0xff]
      %v2231 = vunpack.c.l.b16 %v1936
      %v2232 = vpack.c.b16 %v2231, %v2231
      %v2234 = vshrl.u32 %v2232, 16
      %v2236 = vshll.u32 %v2232, 16
      %v2238 = vrot.slane %v2236, 1
      %v2239 = vor.u32 %v2234, %v2238
      %v2257 = vunpack.c.l.b16 %v2214
      %v2258 = vunpack.c.h.b16 %v2214
      %v2259 = vunpack.c.l.b16 %v2215
      %v2260 = vunpack.c.h.b16 %v2215
      %v2261 = vunpack.c.l.b16 %v2216
      %v2262 = vunpack.c.h.b16 %v2216
      %v2263 = vunpack.c.l.b16 %v2217
      %v2264 = vunpack.c.h.b16 %v2217
      %v2265 = vunpack.c.l.b16 %v2218
      %v2266 = vunpack.c.h.b16 %v2218
      %v2267 = vunpack.c.l.b16 %v2219
      %v2268 = vunpack.c.h.b16 %v2219
      %v2269 = vunpack.c.l.b16 %v2220
      %v2270 = vunpack.c.h.b16 %v2220
      %v2271 = vunpack.c.l.b16 %v2221
      %v2272 = vunpack.c.h.b16 %v2221
      %v2273 = vunpack.c.l.b16 %v2222
      %v2274 = vunpack.c.h.b16 %v2222
      %v2275 = vunpack.c.l.b16 %v2223
      %v2276 = vunpack.c.h.b16 %v2223
      %v2277 = vunpack.c.l.b16 %v2224
      %v2278 = vunpack.c.h.b16 %v2224
      %v2279 = vunpack.c.l.b16 %v2225
      %v2280 = vunpack.c.h.b16 %v2225
      %v2281 = vunpack.c.l.b16 %v2226
      %v2282 = vunpack.c.h.b16 %v2226
      %v2283 = vunpack.c.l.b16 %v2227
      %v2284 = vunpack.c.h.b16 %v2227
      %v2285 = vunpack.c.l.b16 %v2228
      %v2286 = vunpack.c.h.b16 %v2228
      %v2287 = vunpack.c.l.b16 %v2229
      %v2288 = vunpack.c.h.b16 %v2229
      %v2289 = vpack.c.b16 %v2259, %v2257
      %v2290 = vpack.c.b16 %v2260, %v2258
      %v2291 = vpack.c.b16 %v2263, %v2261
      %v2292 = vpack.c.b16 %v2264, %v2262
      %v2293 = vpack.c.b16 %v2267, %v2265
      %v2294 = vpack.c.b16 %v2268, %v2266
      %v2295 = vpack.c.b16 %v2271, %v2269
      %v2296 = vpack.c.b16 %v2272, %v2270
      %v2297 = vpack.c.b16 %v2275, %v2273
      %v2298 = vpack.c.b16 %v2276, %v2274
      %v2299 = vpack.c.b16 %v2279, %v2277
      %v2300 = vpack.c.b16 %v2280, %v2278
      %v2301 = vpack.c.b16 %v2283, %v2281
      %v2302 = vpack.c.b16 %v2284, %v2282
      %v2303 = vpack.c.b16 %v2287, %v2285
      %v2304 = vpack.c.b16 %v2288, %v2286
      %2321 = vmatprep.subr.bf16.mxu0 %v2290
      %2322 = vmatpush1.bf16.msra.mxu0 %v2289
      %2323 = vmatprep.subr.bf16.mxu0 %v2292
      %2324 = vmatpush1.bf16.msra.mxu0 %v2291
      %2325 = vmatprep.subr.bf16.mxu0 %v2294
      %2326 = vmatpush1.bf16.msra.mxu0 %v2293
      %2327 = vmatprep.subr.bf16.mxu0 %v2296
      %2328 = vmatpush1.bf16.msra.mxu0 %v2295
      %2329 = vmatprep.subr.bf16.mxu0 %v2298
      %2330 = vmatpush1.bf16.msra.mxu0 %v2297
      %2331 = vmatprep.subr.bf16.mxu0 %v2300
      %2332 = vmatpush1.bf16.msra.mxu0 %v2299
      %2333 = vmatprep.subr.bf16.mxu0 %v2302
      %2334 = vmatpush1.bf16.msra.mxu0 %v2301
      %2335 = vmatprep.subr.bf16.mxu0 %v2304
      %2336 = vmatpush1.bf16.msra.mxu0 %v2303
      %2337 = vmatprep.subr.bf16.mxu0 0
      %2338 = vmatpush1.bf16.msra.mxu0 0
      %2339 = vmatprep.subr.bf16.mxu0 0
      %2340 = vmatpush1.bf16.msra.mxu0 0
      %2341 = vmatprep.subr.bf16.mxu0 0
      %2342 = vmatpush1.bf16.msra.mxu0 0
      %2343 = vmatprep.subr.bf16.mxu0 0
      %2344 = vmatpush1.bf16.msra.mxu0 0
      %2345 = vmatprep.subr.bf16.mxu0 0
      %2346 = vmatpush1.bf16.msra.mxu0 0
      %2347 = vmatprep.subr.bf16.mxu0 0
      %2348 = vmatpush1.bf16.msra.mxu0 0
      %2349 = vmatprep.subr.bf16.mxu0 0
      %2350 = vmatpush1.bf16.msra.mxu0 0
      %2351 = vmatprep.subr.bf16.mxu0 0
      %2352 = vmatpush1.bf16.msra.mxu0 0
      %2353 = vmatprep.mubr.bf16.mxu0 0
      %2354 = vmatmul.mubr.bf16.gmra.mrb[0].mxu0 %v2239
      %v2355 = vpop.f32.mrb[0].mxu0
      %v2356 = vadd.f32 0.0, %v2355
      %v2357 = vpop.f32.mrb[0].mxu0
      %v2358 = vadd.f32 0.0, %v2357
      %v2359 = vpop.f32.mrb[0].mxu0
      %v2360 = vpop.f32.mrb[0].mxu0
      %2361 = vdwg.mxu0
      %v2362 = vadd.f32 %v2207, %v2356
      %v2363 = vadd.f32 %v2209, %v2358
      %s2364 = scalar_lea.vmem %s3, 384
      %v2365 = vld [vmem:[%s2364] sm:$0xff]
      %v2366 = vld [vmem:[%s2364 + $0x8] sm:$0xff]
      %v2367 = vld [vmem:[%s2364 + $0x10] sm:$0xff]
      %v2368 = vld [vmem:[%s2364 + $0x18] sm:$0xff]
      %v2369 = vld [vmem:[%s2364 + $0x20] sm:$0xff]
      %v2370 = vld [vmem:[%s2364 + $0x28] sm:$0xff]
      %v2371 = vld [vmem:[%s2364 + $0x30] sm:$0xff]
      %v2372 = vld [vmem:[%s2364 + $0x38] sm:$0xff]
      %v2373 = vld [vmem:[%s2364 + $0x40] sm:$0xff]
      %v2374 = vld [vmem:[%s2364 + $0x48] sm:$0xff]
      %v2375 = vld [vmem:[%s2364 + $0x50] sm:$0xff]
      %v2376 = vld [vmem:[%s2364 + $0x58] sm:$0xff]
      %v2377 = vld [vmem:[%s2364 + $0x60] sm:$0xff]
      %v2378 = vld [vmem:[%s2364 + $0x68] sm:$0xff]
      %v2379 = vld [vmem:[%s2364 + $0x70] sm:$0xff]
      %v2380 = vld [vmem:[%s2364 + $0x78] sm:$0xff]
      %v2382 = vunpack.c.l.b16 %v1953
      %v2383 = vpack.c.b16 %v2382, %v2382
      %v2385 = vshrl.u32 %v2383, 16
      %v2387 = vshll.u32 %v2383, 16
      %v2389 = vrot.slane %v2387, 1
      %v2390 = vor.u32 %v2385, %v2389
      %v2408 = vunpack.c.l.b16 %v2365
      %v2409 = vunpack.c.h.b16 %v2365
      %v2410 = vunpack.c.l.b16 %v2366
      %v2411 = vunpack.c.h.b16 %v2366
      %v2412 = vunpack.c.l.b16 %v2367
      %v2413 = vunpack.c.h.b16 %v2367
      %v2414 = vunpack.c.l.b16 %v2368
      %v2415 = vunpack.c.h.b16 %v2368
      %v2416 = vunpack.c.l.b16 %v2369
      %v2417 = vunpack.c.h.b16 %v2369
      %v2418 = vunpack.c.l.b16 %v2370
      %v2419 = vunpack.c.h.b16 %v2370
      %v2420 = vunpack.c.l.b16 %v2371
      %v2421 = vunpack.c.h.b16 %v2371
      %v2422 = vunpack.c.l.b16 %v2372
      %v2423 = vunpack.c.h.b16 %v2372
      %v2424 = vunpack.c.l.b16 %v2373
      %v2425 = vunpack.c.h.b16 %v2373
      %v2426 = vunpack.c.l.b16 %v2374
      %v2427 = vunpack.c.h.b16 %v2374
      %v2428 = vunpack.c.l.b16 %v2375
      %v2429 = vunpack.c.h.b16 %v2375
      %v2430 = vunpack.c.l.b16 %v2376
      %v2431 = vunpack.c.h.b16 %v2376
      %v2432 = vunpack.c.l.b16 %v2377
      %v2433 = vunpack.c.h.b16 %v2377
      %v2434 = vunpack.c.l.b16 %v2378
      %v2435 = vunpack.c.h.b16 %v2378
      %v2436 = vunpack.c.l.b16 %v2379
      %v2437 = vunpack.c.h.b16 %v2379
      %v2438 = vunpack.c.l.b16 %v2380
      %v2439 = vunpack.c.h.b16 %v2380
      %v2440 = vpack.c.b16 %v2410, %v2408
      %v2441 = vpack.c.b16 %v2411, %v2409
      %v2442 = vpack.c.b16 %v2414, %v2412
      %v2443 = vpack.c.b16 %v2415, %v2413
      %v2444 = vpack.c.b16 %v2418, %v2416
      %v2445 = vpack.c.b16 %v2419, %v2417
      %v2446 = vpack.c.b16 %v2422, %v2420
      %v2447 = vpack.c.b16 %v2423, %v2421
      %v2448 = vpack.c.b16 %v2426, %v2424
      %v2449 = vpack.c.b16 %v2427, %v2425
      %v2450 = vpack.c.b16 %v2430, %v2428
      %v2451 = vpack.c.b16 %v2431, %v2429
      %v2452 = vpack.c.b16 %v2434, %v2432
      %v2453 = vpack.c.b16 %v2435, %v2433
      %v2454 = vpack.c.b16 %v2438, %v2436
      %v2455 = vpack.c.b16 %v2439, %v2437
      %2472 = vmatprep.subr.bf16.mxu0 %v2441
      %2473 = vmatpush1.bf16.msra.mxu0 %v2440
      %2474 = vmatprep.subr.bf16.mxu0 %v2443
      %2475 = vmatpush1.bf16.msra.mxu0 %v2442
      %2476 = vmatprep.subr.bf16.mxu0 %v2445
      %2477 = vmatpush1.bf16.msra.mxu0 %v2444
      %2478 = vmatprep.subr.bf16.mxu0 %v2447
      %2479 = vmatpush1.bf16.msra.mxu0 %v2446
      %2480 = vmatprep.subr.bf16.mxu0 %v2449
      %2481 = vmatpush1.bf16.msra.mxu0 %v2448
      %2482 = vmatprep.subr.bf16.mxu0 %v2451
      %2483 = vmatpush1.bf16.msra.mxu0 %v2450
      %2484 = vmatprep.subr.bf16.mxu0 %v2453
      %2485 = vmatpush1.bf16.msra.mxu0 %v2452
      %2486 = vmatprep.subr.bf16.mxu0 %v2455
      %2487 = vmatpush1.bf16.msra.mxu0 %v2454
      %2488 = vmatprep.subr.bf16.mxu0 0
      %2489 = vmatpush1.bf16.msra.mxu0 0
      %2490 = vmatprep.subr.bf16.mxu0 0
      %2491 = vmatpush1.bf16.msra.mxu0 0
      %2492 = vmatprep.subr.bf16.mxu0 0
      %2493 = vmatpush1.bf16.msra.mxu0 0
      %2494 = vmatprep.subr.bf16.mxu0 0
      %2495 = vmatpush1.bf16.msra.mxu0 0
      %2496 = vmatprep.subr.bf16.mxu0 0
      %2497 = vmatpush1.bf16.msra.mxu0 0
      %2498 = vmatprep.subr.bf16.mxu0 0
      %2499 = vmatpush1.bf16.msra.mxu0 0
      %2500 = vmatprep.subr.bf16.mxu0 0
      %2501 = vmatpush1.bf16.msra.mxu0 0
      %2502 = vmatprep.subr.bf16.mxu0 0
      %2503 = vmatpush1.bf16.msra.mxu0 0
      %2504 = vmatprep.mubr.bf16.mxu0 0
      %2505 = vmatmul.mubr.bf16.gmra.mrb[0].mxu0 %v2390
      %v2506 = vpop.f32.mrb[0].mxu0
      %v2507 = vadd.f32 0.0, %v2506
      %v2508 = vpop.f32.mrb[0].mxu0
      %v2509 = vadd.f32 0.0, %v2508
      %v2510 = vpop.f32.mrb[0].mxu0
      %v2511 = vpop.f32.mrb[0].mxu0
      %2512 = vdwg.mxu0
      %v2513 = vadd.f32 %v2362, %v2507
      %v2514 = vadd.f32 %v2363, %v2509
      %v2515 = vld [vmem:[#allocation2] sm:$0xe]
      %s2516 = scalar_lea.vmem %s3, 512
      %v2517 = vld [vmem:[%s2516] sm:$0xff]
      %v2518 = vld [vmem:[%s2516 + $0x8] sm:$0xff]
      %v2519 = vld [vmem:[%s2516 + $0x10] sm:$0xff]
      %v2520 = vld [vmem:[%s2516 + $0x18] sm:$0xff]
      %v2521 = vld [vmem:[%s2516 + $0x20] sm:$0xff]
      %v2522 = vld [vmem:[%s2516 + $0x28] sm:$0xff]
      %v2523 = vld [vmem:[%s2516 + $0x30] sm:$0xff]
      %v2524 = vld [vmem:[%s2516 + $0x38] sm:$0xff]
      %v2525 = vld [vmem:[%s2516 + $0x40] sm:$0xff]
      %v2526 = vld [vmem:[%s2516 + $0x48] sm:$0xff]
      %v2527 = vld [vmem:[%s2516 + $0x50] sm:$0xff]
      %v2528 = vld [vmem:[%s2516 + $0x58] sm:$0xff]
      %v2529 = vld [vmem:[%s2516 + $0x60] sm:$0xff]
      %v2530 = vld [vmem:[%s2516 + $0x68] sm:$0xff]
      %v2531 = vld [vmem:[%s2516 + $0x70] sm:$0xff]
      %v2532 = vld [vmem:[%s2516 + $0x78] sm:$0xff]
      %v2534 = vunpack.c.l.b16 %v2515
      %v2535 = vpack.c.b16 %v2534, %v2534
      %v2536 = vrot.slane %v2535, 1
      %v2554 = vunpack.c.l.b16 %v2517
      %v2555 = vunpack.c.h.b16 %v2517
      %v2556 = vunpack.c.l.b16 %v2518
      %v2557 = vunpack.c.h.b16 %v2518
      %v2558 = vunpack.c.l.b16 %v2519
      %v2559 = vunpack.c.h.b16 %v2519
      %v2560 = vunpack.c.l.b16 %v2520
      %v2561 = vunpack.c.h.b16 %v2520
      %v2562 = vunpack.c.l.b16 %v2521
      %v2563 = vunpack.c.h.b16 %v2521
      %v2564 = vunpack.c.l.b16 %v2522
      %v2565 = vunpack.c.h.b16 %v2522
      %v2566 = vunpack.c.l.b16 %v2523
      %v2567 = vunpack.c.h.b16 %v2523
      %v2568 = vunpack.c.l.b16 %v2524
      %v2569 = vunpack.c.h.b16 %v2524
      %v2570 = vunpack.c.l.b16 %v2525
      %v2571 = vunpack.c.h.b16 %v2525
      %v2572 = vunpack.c.l.b16 %v2526
      %v2573 = vunpack.c.h.b16 %v2526
      %v2574 = vunpack.c.l.b16 %v2527
      %v2575 = vunpack.c.h.b16 %v2527
      %v2576 = vunpack.c.l.b16 %v2528
      %v2577 = vunpack.c.h.b16 %v2528
      %v2578 = vunpack.c.l.b16 %v2529
      %v2579 = vunpack.c.h.b16 %v2529
      %v2580 = vunpack.c.l.b16 %v2530
      %v2581 = vunpack.c.h.b16 %v2530
      %v2582 = vunpack.c.l.b16 %v2531
      %v2583 = vunpack.c.h.b16 %v2531
      %v2584 = vunpack.c.l.b16 %v2532
      %v2585 = vunpack.c.h.b16 %v2532
      %v2586 = vpack.c.b16 %v2556, %v2554
      %v2587 = vpack.c.b16 %v2557, %v2555
      %v2588 = vpack.c.b16 %v2560, %v2558
      %v2589 = vpack.c.b16 %v2561, %v2559
      %v2590 = vpack.c.b16 %v2564, %v2562
      %v2591 = vpack.c.b16 %v2565, %v2563
      %v2592 = vpack.c.b16 %v2568, %v2566
      %v2593 = vpack.c.b16 %v2569, %v2567
      %v2594 = vpack.c.b16 %v2572, %v2570
      %v2595 = vpack.c.b16 %v2573, %v2571
      %v2596 = vpack.c.b16 %v2576, %v2574
      %v2597 = vpack.c.b16 %v2577, %v2575
      %v2598 = vpack.c.b16 %v2580, %v2578
      %v2599 = vpack.c.b16 %v2581, %v2579
      %v2600 = vpack.c.b16 %v2584, %v2582
      %v2601 = vpack.c.b16 %v2585, %v2583
      %2618 = vmatprep.subr.bf16.mxu0 %v2587
      %2619 = vmatpush1.bf16.msra.mxu0 %v2586
      %2620 = vmatprep.subr.bf16.mxu0 %v2589
      %2621 = vmatpush1.bf16.msra.mxu0 %v2588
      %2622 = vmatprep.subr.bf16.mxu0 %v2591
      %2623 = vmatpush1.bf16.msra.mxu0 %v2590
      %2624 = vmatprep.subr.bf16.mxu0 %v2593
      %2625 = vmatpush1.bf16.msra.mxu0 %v2592
      %2626 = vmatprep.subr.bf16.mxu0 %v2595
      %2627 = vmatpush1.bf16.msra.mxu0 %v2594
      %2628 = vmatprep.subr.bf16.mxu0 %v2597
      %2629 = vmatpush1.bf16.msra.mxu0 %v2596
      %2630 = vmatprep.subr.bf16.mxu0 %v2599
      %2631 = vmatpush1.bf16.msra.mxu0 %v2598
      %2632 = vmatprep.subr.bf16.mxu0 %v2601
      %2633 = vmatpush1.bf16.msra.mxu0 %v2600
      %2634 = vmatprep.subr.bf16.mxu0 0
      %2635 = vmatpush1.bf16.msra.mxu0 0
      %2636 = vmatprep.subr.bf16.mxu0 0
      %2637 = vmatpush1.bf16.msra.mxu0 0
      %2638 = vmatprep.subr.bf16.mxu0 0
      %2639 = vmatpush1.bf16.msra.mxu0 0
      %2640 = vmatprep.subr.bf16.mxu0 0
      %2641 = vmatpush1.bf16.msra.mxu0 0
      %2642 = vmatprep.subr.bf16.mxu0 0
      %2643 = vmatpush1.bf16.msra.mxu0 0
      %2644 = vmatprep.subr.bf16.mxu0 0
      %2645 = vmatpush1.bf16.msra.mxu0 0
      %2646 = vmatprep.subr.bf16.mxu0 0
      %2647 = vmatpush1.bf16.msra.mxu0 0
      %2648 = vmatprep.subr.bf16.mxu0 0
      %2649 = vmatpush1.bf16.msra.mxu0 0
      %2650 = vmatprep.mubr.bf16.mxu0 0
      %2651 = vmatmul.mubr.bf16.gmra.mrb[0].mxu0 %v2536
      %v2652 = vpop.f32.mrb[0].mxu0
      %v2653 = vadd.f32 0.0, %v2652
      %v2654 = vpop.f32.mrb[0].mxu0
      %v2655 = vadd.f32 0.0, %v2654
      %v2656 = vpop.f32.mrb[0].mxu0
      %v2657 = vpop.f32.mrb[0].mxu0
      %2658 = vdwg.mxu0
      %v2659 = vadd.f32 %v2513, %v2653
      %v2660 = vadd.f32 %v2514, %v2655
      %v2661 = vmax.f32 %v2659, %v2660
      %2662 = vmatprep.subr.bf16.mxu0 %v2020
      %2663 = vmatpush1.bf16.msra.mxu0 %v2019
      %2664 = vmatprep.subr.bf16.mxu0 %v2022
      %2665 = vmatpush1.bf16.msra.mxu0 %v2021
      %2666 = vmatprep.subr.bf16.mxu0 %v2024
      %2667 = vmatpush1.bf16.msra.mxu0 %v2023
      %2668 = vmatprep.subr.bf16.mxu0 %v2026
      %2669 = vmatpush1.bf16.msra.mxu0 %v2025
      %2670 = vmatprep.subr.bf16.mxu0 %v2028
      %2671 = vmatpush1.bf16.msra.mxu0 %v2027
      %2672 = vmatprep.subr.bf16.mxu0 %v2030
      %2673 = vmatpush1.bf16.msra.mxu0 %v2029
      %2674 = vmatprep.subr.bf16.mxu0 %v2032
      %2675 = vmatpush1.bf16.msra.mxu0 %v2031
      %2676 = vmatprep.subr.bf16.mxu0 %v2034
      %2677 = vmatpush1.bf16.msra.mxu0 %v2033
      %2678 = vmatprep.subr.bf16.mxu0 0
      %2679 = vmatpush1.bf16.msra.mxu0 0
      %2680 = vmatprep.subr.bf16.mxu0 0
      %2681 = vmatpush1.bf16.msra.mxu0 0
      %2682 = vmatprep.subr.bf16.mxu0 0
      %2683 = vmatpush1.bf16.msra.mxu0 0
      %2684 = vmatprep.subr.bf16.mxu0 0
      %2685 = vmatpush1.bf16.msra.mxu0 0
      %2686 = vmatprep.subr.bf16.mxu0 0
      %2687 = vmatpush1.bf16.msra.mxu0 0
      %2688 = vmatprep.subr.bf16.mxu0 0
      %2689 = vmatpush1.bf16.msra.mxu0 0
      %2690 = vmatprep.subr.bf16.mxu0 0
      %2691 = vmatpush1.bf16.msra.mxu0 0
      %2692 = vmatprep.subr.bf16.mxu0 0
      %2693 = vmatpush1.bf16.msra.mxu0 0
      %2694 = vmatprep.mubr.bf16.mxu0 0
      %2695 = vmatmul.mubr.bf16.gmra.mrb[0].mxu0 %v2239
      %v2696 = vpop.f32.mrb[0].mxu0
      %v2697 = vadd.f32 0.0, %v2696
      %v2698 = vpop.f32.mrb[0].mxu0
      %v2699 = vadd.f32 0.0, %v2698
      %v2700 = vpop.f32.mrb[0].mxu0
      %v2701 = vpop.f32.mrb[0].mxu0
      %2702 = vdwg.mxu0
      %2703 = vmatprep.subr.bf16.mxu0 %v2141
      %2704 = vmatpush1.bf16.msra.mxu0 %v2140
      %2705 = vmatprep.subr.bf16.mxu0 %v2143
      %2706 = vmatpush1.bf16.msra.mxu0 %v2142
      %2707 = vmatprep.subr.bf16.mxu0 %v2145
      %2708 = vmatpush1.bf16.msra.mxu0 %v2144
      %2709 = vmatprep.subr.bf16.mxu0 %v2147
      %2710 = vmatpush1.bf16.msra.mxu0 %v2146
      %2711 = vmatprep.subr.bf16.mxu0 %v2149
      %2712 = vmatpush1.bf16.msra.mxu0 %v2148
      %2713 = vmatprep.subr.bf16.mxu0 %v2151
      %2714 = vmatpush1.bf16.msra.mxu0 %v2150
      %2715 = vmatprep.subr.bf16.mxu0 %v2153
      %2716 = vmatpush1.bf16.msra.mxu0 %v2152
      %2717 = vmatprep.subr.bf16.mxu0 %v2155
      %2718 = vmatpush1.bf16.msra.mxu0 %v2154
      %2719 = vmatprep.subr.bf16.mxu0 0
      %2720 = vmatpush1.bf16.msra.mxu0 0
      %2721 = vmatprep.subr.bf16.mxu0 0
      %2722 = vmatpush1.bf16.msra.mxu0 0
      %2723 = vmatprep.subr.bf16.mxu0 0
      %2724 = vmatpush1.bf16.msra.mxu0 0
      %2725 = vmatprep.subr.bf16.mxu0 0
      %2726 = vmatpush1.bf16.msra.mxu0 0
      %2727 = vmatprep.subr.bf16.mxu0 0
      %2728 = vmatpush1.bf16.msra.mxu0 0
      %2729 = vmatprep.subr.bf16.mxu0 0
      %2730 = vmatpush1.bf16.msra.mxu0 0
      %2731 = vmatprep.subr.bf16.mxu0 0
      %2732 = vmatpush1.bf16.msra.mxu0 0
      %2733 = vmatprep.subr.bf16.mxu0 0
      %2734 = vmatpush1.bf16.msra.mxu0 0
      %2735 = vmatprep.mubr.bf16.mxu0 0
      %2736 = vmatmul.mubr.bf16.gmra.mrb[0].mxu0 %v1953
      %v2737 = vpop.f32.mrb[0].mxu0
      %v2738 = vadd.f32 %v2697, %v2737
      %v2739 = vpop.f32.mrb[0].mxu0
      %v2740 = vadd.f32 %v2699, %v2739
      %v2741 = vpop.f32.mrb[0].mxu0
      %v2742 = vpop.f32.mrb[0].mxu0
      %2743 = vdwg.mxu0
      %2744 = vmatprep.subr.bf16.mxu0 %v2290
      %2745 = vmatpush1.bf16.msra.mxu0 %v2289
      %2746 = vmatprep.subr.bf16.mxu0 %v2292
      %2747 = vmatpush1.bf16.msra.mxu0 %v2291
      %2748 = vmatprep.subr.bf16.mxu0 %v2294
      %2749 = vmatpush1.bf16.msra.mxu0 %v2293
      %2750 = vmatprep.subr.bf16.mxu0 %v2296
      %2751 = vmatpush1.bf16.msra.mxu0 %v2295
      %2752 = vmatprep.subr.bf16.mxu0 %v2298
      %2753 = vmatpush1.bf16.msra.mxu0 %v2297
      %2754 = vmatprep.subr.bf16.mxu0 %v2300
      %2755 = vmatpush1.bf16.msra.mxu0 %v2299
      %2756 = vmatprep.subr.bf16.mxu0 %v2302
      %2757 = vmatpush1.bf16.msra.mxu0 %v2301
      %2758 = vmatprep.subr.bf16.mxu0 %v2304
      %2759 = vmatpush1.bf16.msra.mxu0 %v2303
      %2760 = vmatprep.subr.bf16.mxu0 0
      %2761 = vmatpush1.bf16.msra.mxu0 0
      %2762 = vmatprep.subr.bf16.mxu0 0
      %2763 = vmatpush1.bf16.msra.mxu0 0
      %2764 = vmatprep.subr.bf16.mxu0 0
      %2765 = vmatpush1.bf16.msra.mxu0 0
      %2766 = vmatprep.subr.bf16.mxu0 0
      %2767 = vmatpush1.bf16.msra.mxu0 0
      %2768 = vmatprep.subr.bf16.mxu0 0
      %2769 = vmatpush1.bf16.msra.mxu0 0
      %2770 = vmatprep.subr.bf16.mxu0 0
      %2771 = vmatpush1.bf16.msra.mxu0 0
      %2772 = vmatprep.subr.bf16.mxu0 0
      %2773 = vmatpush1.bf16.msra.mxu0 0
      %2774 = vmatprep.subr.bf16.mxu0 0
      %2775 = vmatpush1.bf16.msra.mxu0 0
      %2776 = vmatprep.mubr.bf16.mxu0 0
      %2777 = vmatmul.mubr.bf16.gmra.mrb[0].mxu0 %v2390
      %v2778 = vpop.f32.mrb[0].mxu0
      %v2779 = vadd.f32 0.0, %v2778
      %v2780 = vpop.f32.mrb[0].mxu0
      %v2781 = vadd.f32 0.0, %v2780
      %v2782 = vpop.f32.mrb[0].mxu0
      %v2783 = vpop.f32.mrb[0].mxu0
      %2784 = vdwg.mxu0
      %v2785 = vadd.f32 %v2738, %v2779
      %v2786 = vadd.f32 %v2740, %v2781
      %2787 = vmatprep.subr.bf16.mxu0 %v2441
      %2788 = vmatpush1.bf16.msra.mxu0 %v2440
      %2789 = vmatprep.subr.bf16.mxu0 %v2443
      %2790 = vmatpush1.bf16.msra.mxu0 %v2442
      %2791 = vmatprep.subr.bf16.mxu0 %v2445
      %2792 = vmatpush1.bf16.msra.mxu0 %v2444
      %2793 = vmatprep.subr.bf16.mxu0 %v2447
      %2794 = vmatpush1.bf16.msra.mxu0 %v2446
      %2795 = vmatprep.subr.bf16.mxu0 %v2449
      %2796 = vmatpush1.bf16.msra.mxu0 %v2448
      %2797 = vmatprep.subr.bf16.mxu0 %v2451
      %2798 = vmatpush1.bf16.msra.mxu0 %v2450
      %2799 = vmatprep.subr.bf16.mxu0 %v2453
      %2800 = vmatpush1.bf16.msra.mxu0 %v2452
      %2801 = vmatprep.subr.bf16.mxu0 %v2455
      %2802 = vmatpush1.bf16.msra.mxu0 %v2454
      %2803 = vmatprep.subr.bf16.mxu0 0
      %2804 = vmatpush1.bf16.msra.mxu0 0
      %2805 = vmatprep.subr.bf16.mxu0 0
      %2806 = vmatpush1.bf16.msra.mxu0 0
      %2807 = vmatprep.subr.bf16.mxu0 0
      %2808 = vmatpush1.bf16.msra.mxu0 0
      %2809 = vmatprep.subr.bf16.mxu0 0
      %2810 = vmatpush1.bf16.msra.mxu0 0
      %2811 = vmatprep.subr.bf16.mxu0 0
      %2812 = vmatpush1.bf16.msra.mxu0 0
      %2813 = vmatprep.subr.bf16.mxu0 0
      %2814 = vmatpush1.bf16.msra.mxu0 0
      %2815 = vmatprep.subr.bf16.mxu0 0
      %2816 = vmatpush1.bf16.msra.mxu0 0
      %2817 = vmatprep.subr.bf16.mxu0 0
      %2818 = vmatpush1.bf16.msra.mxu0 0
      %2819 = vmatprep.mubr.bf16.mxu0 0
      %2820 = vmatmul.mubr.bf16.gmra.mrb[0].mxu0 %v2536
      %v2821 = vpop.f32.mrb[0].mxu0
      %v2822 = vadd.f32 0.0, %v2821
      %v2823 = vpop.f32.mrb[0].mxu0
      %v2824 = vadd.f32 0.0, %v2823
      %v2825 = vpop.f32.mrb[0].mxu0
      %v2826 = vpop.f32.mrb[0].mxu0
      %2827 = vdwg.mxu0
      %v2828 = vadd.f32 %v2785, %v2822
      %v2829 = vadd.f32 %v2786, %v2824
      %v2830 = vld [vmem:[%s1932] sm:$0xe]
      %v2832 = vunpack.c.l.b16 %v2830
      %v2833 = vpack.c.b16 %v2832, %v2832
      %v2834 = vrot.slane %v2833, 1
      %2836 = vmatprep.subr.bf16.mxu0 %v2587
      %2837 = vmatpush1.bf16.msra.mxu0 %v2586
      %2838 = vmatprep.subr.bf16.mxu0 %v2589
      %2839 = vmatpush1.bf16.msra.mxu0 %v2588
      %2840 = vmatprep.subr.bf16.mxu0 %v2591
      %2841 = vmatpush1.bf16.msra.mxu0 %v2590
      %2842 = vmatprep.subr.bf16.mxu0 %v2593
      %2843 = vmatpush1.bf16.msra.mxu0 %v2592
      %2844 = vmatprep.subr.bf16.mxu0 %v2595
      %2845 = vmatpush1.bf16.msra.mxu0 %v2594
      %2846 = vmatprep.subr.bf16.mxu0 %v2597
      %2847 = vmatpush1.bf16.msra.mxu0 %v2596
      %2848 = vmatprep.subr.bf16.mxu0 %v2599
      %2849 = vmatpush1.bf16.msra.mxu0 %v2598
      %2850 = vmatprep.subr.bf16.mxu0 %v2601
      %2851 = vmatpush1.bf16.msra.mxu0 %v2600
      %2852 = vmatprep.subr.bf16.mxu0 0
      %2853 = vmatpush1.bf16.msra.mxu0 0
      %2854 = vmatprep.subr.bf16.mxu0 0
      %2855 = vmatpush1.bf16.msra.mxu0 0
      %2856 = vmatprep.subr.bf16.mxu0 0
      %2857 = vmatpush1.bf16.msra.mxu0 0
      %2858 = vmatprep.subr.bf16.mxu0 0
      %2859 = vmatpush1.bf16.msra.mxu0 0
      %2860 = vmatprep.subr.bf16.mxu0 0
      %2861 = vmatpush1.bf16.msra.mxu0 0
      %2862 = vmatprep.subr.bf16.mxu0 0
      %2863 = vmatpush1.bf16.msra.mxu0 0
      %2864 = vmatprep.subr.bf16.mxu0 0
      %2865 = vmatpush1.bf16.msra.mxu0 0
      %2866 = vmatprep.subr.bf16.mxu0 0
      %2867 = vmatpush1.bf16.msra.mxu0 0
      %2868 = vmatprep.mubr.bf16.mxu0 0
      %2869 = vmatmul.mubr.bf16.gmra.mrb[0].mxu0 %v2834
      %v2870 = vpop.f32.mrb[0].mxu0
      %v2871 = vadd.f32 0.0, %v2870
      %v2872 = vpop.f32.mrb[0].mxu0
      %v2873 = vadd.f32 0.0, %v2872
      %v2874 = vpop.f32.mrb[0].mxu0
      %v2875 = vpop.f32.mrb[0].mxu0
      %2876 = vdwg.mxu0
      %v2877 = vadd.f32 %v2828, %v2871
      %v2878 = vadd.f32 %v2829, %v2873
      %v2879 = vmax.f32 %v2877, %v2878
      %v2880 = vmax.f32 %v2661, %v2879
      %v2881 = vld [vmem:[%s4] sm:$0x1]
      %v2883 = vlaneseq
      %v2884 = vshrl.u32 %v2883, 7
      %v2885 = vsub.s32 0, %v2884
      %v2886 = vrot.slane %v2881, %v2885
      %v2888 = vadd.f32 %v2880, %v2886
      %v2889 = vmax.f32 %v2888, 0.0
      %v2890 = vpack.c.bf16 %v2889, %v2889
      %vm2891 = vcmask 1042432
      %vm2892 = vsmask.f32 2304
      %vm2893 = vmand %vm2891, %vm2892
      %v2894 = vld [vmem:[%s222] sm:$0x7]
      %v2895 = vsel %vm2893, %v2890, %v2894
      %2896 = vst [vmem:[%s222] sm:$0x7] %v2895
      %p2897 = scmp.lt.s32.totalorder %s16, 1
      %s2898 = scalar_select %p2897, %s16, 1
      %s2899 = smul.addr %s2898, 4
      %s2900 = scalar_lea.vmem %s5, %s2899
      // Predicated region
      $region41: #{net_forward.2} parent=39 // pred_check
        %p2901 = pneg %p144
      $region42: #{net_forward.2} parent=39 // pred_check_branch
        %2903 = sbr.rel (%p2901) target = $region44
      $region43: #{net_forward.2} parent=39 // pred_region
        _
      $region44: #{net_forward.2} parent=39 // pred_fallthru
        _
    $region40: #{net_forward.2} parent=5 // pred_fallthru
      _
    %p2904 = scmp.le.s32.totalorder 2, %s11
    // Predicated region
    $region45: #{net_forward.2} parent=5 // pred_check
      %p2905 = pneg %p2904
    $region46: #{net_forward.2} parent=5 // pred_check_branch
      %2907 = sbr.rel (%p2905) target = $region48
    $region47: #{net_forward.2} parent=5 // pred_region
      %s2908 = ssub.s32 %s11, 2
      // Predicated region
      $region49: #{net_forward.2} parent=47 // pred_check
        %p2909 = pneg %p150
      $region50: #{net_forward.2} parent=47 // pred_check_branch
        %2911 = sbr.rel (%p2909) target = $region52
      $region51: #{net_forward.2} parent=47 // pred_region
        %p2912 = scmp.lt.s32.totalorder %s17, 1
        %s2913 = scalar_select %p2912, %s17, 1
        %s2914 = smul.addr %s2913, 4
        %s2915 = scalar_lea.vmem %s5, %s2914
      $region52: #{net_forward.2} parent=47 // pred_fallthru
        _
    $region48: #{net_forward.2} parent=5 // pred_fallthru
      _
  $region6: #{net_forward.2} parent=0 // loop_footer
    %s15 = sadd.s32 1, %s11
  $region7: #{net_forward.2} parent=0 // loop_footer_branch
    %10 = sbr.rel target = $region3
  $region8: #{net_forward.2} parent=0 // loop_exit
    _

</llo_original>
